<compile_context>
chip_gen: v7x
topology: tpu7x:2x2x1
jax: 0.10.0
libtpu: 0.0.40
codegen_flags: <defaults>
</compile_context>

<pallas_src>
import functools

import jax
import jax.numpy as jnp
import numpy as np
from jax import lax
from jax.experimental import pallas as pl
from jax.experimental.pallas import tpu as pltpu


# ----------------------------------------------------------------------------
# Pallas kernel: the whole encoder, fused
# ----------------------------------------------------------------------------
def _encoder_kernel(x_ref, m1_ref, m2_ref, m3_ref, m4_ref, wf_ref,
                    s2_ref, s3_ref, s4_ref, bf_ref, o_ref):
    """x_ref: (TB, H*W*Cin) f32 flattened NHWC image block.

    m*_ref : bf16 dense per-layer operators (conv+BN-scale folded).
    s*_ref : f32 per-output shifts (BN beta folded with running stats).
    wf_ref : bf16 FC weight, bf_ref: f32 FC bias.
    o_ref  : (TB, n_z) f32 output block.
    """

    def mm(a_f32, w_ref):
        # bf16 MXU operands, f32 accumulation.
        return jnp.dot(a_f32.astype(w_ref.dtype), w_ref[...],
                       preferred_element_type=jnp.float32)

    a = x_ref[...]                                         # f32 (TB, 256)
    a = jnp.maximum(mm(a, m1_ref), 0.0)                    # conv1 + ReLU
    a = jnp.maximum(mm(a, m2_ref) + s2_ref[...], 0.0)      # conv2 + BN + ReLU
    a = jnp.maximum(mm(a, m3_ref) + s3_ref[...], 0.0)      # conv3 + BN + ReLU
    a = jnp.maximum(mm(a, m4_ref) + s4_ref[...], 0.0)      # conv4 + BN + ReLU
    z = mm(a, wf_ref) + bf_ref[...]                        # FC
    # sigmoid(z) = 1 / (1 + exp(-z)), exp + reciprocal on the EUP slot.
    sig = pl.reciprocal(1.0 + jnp.exp(-z), approx=True)
    o_ref[...] = sig.astype(o_ref.dtype)


# ----------------------------------------------------------------------------
# Parameter init (deterministic, synthetic, matching the torch architecture)
# ----------------------------------------------------------------------------
def init_encoder_params(key, n_z, n_channel=1, dim_h=16):
    chans = [n_channel, dim_h, dim_h * 2, dim_h * 4, dim_h * 8]
    keys = jax.random.split(key, 16)
    ki = 0
    params = {"convs": [], "fc": {}}
    eps = 1e-5
    for li in range(4):
        cin, cout = chans[li], chans[li + 1]
        # HWIO conv weight (equivalent to torch (Cout,Cin,Kh,Kw) transposed)
        w = jax.random.normal(keys[ki], (4, 4, cin, cout), jnp.float32) * 0.05
        ki += 1
        if li == 0:
            scale = jnp.ones((cout,), jnp.float32)
            shift = jnp.zeros((cout,), jnp.float32)
        else:
            gamma = 1.0 + 0.1 * jax.random.normal(keys[ki], (cout,), jnp.float32)
            ki += 1
            beta = 0.1 * jax.random.normal(keys[ki], (cout,), jnp.float32)
            ki += 1
            running_mean = jnp.zeros((cout,), jnp.float32)
            running_var = jnp.ones((cout,), jnp.float32)
            scale = gamma / jnp.sqrt(running_var + eps)
            shift = beta - running_mean * scale
        params["convs"].append({"w": w, "scale": scale, "shift": shift})
    fc_w = jax.random.normal(keys[ki], (dim_h * 8, n_z), jnp.float32) * 0.05
    ki += 1
    fc_b = 0.1 * jax.random.normal(keys[ki], (n_z,), jnp.float32)
    params["fc"] = {"w": fc_w, "b": fc_b}
    return params


# ----------------------------------------------------------------------------
# One-time folding: conv(4x4,s2,p1) + BN(scale) -> dense operator on flattened
# NHWC activations.  Done once at build time (numpy), not per forward call.
# ----------------------------------------------------------------------------
def _conv_as_dense(w_hwio, H, W, stride=2, pad=1):
    Kh, Kw, Cin, Cout = w_hwio.shape
    Ho = (H + 2 * pad - Kh) // stride + 1
    Wo = (W + 2 * pad - Kw) // stride + 1
    M = np.zeros((H * W * Cin, Ho * Wo * Cout), np.float32)
    Mv = M.reshape(H, W, Cin, Ho, Wo, Cout)   # view
    for ho in range(Ho):
        for wo in range(Wo):
            for kh in range(Kh):
                ih = ho * stride + kh - pad
                if ih < 0 or ih >= H:
                    continue
                for kw in range(Kw):
                    iw = wo * stride + kw - pad
                    if iw < 0 or iw >= W:
                        continue
                    Mv[ih, iw, :, ho, wo, :] = w_hwio[kh, kw]
    return M, (Ho, Wo)


def build_fused_ops(params, H, W, compute_dtype=jnp.bfloat16):
    mats, shifts = [], []
    h, w = H, W
    for p in params["convs"]:
        w_np = np.asarray(p["w"], np.float32)
        M, (ho, wo) = _conv_as_dense(w_np, h, w)
        scale = np.asarray(p["scale"], np.float32)
        shift = np.asarray(p["shift"], np.float32)
        M = M * np.tile(scale, ho * wo)[None, :]          # fold BN scale
        mats.append(jnp.asarray(M, compute_dtype))
        shifts.append(jnp.asarray(np.tile(shift, ho * wo)[None, :],
                                  jnp.float32))
        h, w = ho, wo
    assert h == 1 and w == 1, "encoder expects 16x16 input (4 stride-2 convs)"
    wfc = jnp.asarray(np.asarray(params["fc"]["w"], np.float32), compute_dtype)
    bfc = jnp.asarray(params["fc"]["b"], jnp.float32).reshape(1, -1)
    return {"mats": mats, "shifts": shifts, "wfc": wfc, "bfc": bfc}


# ----------------------------------------------------------------------------
# Forward pass: single fused pallas_call
# ----------------------------------------------------------------------------
def encoder_forward(ops, x_nchw, *, block_b=8):
    B, C, H, W = x_nchw.shape
    assert B % block_b == 0, "batch must be a multiple of block_b"
    x = jnp.transpose(x_nchw, (0, 2, 3, 1)).reshape(B, H * W * C)  # flat NHWC
    d0 = H * W * C

    m1, m2, m3, m4 = ops["mats"]
    s2, s3, s4 = ops["shifts"][1], ops["shifts"][2], ops["shifts"][3]
    wfc, bfc = ops["wfc"], ops["bfc"]
    n_z = wfc.shape[1]
    nb = B // block_b

    return pl.pallas_call(
        _encoder_kernel,
        out_shape=jax.ShapeDtypeStruct((B, n_z), jnp.float32),
        grid=(nb,),
        in_specs=[
            pl.BlockSpec((block_b, d0), lambda b: (b, 0)),   # input block
            pl.BlockSpec(m1.shape, lambda b: (0, 0)),        # resident weights
            pl.BlockSpec(m2.shape, lambda b: (0, 0)),
            pl.BlockSpec(m3.shape, lambda b: (0, 0)),
            pl.BlockSpec(m4.shape, lambda b: (0, 0)),
            pl.BlockSpec(wfc.shape, lambda b: (0, 0)),
            pl.BlockSpec(s2.shape, lambda b: (0, 0)),
            pl.BlockSpec(s3.shape, lambda b: (0, 0)),
            pl.BlockSpec(s4.shape, lambda b: (0, 0)),
            pl.BlockSpec(bfc.shape, lambda b: (0, 0)),
        ],
        out_specs=pl.BlockSpec((block_b, n_z), lambda b: (b, 0)),
        compiler_params=pltpu.CompilerParams(
            dimension_semantics=("parallel",)),
    )(x, m1, m2, m3, m4, wfc, s2, s3, s4, bfc)


# ----------------------------------------------------------------------------
# Pure-JAX f32 reference (correctness check only)
# ----------------------------------------------------------------------------
def reference_forward(params, x_nchw):
    x = jnp.transpose(x_nchw, (0, 2, 3, 1))
    for p in params["convs"]:
        y = lax.conv_general_dilated(
            x, p["w"], (2, 2), [(1, 1), (1, 1)],
            dimension_numbers=("NHWC", "HWIO", "NHWC"))
        y = y * p["scale"] + p["shift"]
        x = jnp.maximum(y, 0.0)
    feat = x.reshape(x.shape[0], -1)
    return jax.nn.sigmoid(feat @ params["fc"]["w"] + params["fc"]["b"])


if __name__ == "__main__":
    key = jax.random.PRNGKey(0)
    pkey, xkey = jax.random.split(key)

    n_z, n_channel, dim_h = 8, 1, 16      # small synthetic config
    B, H, W = 16, 16, 16                  # 16x16 -> 8 -> 4 -> 2 -> 1 spatial

    params = init_encoder_params(pkey, n_z, n_channel, dim_h)
    ops = build_fused_ops(params, H, W)   # one-time fold (conv+BN -> bf16 mats)
    x = jax.random.normal(xkey, (B, n_channel, H, W), jnp.float32)

    fwd = jax.jit(functools.partial(encoder_forward, block_b=8))
    out = jax.block_until_ready(fwd(ops, x))
    ref = jax.block_until_ready(reference_forward(params, x))

    assert out.shape == (B, n_z), out.shape
    # bf16 MXU operands + approx reciprocal vs f32 reference -> loose tolerance
    np.testing.assert_allclose(np.asarray(out), np.asarray(ref),
                               rtol=2e-2, atol=2e-2)
    print("KERNEL_OK")
</pallas_src>

<mosaic_0001>
module attributes {stable_mosaic.version = 11 : i64} {
  func.func @_encoder_kernel(%arg0: i32, %arg1: memref<8x256xf32, #tpu.memory_space<vmem>>, %arg2: memref<256x1024xbf16, #tpu.memory_space<vmem>>, %arg3: memref<1024x512xbf16, #tpu.memory_space<vmem>>, %arg4: memref<512x256xbf16, #tpu.memory_space<vmem>>, %arg5: memref<256x128xbf16, #tpu.memory_space<vmem>>, %arg6: memref<128x8xbf16, #tpu.memory_space<vmem>>, %arg7: memref<1x512xf32, #tpu.memory_space<vmem>>, %arg8: memref<1x256xf32, #tpu.memory_space<vmem>>, %arg9: memref<1x128xf32, #tpu.memory_space<vmem>>, %arg10: memref<1x8xf32, #tpu.memory_space<vmem>>, %arg11: memref<8x8xf32, #tpu.memory_space<vmem>>) attributes {dimension_semantics = [#tpu.dimension_semantics<parallel>], iteration_bounds = array<i64: 2>, scalar_prefetch = 0 : i64, scratch_operands = 0 : i64, tpu.core_type = #tpu.core_type<tc>, window_params = [{transform_indices = @transform_0, window_bounds = array<i64: 8, 256>}, {pipeline_mode = #tpu.pipeline_mode<synchronous>, transform_indices = @transform_1, window_bounds = array<i64: 256, 1024>}, {pipeline_mode = #tpu.pipeline_mode<synchronous>, transform_indices = @transform_2, window_bounds = array<i64: 1024, 512>}, {pipeline_mode = #tpu.pipeline_mode<synchronous>, transform_indices = @transform_3, window_bounds = array<i64: 512, 256>}, {pipeline_mode = #tpu.pipeline_mode<synchronous>, transform_indices = @transform_4, window_bounds = array<i64: 256, 128>}, {pipeline_mode = #tpu.pipeline_mode<synchronous>, transform_indices = @transform_5, window_bounds = array<i64: 128, 8>}, {pipeline_mode = #tpu.pipeline_mode<synchronous>, transform_indices = @transform_6, window_bounds = array<i64: 1, 512>}, {pipeline_mode = #tpu.pipeline_mode<synchronous>, transform_indices = @transform_7, window_bounds = array<i64: 1, 256>}, {pipeline_mode = #tpu.pipeline_mode<synchronous>, transform_indices = @transform_8, window_bounds = array<i64: 1, 128>}, {pipeline_mode = #tpu.pipeline_mode<synchronous>, transform_indices = @transform_9, window_bounds = array<i64: 1, 8>}, {transform_indices = @transform_10, window_bounds = array<i64: 8, 8>}]} {
    %c0 = arith.constant 0 : index
    %c0_0 = arith.constant 0 : index
    %0 = vector.load %arg1[%c0, %c0_0] : memref<8x256xf32, #tpu.memory_space<vmem>>, vector<8x256xf32>
    %1 = arith.truncf %0 : vector<8x256xf32> to vector<8x256xbf16>
    %c0_1 = arith.constant 0 : index
    %c0_2 = arith.constant 0 : index
    %2 = vector.load %arg2[%c0_1, %c0_2] : memref<256x1024xbf16, #tpu.memory_space<vmem>>, vector<256x1024xbf16>
    %cst = arith.constant dense<0.000000e+00> : vector<8x1024xf32>
    %3 = tpu.matmul %1, %2, %cst {dimension_numbers = #tpu.dot_dimension_numbers<[1], [0], [0], [1], [0, 0, 1, 1], [], []>} : vector<8x256xbf16>, vector<256x1024xbf16>, vector<8x1024xf32> -> vector<8x1024xf32>
    %cst_3 = arith.constant 0.000000e+00 : f32
    %4 = vector.broadcast %cst_3 : f32 to vector<8x1024xf32>
    %5 = arith.maximumf %3, %4 : vector<8x1024xf32>
    %6 = arith.truncf %5 : vector<8x1024xf32> to vector<8x1024xbf16>
    %c0_4 = arith.constant 0 : index
    %c0_5 = arith.constant 0 : index
    %7 = vector.load %arg3[%c0_4, %c0_5] : memref<1024x512xbf16, #tpu.memory_space<vmem>>, vector<1024x512xbf16>
    %cst_6 = arith.constant dense<0.000000e+00> : vector<8x512xf32>
    %8 = tpu.matmul %6, %7, %cst_6 {dimension_numbers = #tpu.dot_dimension_numbers<[1], [0], [0], [1], [0, 0, 1, 1], [], []>} : vector<8x1024xbf16>, vector<1024x512xbf16>, vector<8x512xf32> -> vector<8x512xf32>
    %c0_7 = arith.constant 0 : index
    %c0_8 = arith.constant 0 : index
    %9 = vector.load %arg7[%c0_7, %c0_8] : memref<1x512xf32, #tpu.memory_space<vmem>>, vector<1x512xf32>
    %10 = vector.broadcast %9 : vector<1x512xf32> to vector<8x512xf32>
    %11 = arith.addf %8, %10 : vector<8x512xf32>
    %cst_9 = arith.constant 0.000000e+00 : f32
    %12 = vector.broadcast %cst_9 : f32 to vector<8x512xf32>
    %13 = arith.maximumf %11, %12 : vector<8x512xf32>
    %14 = arith.truncf %13 : vector<8x512xf32> to vector<8x512xbf16>
    %c0_10 = arith.constant 0 : index
    %c0_11 = arith.constant 0 : index
    %15 = vector.load %arg4[%c0_10, %c0_11] : memref<512x256xbf16, #tpu.memory_space<vmem>>, vector<512x256xbf16>
    %cst_12 = arith.constant dense<0.000000e+00> : vector<8x256xf32>
    %16 = tpu.matmul %14, %15, %cst_12 {dimension_numbers = #tpu.dot_dimension_numbers<[1], [0], [0], [1], [0, 0, 1, 1], [], []>} : vector<8x512xbf16>, vector<512x256xbf16>, vector<8x256xf32> -> vector<8x256xf32>
    %c0_13 = arith.constant 0 : index
    %c0_14 = arith.constant 0 : index
    %17 = vector.load %arg8[%c0_13, %c0_14] : memref<1x256xf32, #tpu.memory_space<vmem>>, vector<1x256xf32>
    %18 = vector.broadcast %17 : vector<1x256xf32> to vector<8x256xf32>
    %19 = arith.addf %16, %18 : vector<8x256xf32>
    %cst_15 = arith.constant 0.000000e+00 : f32
    %20 = vector.broadcast %cst_15 : f32 to vector<8x256xf32>
    %21 = arith.maximumf %19, %20 : vector<8x256xf32>
    %22 = arith.truncf %21 : vector<8x256xf32> to vector<8x256xbf16>
    %c0_16 = arith.constant 0 : index
    %c0_17 = arith.constant 0 : index
    %23 = vector.load %arg5[%c0_16, %c0_17] : memref<256x128xbf16, #tpu.memory_space<vmem>>, vector<256x128xbf16>
    %cst_18 = arith.constant dense<0.000000e+00> : vector<8x128xf32>
    %24 = tpu.matmul %22, %23, %cst_18 {dimension_numbers = #tpu.dot_dimension_numbers<[1], [0], [0], [1], [0, 0, 1, 1], [], []>} : vector<8x256xbf16>, vector<256x128xbf16>, vector<8x128xf32> -> vector<8x128xf32>
    %c0_19 = arith.constant 0 : index
    %c0_20 = arith.constant 0 : index
    %25 = vector.load %arg9[%c0_19, %c0_20] : memref<1x128xf32, #tpu.memory_space<vmem>>, vector<1x128xf32>
    %26 = vector.broadcast %25 : vector<1x128xf32> to vector<8x128xf32>
    %27 = arith.addf %24, %26 : vector<8x128xf32>
    %cst_21 = arith.constant 0.000000e+00 : f32
    %28 = vector.broadcast %cst_21 : f32 to vector<8x128xf32>
    %29 = arith.maximumf %27, %28 : vector<8x128xf32>
    %30 = arith.truncf %29 : vector<8x128xf32> to vector<8x128xbf16>
    %c0_22 = arith.constant 0 : index
    %c0_23 = arith.constant 0 : index
    %31 = vector.load %arg6[%c0_22, %c0_23] : memref<128x8xbf16, #tpu.memory_space<vmem>>, vector<128x8xbf16>
    %cst_24 = arith.constant dense<0.000000e+00> : vector<8x8xf32>
    %32 = tpu.matmul %30, %31, %cst_24 {dimension_numbers = #tpu.dot_dimension_numbers<[1], [0], [0], [1], [0, 0, 1, 1], [], []>} : vector<8x128xbf16>, vector<128x8xbf16>, vector<8x8xf32> -> vector<8x8xf32>
    %c0_25 = arith.constant 0 : index
    %c0_26 = arith.constant 0 : index
    %33 = vector.load %arg10[%c0_25, %c0_26] : memref<1x8xf32, #tpu.memory_space<vmem>>, vector<1x8xf32>
    %34 = vector.broadcast %33 : vector<1x8xf32> to vector<8x8xf32>
    %35 = arith.addf %32, %34 : vector<8x8xf32>
    %cst_27 = arith.constant 0.000000e+00 : f32
    %36 = vector.broadcast %cst_27 : f32 to vector<8x8xf32>
    %37 = arith.subf %36, %35 : vector<8x8xf32>
    %38 = math.exp %37 : vector<8x8xf32>
    %cst_28 = arith.constant 1.000000e+00 : f32
    %39 = vector.broadcast %cst_28 : f32 to vector<8x8xf32>
    %40 = arith.addf %39, %38 : vector<8x8xf32>
    %41 = tpu.reciprocal %40 {approx = true} : vector<8x8xf32> -> vector<8x8xf32>
    %c0_29 = arith.constant 0 : index
    %c0_30 = arith.constant 0 : index
    %42 = vector.load %arg11[%c0_29, %c0_30] : memref<8x8xf32, #tpu.memory_space<vmem>>, vector<8x8xf32>
    tpu.vector_store %arg11[%c0_29, %c0_30], %41 {strides = array<i32>} : memref<8x8xf32, #tpu.memory_space<vmem>>, vector<8x8xf32>,
    return
  }
  func.func @transform_0(%arg0: i32) -> (i32, i32) {
    %c0_i32 = arith.constant 0 : i32
    %c0_i32_0 = arith.constant 0 : i32
    return %arg0, %c0_i32 : i32, i32
  }
  func.func @transform_1(%arg0: i32) -> (i32, i32) {
    %c0_i32 = arith.constant 0 : i32
    %c0_i32_0 = arith.constant 0 : i32
    %c0_i32_1 = arith.constant 0 : i32
    return %c0_i32, %c0_i32_0 : i32, i32
  }
  func.func @transform_2(%arg0: i32) -> (i32, i32) {
    %c0_i32 = arith.constant 0 : i32
    %c0_i32_0 = arith.constant 0 : i32
    %c0_i32_1 = arith.constant 0 : i32
    return %c0_i32, %c0_i32_0 : i32, i32
  }
  func.func @transform_3(%arg0: i32) -> (i32, i32) {
    %c0_i32 = arith.constant 0 : i32
    %c0_i32_0 = arith.constant 0 : i32
    %c0_i32_1 = arith.constant 0 : i32
    return %c0_i32, %c0_i32_0 : i32, i32
  }
  func.func @transform_4(%arg0: i32) -> (i32, i32) {
    %c0_i32 = arith.constant 0 : i32
    %c0_i32_0 = arith.constant 0 : i32
    %c0_i32_1 = arith.constant 0 : i32
    return %c0_i32, %c0_i32_0 : i32, i32
  }
  func.func @transform_5(%arg0: i32) -> (i32, i32) {
    %c0_i32 = arith.constant 0 : i32
    %c0_i32_0 = arith.constant 0 : i32
    %c0_i32_1 = arith.constant 0 : i32
    return %c0_i32, %c0_i32_0 : i32, i32
  }
  func.func @transform_6(%arg0: i32) -> (i32, i32) {
    %c0_i32 = arith.constant 0 : i32
    %c0_i32_0 = arith.constant 0 : i32
    %c0_i32_1 = arith.constant 0 : i32
    return %c0_i32, %c0_i32_0 : i32, i32
  }
  func.func @transform_7(%arg0: i32) -> (i32, i32) {
    %c0_i32 = arith.constant 0 : i32
    %c0_i32_0 = arith.constant 0 : i32
    %c0_i32_1 = arith.constant 0 : i32
    return %c0_i32, %c0_i32_0 : i32, i32
  }
  func.func @transform_8(%arg0: i32) -> (i32, i32) {
    %c0_i32 = arith.constant 0 : i32
    %c0_i32_0 = arith.constant 0 : i32
    %c0_i32_1 = arith.constant 0 : i32
    return %c0_i32, %c0_i32_0 : i32, i32
  }
  func.func @transform_9(%arg0: i32) -> (i32, i32) {
    %c0_i32 = arith.constant 0 : i32
    %c0_i32_0 = arith.constant 0 : i32
    %c0_i32_1 = arith.constant 0 : i32
    return %c0_i32, %c0_i32_0 : i32, i32
  }
  func.func @transform_10(%arg0: i32) -> (i32, i32) {
    %c0_i32 = arith.constant 0 : i32
    %c0_i32_0 = arith.constant 0 : i32
    return %arg0, %c0_i32 : i32, i32
  }
}

</mosaic_0001>

<llo_original>
// kernel: encoder_forward.1
$region0: #{encoder_forward.1}
  #allocation0 [shape = 'u32[]', space=smem, size = 0x4, offset = 0x4, fixed_abs, tag = 'smem constant byte address 0x4 - core index']
  #allocation1 [shape = 'u32[144,128]{1,0:T(1,128)}', space=vmem, size = 0x12000, scoped, tag = 'internal scratch']
  %s0 = inlined_call_operand.vmem [shape: f32[16,256], index: 0, kind: input, shape index: {}]
  %s1 = inlined_call_operand.hbm [shape: bf16[256,1024], index: 1, kind: input, shape index: {}]
  %s2 = inlined_call_operand.hbm [shape: bf16[1024,512], index: 2, kind: input, shape index: {}]
  %s3 = inlined_call_operand.hbm [shape: bf16[512,256], index: 3, kind: input, shape index: {}]
  %s4 = inlined_call_operand.vmem [shape: bf16[256,128], index: 4, kind: input, shape index: {}]
  %s5 = inlined_call_operand.vmem [shape: bf16[128,8], index: 5, kind: input, shape index: {}]
  %s6 = inlined_call_operand.vmem [shape: f32[1,512], index: 6, kind: input, shape index: {}]
  %s7 = inlined_call_operand.vmem [shape: f32[1,256], index: 7, kind: input, shape index: {}]
  %s8 = inlined_call_operand.vmem [shape: f32[1,128], index: 8, kind: input, shape index: {}]
  %s9 = inlined_call_operand.vmem [shape: f32[1,8], index: 9, kind: input, shape index: {}]
  %s10 = inlined_call_operand.vmem [shape: f32[16,8], index: 10, kind: output, shape index: {}]
  %s11 = sld [smem:[#allocation0]]
  $region85: #{encoder_forward.1} parent=0
    _
  %s13 = ssub.s32 1, %s11
  %s14 = scalar_select 0, %s13, %s11
  $region1: #{encoder_forward.1} parent=0
    #allocation2 [shape = 'u8[524288]{0}', space=vmem, size = 0x80000, scoped, tag = 'input window, operand 1, single buffered']
    #allocation3 [shape = 's32[2]{0}', space=sflag, size = 0x8, scoped, tag = 'scoped memory for encoder_forward.1']
    #allocation4 [shape = 'u8[1048576]{0}', space=vmem, size = 0x100000, scoped, tag = 'input window, operand 2, single buffered']
    #allocation5 [shape = 's32[1]{0}', space=sflag, size = 0x4, scoped, tag = 'scoped memory for encoder_forward.1']
    #allocation6 [shape = 'u8[262144]{0}', space=vmem, size = 0x40000, scoped, tag = 'input window, operand 3, single buffered']
    %15 = vsyncpa [#allocation3], 0
    %16 = vsyncpa [#allocation5], 0
    loop: start=0, step=1, limit=4
    $region2: #{encoder_forward.1} parent=1 // loop_pre_header
      _
    $region3: #{encoder_forward.1} parent=1 // loop_header
      %s18 = sphi 0, %s22
      %p19 = scmp.ge.s32.totalorder %s18, 4
      %s28 = sphi 0, %s30
      %s31 = sphi 0, %s28
      %s32 = sphi 0, %s31
      %s48 = sphi 0, %s32
      %s52 = sphi 0, %s52
      %s54 = sphi 0, %s52
      %s55 = sphi 0, %s54
      %s69 = sphi 0, %s55
      %s73 = sphi 0, %s73
      %s75 = sphi 0, %s73
      %s76 = sphi 0, %s75
      %s90 = sphi 0, %s76
      %s94 = sphi 0, %s94
      %s96 = sphi 0, %s94
      %s97 = sphi 0, %s96
      %s111 = sphi 0, %s97
      %s115 = sphi 0, %s115
      %s117 = sphi 0, %s115
      %s118 = sphi 0, %s117
      %s132 = sphi 0, %s118
      %s136 = sphi 0, %s136
      %s138 = sphi 0, %s136
      %s139 = sphi 0, %s138
      %s153 = sphi 0, %s139
      %s157 = sphi 0, %s157
      %s159 = sphi 0, %s157
      %s160 = sphi 0, %s159
      %s174 = sphi 0, %s160
      %s178 = sphi 0, %s178
      %s180 = sphi 0, %s178
      %s181 = sphi 0, %s180
      %s195 = sphi 0, %s181
      %s199 = sphi 0, %s199
      %s201 = sphi 0, %s199
      %s202 = sphi 0, %s201
      %s216 = sphi 0, %s202
      %s220 = sphi 0, %s220
      %s222 = sphi 0, %s220
      %s223 = sphi 0, %s222
      %s237 = sphi 0, %s223
      %s243 = sphi 0, %s245
      %s246 = sphi 0, %s243
      %s247 = sphi 0, %s246
      %s263 = sphi 0, %s247
    $region4: #{encoder_forward.1} parent=1 // loop_header_branch
      %21 = sbr.rel (%p19) target = $region8
    $region5: #{encoder_forward.1} parent=1 // loop_body
      %s23 = ssub.s32 %s18, 1
      %s24 = ssub.s32 %s18, 2
      %s25 = sadd.s32 %s18, 1
      %s26 = ssub.s32 %s18, %s25
      %p27 = scmp.eq.s32.totalorder %s26, 0
      %s29 = sadd.s32 %s28, 1
      %s30 = scalar_select %p27, %s28, %s29
      %p33 = pneg %p27
      %p34 = scmp.eq.s32.totalorder %s18, 1
      %p35 = por %p33, %p34
      %p36 = scmp.ne.s32.totalorder %s28, %s31
      %p37 = scmp.eq.s32.totalorder %s18, 0
      %p38 = por %p36, %p37
      %p39 = scmp.ne.s32.totalorder %s28, %s31
      %p40 = scmp.eq.s32.totalorder %s23, 1
      %p41 = por %p39, %p40
      %p42 = scmp.ne.s32.totalorder %s31, %s32
      %p43 = scmp.eq.s32.totalorder %s23, 0
      %p44 = por %p42, %p43
      %p45 = scmp.ne.s32.totalorder %s31, %s32
      %p46 = scmp.eq.s32.totalorder %s24, 1
      %p47 = por %p45, %p46
      %p49 = scmp.ne.s32.totalorder %s32, %s48
      %p50 = scmp.eq.s32.totalorder %s24, 0
      %p51 = por %p49, %p50
      %s53 = sadd.s32 %s52, 1
      %p56 = scmp.eq.s32.totalorder %s18, 1
      %p57 = scmp.ne.s32.totalorder %s52, %s54
      %p58 = scmp.eq.s32.totalorder %s18, 0
      %p59 = por %p57, %p58
      %p60 = scmp.ne.s32.totalorder %s52, %s54
      %p61 = scmp.eq.s32.totalorder %s23, 1
      %p62 = por %p60, %p61
      %p63 = scmp.ne.s32.totalorder %s54, %s55
      %p64 = scmp.eq.s32.totalorder %s23, 0
      %p65 = por %p63, %p64
      %p66 = scmp.ne.s32.totalorder %s54, %s55
      %p67 = scmp.eq.s32.totalorder %s24, 1
      %p68 = por %p66, %p67
      %p70 = scmp.ne.s32.totalorder %s55, %s69
      %p71 = scmp.eq.s32.totalorder %s24, 0
      %p72 = por %p70, %p71
      %s74 = sadd.s32 %s73, 1
      %p77 = scmp.eq.s32.totalorder %s18, 1
      %p78 = scmp.ne.s32.totalorder %s73, %s75
      %p79 = scmp.eq.s32.totalorder %s18, 0
      %p80 = por %p78, %p79
      %p81 = scmp.ne.s32.totalorder %s73, %s75
      %p82 = scmp.eq.s32.totalorder %s23, 1
      %p83 = por %p81, %p82
      %p84 = scmp.ne.s32.totalorder %s75, %s76
      %p85 = scmp.eq.s32.totalorder %s23, 0
      %p86 = por %p84, %p85
      %p87 = scmp.ne.s32.totalorder %s75, %s76
      %p88 = scmp.eq.s32.totalorder %s24, 1
      %p89 = por %p87, %p88
      %p91 = scmp.ne.s32.totalorder %s76, %s90
      %p92 = scmp.eq.s32.totalorder %s24, 0
      %p93 = por %p91, %p92
      %s95 = sadd.s32 %s94, 1
      %p98 = scmp.eq.s32.totalorder %s18, 1
      %p99 = scmp.ne.s32.totalorder %s94, %s96
      %p100 = scmp.eq.s32.totalorder %s18, 0
      %p101 = por %p99, %p100
      %p102 = scmp.ne.s32.totalorder %s94, %s96
      %p103 = scmp.eq.s32.totalorder %s23, 1
      %p104 = por %p102, %p103
      %p105 = scmp.ne.s32.totalorder %s96, %s97
      %p106 = scmp.eq.s32.totalorder %s23, 0
      %p107 = por %p105, %p106
      %p108 = scmp.ne.s32.totalorder %s96, %s97
      %p109 = scmp.eq.s32.totalorder %s24, 1
      %p110 = por %p108, %p109
      %p112 = scmp.ne.s32.totalorder %s97, %s111
      %p113 = scmp.eq.s32.totalorder %s24, 0
      %p114 = por %p112, %p113
      %s116 = sadd.s32 %s115, 1
      %p119 = scmp.eq.s32.totalorder %s18, 1
      %p120 = scmp.ne.s32.totalorder %s115, %s117
      %p121 = scmp.eq.s32.totalorder %s18, 0
      %p122 = por %p120, %p121
      %p123 = scmp.ne.s32.totalorder %s115, %s117
      %p124 = scmp.eq.s32.totalorder %s23, 1
      %p125 = por %p123, %p124
      %p126 = scmp.ne.s32.totalorder %s117, %s118
      %p127 = scmp.eq.s32.totalorder %s23, 0
      %p128 = por %p126, %p127
      %p129 = scmp.ne.s32.totalorder %s117, %s118
      %p130 = scmp.eq.s32.totalorder %s24, 1
      %p131 = por %p129, %p130
      %p133 = scmp.ne.s32.totalorder %s118, %s132
      %p134 = scmp.eq.s32.totalorder %s24, 0
      %p135 = por %p133, %p134
      %s137 = sadd.s32 %s136, 1
      %p140 = scmp.eq.s32.totalorder %s18, 1
      %p141 = scmp.ne.s32.totalorder %s136, %s138
      %p142 = scmp.eq.s32.totalorder %s18, 0
      %p143 = por %p141, %p142
      %p144 = scmp.ne.s32.totalorder %s136, %s138
      %p145 = scmp.eq.s32.totalorder %s23, 1
      %p146 = por %p144, %p145
      %p147 = scmp.ne.s32.totalorder %s138, %s139
      %p148 = scmp.eq.s32.totalorder %s23, 0
      %p149 = por %p147, %p148
      %p150 = scmp.ne.s32.totalorder %s138, %s139
      %p151 = scmp.eq.s32.totalorder %s24, 1
      %p152 = por %p150, %p151
      %p154 = scmp.ne.s32.totalorder %s139, %s153
      %p155 = scmp.eq.s32.totalorder %s24, 0
      %p156 = por %p154, %p155
      %s158 = sadd.s32 %s157, 1
      %p161 = scmp.eq.s32.totalorder %s18, 1
      %p162 = scmp.ne.s32.totalorder %s157, %s159
      %p163 = scmp.eq.s32.totalorder %s18, 0
      %p164 = por %p162, %p163
      %p165 = scmp.ne.s32.totalorder %s157, %s159
      %p166 = scmp.eq.s32.totalorder %s23, 1
      %p167 = por %p165, %p166
      %p168 = scmp.ne.s32.totalorder %s159, %s160
      %p169 = scmp.eq.s32.totalorder %s23, 0
      %p170 = por %p168, %p169
      %p171 = scmp.ne.s32.totalorder %s159, %s160
      %p172 = scmp.eq.s32.totalorder %s24, 1
      %p173 = por %p171, %p172
      %p175 = scmp.ne.s32.totalorder %s160, %s174
      %p176 = scmp.eq.s32.totalorder %s24, 0
      %p177 = por %p175, %p176
      %s179 = sadd.s32 %s178, 1
      %p182 = scmp.eq.s32.totalorder %s18, 1
      %p183 = scmp.ne.s32.totalorder %s178, %s180
      %p184 = scmp.eq.s32.totalorder %s18, 0
      %p185 = por %p183, %p184
      %p186 = scmp.ne.s32.totalorder %s178, %s180
      %p187 = scmp.eq.s32.totalorder %s23, 1
      %p188 = por %p186, %p187
      %p189 = scmp.ne.s32.totalorder %s180, %s181
      %p190 = scmp.eq.s32.totalorder %s23, 0
      %p191 = por %p189, %p190
      %p192 = scmp.ne.s32.totalorder %s180, %s181
      %p193 = scmp.eq.s32.totalorder %s24, 1
      %p194 = por %p192, %p193
      %p196 = scmp.ne.s32.totalorder %s181, %s195
      %p197 = scmp.eq.s32.totalorder %s24, 0
      %p198 = por %p196, %p197
      %s200 = sadd.s32 %s199, 1
      %p203 = scmp.eq.s32.totalorder %s18, 1
      %p204 = scmp.ne.s32.totalorder %s199, %s201
      %p205 = scmp.eq.s32.totalorder %s18, 0
      %p206 = por %p204, %p205
      %p207 = scmp.ne.s32.totalorder %s199, %s201
      %p208 = scmp.eq.s32.totalorder %s23, 1
      %p209 = por %p207, %p208
      %p210 = scmp.ne.s32.totalorder %s201, %s202
      %p211 = scmp.eq.s32.totalorder %s23, 0
      %p212 = por %p210, %p211
      %p213 = scmp.ne.s32.totalorder %s201, %s202
      %p214 = scmp.eq.s32.totalorder %s24, 1
      %p215 = por %p213, %p214
      %p217 = scmp.ne.s32.totalorder %s202, %s216
      %p218 = scmp.eq.s32.totalorder %s24, 0
      %p219 = por %p217, %p218
      %s221 = sadd.s32 %s220, 1
      %p224 = scmp.eq.s32.totalorder %s18, 1
      %p225 = scmp.ne.s32.totalorder %s220, %s222
      %p226 = scmp.eq.s32.totalorder %s18, 0
      %p227 = por %p225, %p226
      %p228 = scmp.ne.s32.totalorder %s220, %s222
      %p229 = scmp.eq.s32.totalorder %s23, 1
      %p230 = por %p228, %p229
      %p231 = scmp.ne.s32.totalorder %s222, %s223
      %p232 = scmp.eq.s32.totalorder %s23, 0
      %p233 = por %p231, %p232
      %p234 = scmp.ne.s32.totalorder %s222, %s223
      %p235 = scmp.eq.s32.totalorder %s24, 1
      %p236 = por %p234, %p235
      %p238 = scmp.ne.s32.totalorder %s223, %s237
      %p239 = scmp.eq.s32.totalorder %s24, 0
      %p240 = por %p238, %p239
      %s241 = ssub.s32 %s18, %s25
      %p242 = scmp.eq.s32.totalorder %s241, 0
      %s244 = sadd.s32 %s243, 1
      %s245 = scalar_select %p242, %s243, %s244
      %p248 = pneg %p242
      %p249 = scmp.eq.s32.totalorder %s18, 1
      %p250 = por %p248, %p249
      %p251 = scmp.ne.s32.totalorder %s243, %s246
      %p252 = scmp.eq.s32.totalorder %s18, 0
      %p253 = por %p251, %p252
      %p254 = scmp.ne.s32.totalorder %s243, %s246
      %p255 = scmp.eq.s32.totalorder %s23, 1
      %p256 = por %p254, %p255
      %p257 = scmp.ne.s32.totalorder %s246, %s247
      %p258 = scmp.eq.s32.totalorder %s23, 0
      %p259 = por %p257, %p258
      %p260 = scmp.ne.s32.totalorder %s246, %s247
      %p261 = scmp.eq.s32.totalorder %s24, 1
      %p262 = por %p260, %p261
      %p264 = scmp.ne.s32.totalorder %s247, %s263
      %p265 = scmp.eq.s32.totalorder %s24, 0
      %p266 = por %p264, %p265
      %p267 = scmp.le.s32.totalorder 1, %s18
      %p268 = scmp.lt.s32.totalorder %s18, 3
      %p269 = pnand %p267, %p268
      %p270 = pneg %p269
      // Predicated region
      $region9: #{encoder_forward.1} parent=5 // pred_check
        _
      $region10: #{encoder_forward.1} parent=5 // pred_check_branch
        %272 = sbr.rel (%p269) target = $region12
      $region11: #{encoder_forward.1} parent=5 // pred_region
        %s273 = ssub.s32 %s18, 1
        // Predicated region
        $region13: #{encoder_forward.1} parent=11 // pred_check
          %p274 = pneg %p65
        $region14: #{encoder_forward.1} parent=11 // pred_check_branch
          %276 = sbr.rel (%p274) target = $region16
        $region15: #{encoder_forward.1} parent=11 // pred_region
          %s278 = ssub.s32 16384, 16384
          %279 = vsyncadd [#allocation3], %s278
          %s280 = sshll.u32 [#allocation2], 4
          %s281 = int_to_ptr.vmem [resolvable:$true] %s280
          %286 = dma.hbm_to_vmem [thread:$0]  %s1, 16384, %s281, [#allocation3], 512, 512, 32
        $region16: #{encoder_forward.1} parent=11 // pred_fallthru
          _
        // Predicated region
        $region17: #{encoder_forward.1} parent=11 // pred_check
          %p287 = pneg %p86
        $region18: #{encoder_forward.1} parent=11 // pred_check_branch
          %289 = sbr.rel (%p287) target = $region20
        $region19: #{encoder_forward.1} parent=11 // pred_region
          %s291 = ssub.s32 32768, 32768
          %292 = vsyncadd [#allocation5], %s291
          %s293 = sshll.u32 [#allocation4], 4
          %s294 = int_to_ptr.vmem [resolvable:$true] %s293
          %299 = dma.hbm_to_vmem [thread:$0]  %s2, 32768, %s294, [#allocation5], 256, 256, 16
        $region20: #{encoder_forward.1} parent=11 // pred_fallthru
          _
        // Predicated region
        $region21: #{encoder_forward.1} parent=11 // pred_check
          %p300 = pneg %p107
        $region22: #{encoder_forward.1} parent=11 // pred_check_branch
          %302 = sbr.rel (%p300) target = $region24
        $region23: #{encoder_forward.1} parent=11 // pred_region
          %s304 = ssub.s32 8192, 8192
          %305 = vsyncadd [#allocation5], %s304
          %s306 = sshll.u32 [#allocation6], 4
          %s307 = int_to_ptr.vmem [resolvable:$true] %s306
          %312 = dma.hbm_to_vmem [thread:$0]  %s3, 8192, %s307, [#allocation5], 128, 128, 8
        $region24: #{encoder_forward.1} parent=11 // pred_fallthru
          _
        // Predicated region
        $region25: #{encoder_forward.1} parent=11 // pred_check
          %p313 = pneg %p128
        $region26: #{encoder_forward.1} parent=11 // pred_check_branch
          %315 = sbr.rel (%p313) target = $region28
        $region27: #{encoder_forward.1} parent=11 // pred_region
          _
        $region28: #{encoder_forward.1} parent=11 // pred_fallthru
          _
        // Predicated region
        $region29: #{encoder_forward.1} parent=11 // pred_check
          %p316 = pneg %p149
        $region30: #{encoder_forward.1} parent=11 // pred_check_branch
          %318 = sbr.rel (%p316) target = $region32
        $region31: #{encoder_forward.1} parent=11 // pred_region
          _
        $region32: #{encoder_forward.1} parent=11 // pred_fallthru
          _
        // Predicated region
        $region33: #{encoder_forward.1} parent=11 // pred_check
          %p319 = pneg %p170
        $region34: #{encoder_forward.1} parent=11 // pred_check_branch
          %321 = sbr.rel (%p319) target = $region36
        $region35: #{encoder_forward.1} parent=11 // pred_region
          _
        $region36: #{encoder_forward.1} parent=11 // pred_fallthru
          _
        // Predicated region
        $region37: #{encoder_forward.1} parent=11 // pred_check
          %p322 = pneg %p191
        $region38: #{encoder_forward.1} parent=11 // pred_check_branch
          %324 = sbr.rel (%p322) target = $region40
        $region39: #{encoder_forward.1} parent=11 // pred_region
          _
        $region40: #{encoder_forward.1} parent=11 // pred_fallthru
          _
        // Predicated region
        $region41: #{encoder_forward.1} parent=11 // pred_check
          %p325 = pneg %p212
        $region42: #{encoder_forward.1} parent=11 // pred_check_branch
          %327 = sbr.rel (%p325) target = $region44
        $region43: #{encoder_forward.1} parent=11 // pred_region
          _
        $region44: #{encoder_forward.1} parent=11 // pred_fallthru
          _
        // Predicated region
        $region45: #{encoder_forward.1} parent=11 // pred_check
          %p328 = pneg %p233
        $region46: #{encoder_forward.1} parent=11 // pred_check_branch
          %330 = sbr.rel (%p328) target = $region48
        $region47: #{encoder_forward.1} parent=11 // pred_region
          _
        $region48: #{encoder_forward.1} parent=11 // pred_fallthru
          _
      $region12: #{encoder_forward.1} parent=5 // pred_fallthru
        _
      %p331 = scmp.lt.s32.totalorder %s18, 2
      // Predicated region
      $region49: #{encoder_forward.1} parent=5 // pred_check
        %p332 = pneg %p331
      $region50: #{encoder_forward.1} parent=5 // pred_check_branch
        %334 = sbr.rel (%p332) target = $region52
      $region51: #{encoder_forward.1} parent=5 // pred_region
        // Predicated region
        $region53: #{encoder_forward.1} parent=51 // pred_check
          %p335 = pneg %p38
        $region54: #{encoder_forward.1} parent=51 // pred_check_branch
          %337 = sbr.rel (%p335) target = $region56
        $region55: #{encoder_forward.1} parent=51 // pred_region
          %p338 = scmp.lt.s32.totalorder %s18, 1
          %s339 = scalar_select %p338, %s18, 1
          %s340 = smul.addr %s339, 2
          %s341 = smul.addr %s340, 8
          %s342 = scalar_lea.vmem %s0, %s341
        $region56: #{encoder_forward.1} parent=51 // pred_fallthru
          _
      $region52: #{encoder_forward.1} parent=5 // pred_fallthru
        _
      %p343 = scmp.le.s32.totalorder 1, %s18
      %p344 = scmp.lt.s32.totalorder %s18, 3
      %p345 = pnand %p343, %p344
      %p346 = pneg %p345
      // Predicated region
      $region57: #{encoder_forward.1} parent=5 // pred_check
        _
      $region58: #{encoder_forward.1} parent=5 // pred_check_branch
        %348 = sbr.rel (%p345) target = $region60
      $region59: #{encoder_forward.1} parent=5 // pred_region
        %s349 = ssub.s32 %s18, 1
        // Predicated region
        $region61: #{encoder_forward.1} parent=59 // pred_check
          %p350 = pneg %p65
        $region62: #{encoder_forward.1} parent=59 // pred_check_branch
          %352 = sbr.rel (%p350) target = $region64
        $region63: #{encoder_forward.1} parent=59 // pred_region
          %353 = dma.done [#allocation3], 16384
        $region64: #{encoder_forward.1} parent=59 // pred_fallthru
          _
        // Predicated region
        $region65: #{encoder_forward.1} parent=59 // pred_check
          %p354 = pneg %p86
        $region66: #{encoder_forward.1} parent=59 // pred_check_branch
          %356 = sbr.rel (%p354) target = $region68
        $region67: #{encoder_forward.1} parent=59 // pred_region
          %357 = dma.done [#allocation5], 32768
        $region68: #{encoder_forward.1} parent=59 // pred_fallthru
          _
        // Predicated region
        $region69: #{encoder_forward.1} parent=59 // pred_check
          %p358 = pneg %p107
        $region70: #{encoder_forward.1} parent=59 // pred_check_branch
          %360 = sbr.rel (%p358) target = $region72
        $region71: #{encoder_forward.1} parent=59 // pred_region
          %361 = dma.done [#allocation5], 8192
        $region72: #{encoder_forward.1} parent=59 // pred_fallthru
          _
        %p362 = scmp.lt.s32.totalorder %s23, 1
        %s363 = scalar_select %p362, %s23, 1
        %s364 = smul.addr %s363, 2
        %s365 = smul.addr %s364, 8
        %s366 = scalar_lea.vmem %s0, %s365
        %p367 = pneg %p44
        %p368 = pneg %p41
        %p369 = pneg %p65
        %p370 = pneg %p62
        %p371 = pneg %p86
        %p372 = pneg %p83
        %p373 = pneg %p107
        %p374 = pneg %p104
        %p375 = pneg %p128
        %p376 = pneg %p125
        %p377 = pneg %p149
        %p378 = pneg %p146
        %p379 = pneg %p170
        %p380 = pneg %p167
        %p381 = pneg %p191
        %p382 = pneg %p188
        %p383 = pneg %p212
        %p384 = pneg %p209
        %p385 = pneg %p233
        %p386 = pneg %p230
        %p387 = pneg %p259
        %p388 = pneg %p256
        %p389 = scmp.lt.s32.totalorder %s23, 1
        %s390 = scalar_select %p389, %s23, 1
        %s391 = smul.addr %s390, 8
        %s392 = scalar_lea.vmem %s10, %s391
        %p393 = scmp.lt.s32.totalorder %s23, 1
        %s394 = scalar_select %p393, %s23, 1
        %s395 = smul.addr %s394, 2
        %s396 = smul.addr %s395, 8
        %s397 = scalar_lea.vmem %s0, %s396
        %p398 = scmp.lt.s32.totalorder %s23, 1
        %s399 = scalar_select %p398, %s23, 1
        %s400 = smul.addr %s399, 8
        %s401 = scalar_lea.vmem %s10, %s400
        %v403 = vld [vmem:[%s397] sm:$0xff]
        %v404 = vld [vmem:[%s397 + $0x8] sm:$0xff]
        %v405 = vpack.c.bf16 %v403, %v403
        %v406 = vpack.c.bf16 %v404, %v404
        %v407 = vld [vmem:[#allocation2] sm:$0xff]
        %v408 = vld [vmem:[#allocation2 + $0x8] sm:$0xff]
        %v409 = vld [vmem:[#allocation2 + $0x10] sm:$0xff]
        %v410 = vld [vmem:[#allocation2 + $0x18] sm:$0xff]
        %v411 = vld [vmem:[#allocation2 + $0x20] sm:$0xff]
        %v412 = vld [vmem:[#allocation2 + $0x28] sm:$0xff]
        %v413 = vld [vmem:[#allocation2 + $0x30] sm:$0xff]
        %v414 = vld [vmem:[#allocation2 + $0x38] sm:$0xff]
        %v415 = vld [vmem:[#allocation2 + $0x40] sm:$0xff]
        %v416 = vld [vmem:[#allocation2 + $0x48] sm:$0xff]
        %v417 = vld [vmem:[#allocation2 + $0x50] sm:$0xff]
        %v418 = vld [vmem:[#allocation2 + $0x58] sm:$0xff]
        %v419 = vld [vmem:[#allocation2 + $0x60] sm:$0xff]
        %v420 = vld [vmem:[#allocation2 + $0x68] sm:$0xff]
        %v421 = vld [vmem:[#allocation2 + $0x70] sm:$0xff]
        %v422 = vld [vmem:[#allocation2 + $0x78] sm:$0xff]
        %v423 = vld [vmem:[#allocation2 + $0x80] sm:$0xff]
        %v424 = vld [vmem:[#allocation2 + $0x88] sm:$0xff]
        %v425 = vld [vmem:[#allocation2 + $0x90] sm:$0xff]
        %v426 = vld [vmem:[#allocation2 + $0x98] sm:$0xff]
        %v427 = vld [vmem:[#allocation2 + $0xa0] sm:$0xff]
        %v428 = vld [vmem:[#allocation2 + $0xa8] sm:$0xff]
        %v429 = vld [vmem:[#allocation2 + $0xb0] sm:$0xff]
        %v430 = vld [vmem:[#allocation2 + $0xb8] sm:$0xff]
        %v431 = vld [vmem:[#allocation2 + $0xc0] sm:$0xff]
        %v432 = vld [vmem:[#allocation2 + $0xc8] sm:$0xff]
        %v433 = vld [vmem:[#allocation2 + $0xd0] sm:$0xff]
        %v434 = vld [vmem:[#allocation2 + $0xd8] sm:$0xff]
        %v435 = vld [vmem:[#allocation2 + $0xe0] sm:$0xff]
        %v436 = vld [vmem:[#allocation2 + $0xe8] sm:$0xff]
        %v437 = vld [vmem:[#allocation2 + $0xf0] sm:$0xff]
        %v438 = vld [vmem:[#allocation2 + $0xf8] sm:$0xff]
        %v439 = vld [vmem:[#allocation2 + $0x100] sm:$0xff]
        %v440 = vld [vmem:[#allocation2 + $0x108] sm:$0xff]
        %v441 = vld [vmem:[#allocation2 + $0x110] sm:$0xff]
        %v442 = vld [vmem:[#allocation2 + $0x118] sm:$0xff]
        %v443 = vld [vmem:[#allocation2 + $0x120] sm:$0xff]
        %v444 = vld [vmem:[#allocation2 + $0x128] sm:$0xff]
        %v445 = vld [vmem:[#allocation2 + $0x130] sm:$0xff]
        %v446 = vld [vmem:[#allocation2 + $0x138] sm:$0xff]
        %v447 = vld [vmem:[#allocation2 + $0x140] sm:$0xff]
        %v448 = vld [vmem:[#allocation2 + $0x148] sm:$0xff]
        %v449 = vld [vmem:[#allocation2 + $0x150] sm:$0xff]
        %v450 = vld [vmem:[#allocation2 + $0x158] sm:$0xff]
        %v451 = vld [vmem:[#allocation2 + $0x160] sm:$0xff]
        %v452 = vld [vmem:[#allocation2 + $0x168] sm:$0xff]
        %v453 = vld [vmem:[#allocation2 + $0x170] sm:$0xff]
        %v454 = vld [vmem:[#allocation2 + $0x178] sm:$0xff]
        %v455 = vld [vmem:[#allocation2 + $0x180] sm:$0xff]
        %v456 = vld [vmem:[#allocation2 + $0x188] sm:$0xff]
        %v457 = vld [vmem:[#allocation2 + $0x190] sm:$0xff]
        %v458 = vld [vmem:[#allocation2 + $0x198] sm:$0xff]
        %v459 = vld [vmem:[#allocation2 + $0x1a0] sm:$0xff]
        %v460 = vld [vmem:[#allocation2 + $0x1a8] sm:$0xff]
        %v461 = vld [vmem:[#allocation2 + $0x1b0] sm:$0xff]
        %v462 = vld [vmem:[#allocation2 + $0x1b8] sm:$0xff]
        %v463 = vld [vmem:[#allocation2 + $0x1c0] sm:$0xff]
        %v464 = vld [vmem:[#allocation2 + $0x1c8] sm:$0xff]
        %v465 = vld [vmem:[#allocation2 + $0x1d0] sm:$0xff]
        %v466 = vld [vmem:[#allocation2 + $0x1d8] sm:$0xff]
        %v467 = vld [vmem:[#allocation2 + $0x1e0] sm:$0xff]
        %v468 = vld [vmem:[#allocation2 + $0x1e8] sm:$0xff]
        %v469 = vld [vmem:[#allocation2 + $0x1f0] sm:$0xff]
        %v470 = vld [vmem:[#allocation2 + $0x1f8] sm:$0xff]
        %v471 = vld [vmem:[#allocation2 + $0x200] sm:$0xff]
        %v472 = vld [vmem:[#allocation2 + $0x208] sm:$0xff]
        %v473 = vld [vmem:[#allocation2 + $0x210] sm:$0xff]
        %v474 = vld [vmem:[#allocation2 + $0x218] sm:$0xff]
        %v475 = vld [vmem:[#allocation2 + $0x220] sm:$0xff]
        %v476 = vld [vmem:[#allocation2 + $0x228] sm:$0xff]
        %v477 = vld [vmem:[#allocation2 + $0x230] sm:$0xff]
        %v478 = vld [vmem:[#allocation2 + $0x238] sm:$0xff]
        %v479 = vld [vmem:[#allocation2 + $0x240] sm:$0xff]
        %v480 = vld [vmem:[#allocation2 + $0x248] sm:$0xff]
        %v481 = vld [vmem:[#allocation2 + $0x250] sm:$0xff]
        %v482 = vld [vmem:[#allocation2 + $0x258] sm:$0xff]
        %v483 = vld [vmem:[#allocation2 + $0x260] sm:$0xff]
        %v484 = vld [vmem:[#allocation2 + $0x268] sm:$0xff]
        %v485 = vld [vmem:[#allocation2 + $0x270] sm:$0xff]
        %v486 = vld [vmem:[#allocation2 + $0x278] sm:$0xff]
        %v487 = vld [vmem:[#allocation2 + $0x280] sm:$0xff]
        %v488 = vld [vmem:[#allocation2 + $0x288] sm:$0xff]
        %v489 = vld [vmem:[#allocation2 + $0x290] sm:$0xff]
        %v490 = vld [vmem:[#allocation2 + $0x298] sm:$0xff]
        %v491 = vld [vmem:[#allocation2 + $0x2a0] sm:$0xff]
        %v492 = vld [vmem:[#allocation2 + $0x2a8] sm:$0xff]
        %v493 = vld [vmem:[#allocation2 + $0x2b0] sm:$0xff]
        %v494 = vld [vmem:[#allocation2 + $0x2b8] sm:$0xff]
        %v495 = vld [vmem:[#allocation2 + $0x2c0] sm:$0xff]
        %v496 = vld [vmem:[#allocation2 + $0x2c8] sm:$0xff]
        %v497 = vld [vmem:[#allocation2 + $0x2d0] sm:$0xff]
        %v498 = vld [vmem:[#allocation2 + $0x2d8] sm:$0xff]
        %v499 = vld [vmem:[#allocation2 + $0x2e0] sm:$0xff]
        %v500 = vld [vmem:[#allocation2 + $0x2e8] sm:$0xff]
        %v501 = vld [vmem:[#allocation2 + $0x2f0] sm:$0xff]
        %v502 = vld [vmem:[#allocation2 + $0x2f8] sm:$0xff]
        %v503 = vld [vmem:[#allocation2 + $0x300] sm:$0xff]
        %v504 = vld [vmem:[#allocation2 + $0x308] sm:$0xff]
        %v505 = vld [vmem:[#allocation2 + $0x310] sm:$0xff]
        %v506 = vld [vmem:[#allocation2 + $0x318] sm:$0xff]
        %v507 = vld [vmem:[#allocation2 + $0x320] sm:$0xff]
        %v508 = vld [vmem:[#allocation2 + $0x328] sm:$0xff]
        %v509 = vld [vmem:[#allocation2 + $0x330] sm:$0xff]
        %v510 = vld [vmem:[#allocation2 + $0x338] sm:$0xff]
        %v511 = vld [vmem:[#allocation2 + $0x340] sm:$0xff]
        %v512 = vld [vmem:[#allocation2 + $0x348] sm:$0xff]
        %v513 = vld [vmem:[#allocation2 + $0x350] sm:$0xff]
        %v514 = vld [vmem:[#allocation2 + $0x358] sm:$0xff]
        %v515 = vld [vmem:[#allocation2 + $0x360] sm:$0xff]
        %v516 = vld [vmem:[#allocation2 + $0x368] sm:$0xff]
        %v517 = vld [vmem:[#allocation2 + $0x370] sm:$0xff]
        %v518 = vld [vmem:[#allocation2 + $0x378] sm:$0xff]
        %v519 = vld [vmem:[#allocation2 + $0x380] sm:$0xff]
        %v520 = vld [vmem:[#allocation2 + $0x388] sm:$0xff]
        %v521 = vld [vmem:[#allocation2 + $0x390] sm:$0xff]
        %v522 = vld [vmem:[#allocation2 + $0x398] sm:$0xff]
        %v523 = vld [vmem:[#allocation2 + $0x3a0] sm:$0xff]
        %v524 = vld [vmem:[#allocation2 + $0x3a8] sm:$0xff]
        %v525 = vld [vmem:[#allocation2 + $0x3b0] sm:$0xff]
        %v526 = vld [vmem:[#allocation2 + $0x3b8] sm:$0xff]
        %v527 = vld [vmem:[#allocation2 + $0x3c0] sm:$0xff]
        %v528 = vld [vmem:[#allocation2 + $0x3c8] sm:$0xff]
        %v529 = vld [vmem:[#allocation2 + $0x3d0] sm:$0xff]
        %v530 = vld [vmem:[#allocation2 + $0x3d8] sm:$0xff]
        %v531 = vld [vmem:[#allocation2 + $0x3e0] sm:$0xff]
        %v532 = vld [vmem:[#allocation2 + $0x3e8] sm:$0xff]
        %v533 = vld [vmem:[#allocation2 + $0x3f0] sm:$0xff]
        %v534 = vld [vmem:[#allocation2 + $0x3f8] sm:$0xff]
        %v663 = vunpack.c.l.b16 %v407
        %v664 = vunpack.c.h.b16 %v407
        %v665 = vunpack.c.l.b16 %v408
        %v666 = vunpack.c.h.b16 %v408
        %v667 = vunpack.c.l.b16 %v409
        %v668 = vunpack.c.h.b16 %v409
        %v669 = vunpack.c.l.b16 %v410
        %v670 = vunpack.c.h.b16 %v410
        %v671 = vunpack.c.l.b16 %v411
        %v672 = vunpack.c.h.b16 %v411
        %v673 = vunpack.c.l.b16 %v412
        %v674 = vunpack.c.h.b16 %v412
        %v675 = vunpack.c.l.b16 %v413
        %v676 = vunpack.c.h.b16 %v413
        %v677 = vunpack.c.l.b16 %v414
        %v678 = vunpack.c.h.b16 %v414
        %v679 = vunpack.c.l.b16 %v415
        %v680 = vunpack.c.h.b16 %v415
        %v681 = vunpack.c.l.b16 %v416
        %v682 = vunpack.c.h.b16 %v416
        %v683 = vunpack.c.l.b16 %v417
        %v684 = vunpack.c.h.b16 %v417
        %v685 = vunpack.c.l.b16 %v418
        %v686 = vunpack.c.h.b16 %v418
        %v687 = vunpack.c.l.b16 %v419
        %v688 = vunpack.c.h.b16 %v419
        %v689 = vunpack.c.l.b16 %v420
        %v690 = vunpack.c.h.b16 %v420
        %v691 = vunpack.c.l.b16 %v421
        %v692 = vunpack.c.h.b16 %v421
        %v693 = vunpack.c.l.b16 %v422
        %v694 = vunpack.c.h.b16 %v422
        %v695 = vunpack.c.l.b16 %v423
        %v696 = vunpack.c.h.b16 %v423
        %v697 = vunpack.c.l.b16 %v424
        %v698 = vunpack.c.h.b16 %v424
        %v699 = vunpack.c.l.b16 %v425
        %v700 = vunpack.c.h.b16 %v425
        %v701 = vunpack.c.l.b16 %v426
        %v702 = vunpack.c.h.b16 %v426
        %v703 = vunpack.c.l.b16 %v427
        %v704 = vunpack.c.h.b16 %v427
        %v705 = vunpack.c.l.b16 %v428
        %v706 = vunpack.c.h.b16 %v428
        %v707 = vunpack.c.l.b16 %v429
        %v708 = vunpack.c.h.b16 %v429
        %v709 = vunpack.c.l.b16 %v430
        %v710 = vunpack.c.h.b16 %v430
        %v711 = vunpack.c.l.b16 %v431
        %v712 = vunpack.c.h.b16 %v431
        %v713 = vunpack.c.l.b16 %v432
        %v714 = vunpack.c.h.b16 %v432
        %v715 = vunpack.c.l.b16 %v433
        %v716 = vunpack.c.h.b16 %v433
        %v717 = vunpack.c.l.b16 %v434
        %v718 = vunpack.c.h.b16 %v434
        %v719 = vunpack.c.l.b16 %v435
        %v720 = vunpack.c.h.b16 %v435
        %v721 = vunpack.c.l.b16 %v436
        %v722 = vunpack.c.h.b16 %v436
        %v723 = vunpack.c.l.b16 %v437
        %v724 = vunpack.c.h.b16 %v437
        %v725 = vunpack.c.l.b16 %v438
        %v726 = vunpack.c.h.b16 %v438
        %v727 = vunpack.c.l.b16 %v439
        %v728 = vunpack.c.h.b16 %v439
        %v729 = vunpack.c.l.b16 %v440
        %v730 = vunpack.c.h.b16 %v440
        %v731 = vunpack.c.l.b16 %v441
        %v732 = vunpack.c.h.b16 %v441
        %v733 = vunpack.c.l.b16 %v442
        %v734 = vunpack.c.h.b16 %v442
        %v735 = vunpack.c.l.b16 %v443
        %v736 = vunpack.c.h.b16 %v443
        %v737 = vunpack.c.l.b16 %v444
        %v738 = vunpack.c.h.b16 %v444
        %v739 = vunpack.c.l.b16 %v445
        %v740 = vunpack.c.h.b16 %v445
        %v741 = vunpack.c.l.b16 %v446
        %v742 = vunpack.c.h.b16 %v446
        %v743 = vunpack.c.l.b16 %v447
        %v744 = vunpack.c.h.b16 %v447
        %v745 = vunpack.c.l.b16 %v448
        %v746 = vunpack.c.h.b16 %v448
        %v747 = vunpack.c.l.b16 %v449
        %v748 = vunpack.c.h.b16 %v449
        %v749 = vunpack.c.l.b16 %v450
        %v750 = vunpack.c.h.b16 %v450
        %v751 = vunpack.c.l.b16 %v451
        %v752 = vunpack.c.h.b16 %v451
        %v753 = vunpack.c.l.b16 %v452
        %v754 = vunpack.c.h.b16 %v452
        %v755 = vunpack.c.l.b16 %v453
        %v756 = vunpack.c.h.b16 %v453
        %v757 = vunpack.c.l.b16 %v454
        %v758 = vunpack.c.h.b16 %v454
        %v759 = vunpack.c.l.b16 %v455
        %v760 = vunpack.c.h.b16 %v455
        %v761 = vunpack.c.l.b16 %v456
        %v762 = vunpack.c.h.b16 %v456
        %v763 = vunpack.c.l.b16 %v457
        %v764 = vunpack.c.h.b16 %v457
        %v765 = vunpack.c.l.b16 %v458
        %v766 = vunpack.c.h.b16 %v458
        %v767 = vunpack.c.l.b16 %v459
        %v768 = vunpack.c.h.b16 %v459
        %v769 = vunpack.c.l.b16 %v460
        %v770 = vunpack.c.h.b16 %v460
        %v771 = vunpack.c.l.b16 %v461
        %v772 = vunpack.c.h.b16 %v461
        %v773 = vunpack.c.l.b16 %v462
        %v774 = vunpack.c.h.b16 %v462
        %v775 = vunpack.c.l.b16 %v463
        %v776 = vunpack.c.h.b16 %v463
        %v777 = vunpack.c.l.b16 %v464
        %v778 = vunpack.c.h.b16 %v464
        %v779 = vunpack.c.l.b16 %v465
        %v780 = vunpack.c.h.b16 %v465
        %v781 = vunpack.c.l.b16 %v466
        %v782 = vunpack.c.h.b16 %v466
        %v783 = vunpack.c.l.b16 %v467
        %v784 = vunpack.c.h.b16 %v467
        %v785 = vunpack.c.l.b16 %v468
        %v786 = vunpack.c.h.b16 %v468
        %v787 = vunpack.c.l.b16 %v469
        %v788 = vunpack.c.h.b16 %v469
        %v789 = vunpack.c.l.b16 %v470
        %v790 = vunpack.c.h.b16 %v470
        %v791 = vunpack.c.l.b16 %v471
        %v792 = vunpack.c.h.b16 %v471
        %v793 = vunpack.c.l.b16 %v472
        %v794 = vunpack.c.h.b16 %v472
        %v795 = vunpack.c.l.b16 %v473
        %v796 = vunpack.c.h.b16 %v473
        %v797 = vunpack.c.l.b16 %v474
        %v798 = vunpack.c.h.b16 %v474
        %v799 = vunpack.c.l.b16 %v475
        %v800 = vunpack.c.h.b16 %v475
        %v801 = vunpack.c.l.b16 %v476
        %v802 = vunpack.c.h.b16 %v476
        %v803 = vunpack.c.l.b16 %v477
        %v804 = vunpack.c.h.b16 %v477
        %v805 = vunpack.c.l.b16 %v478
        %v806 = vunpack.c.h.b16 %v478
        %v807 = vunpack.c.l.b16 %v479
        %v808 = vunpack.c.h.b16 %v479
        %v809 = vunpack.c.l.b16 %v480
        %v810 = vunpack.c.h.b16 %v480
        %v811 = vunpack.c.l.b16 %v481
        %v812 = vunpack.c.h.b16 %v481
        %v813 = vunpack.c.l.b16 %v482
        %v814 = vunpack.c.h.b16 %v482
        %v815 = vunpack.c.l.b16 %v483
        %v816 = vunpack.c.h.b16 %v483
        %v817 = vunpack.c.l.b16 %v484
        %v818 = vunpack.c.h.b16 %v484
        %v819 = vunpack.c.l.b16 %v485
        %v820 = vunpack.c.h.b16 %v485
        %v821 = vunpack.c.l.b16 %v486
        %v822 = vunpack.c.h.b16 %v486
        %v823 = vunpack.c.l.b16 %v487
        %v824 = vunpack.c.h.b16 %v487
        %v825 = vunpack.c.l.b16 %v488
        %v826 = vunpack.c.h.b16 %v488
        %v827 = vunpack.c.l.b16 %v489
        %v828 = vunpack.c.h.b16 %v489
        %v829 = vunpack.c.l.b16 %v490
        %v830 = vunpack.c.h.b16 %v490
        %v831 = vunpack.c.l.b16 %v491
        %v832 = vunpack.c.h.b16 %v491
        %v833 = vunpack.c.l.b16 %v492
        %v834 = vunpack.c.h.b16 %v492
        %v835 = vunpack.c.l.b16 %v493
        %v836 = vunpack.c.h.b16 %v493
        %v837 = vunpack.c.l.b16 %v494
        %v838 = vunpack.c.h.b16 %v494
        %v839 = vunpack.c.l.b16 %v495
        %v840 = vunpack.c.h.b16 %v495
        %v841 = vunpack.c.l.b16 %v496
        %v842 = vunpack.c.h.b16 %v496
        %v843 = vunpack.c.l.b16 %v497
        %v844 = vunpack.c.h.b16 %v497
        %v845 = vunpack.c.l.b16 %v498
        %v846 = vunpack.c.h.b16 %v498
        %v847 = vunpack.c.l.b16 %v499
        %v848 = vunpack.c.h.b16 %v499
        %v849 = vunpack.c.l.b16 %v500
        %v850 = vunpack.c.h.b16 %v500
        %v851 = vunpack.c.l.b16 %v501
        %v852 = vunpack.c.h.b16 %v501
        %v853 = vunpack.c.l.b16 %v502
        %v854 = vunpack.c.h.b16 %v502
        %v855 = vunpack.c.l.b16 %v503
        %v856 = vunpack.c.h.b16 %v503
        %v857 = vunpack.c.l.b16 %v504
        %v858 = vunpack.c.h.b16 %v504
        %v859 = vunpack.c.l.b16 %v505
        %v860 = vunpack.c.h.b16 %v505
        %v861 = vunpack.c.l.b16 %v506
        %v862 = vunpack.c.h.b16 %v506
        %v863 = vunpack.c.l.b16 %v507
        %v864 = vunpack.c.h.b16 %v507
        %v865 = vunpack.c.l.b16 %v508
        %v866 = vunpack.c.h.b16 %v508
        %v867 = vunpack.c.l.b16 %v509
        %v868 = vunpack.c.h.b16 %v509
        %v869 = vunpack.c.l.b16 %v510
        %v870 = vunpack.c.h.b16 %v510
        %v871 = vunpack.c.l.b16 %v511
        %v872 = vunpack.c.h.b16 %v511
        %v873 = vunpack.c.l.b16 %v512
        %v874 = vunpack.c.h.b16 %v512
        %v875 = vunpack.c.l.b16 %v513
        %v876 = vunpack.c.h.b16 %v513
        %v877 = vunpack.c.l.b16 %v514
        %v878 = vunpack.c.h.b16 %v514
        %v879 = vunpack.c.l.b16 %v515
        %v880 = vunpack.c.h.b16 %v515
        %v881 = vunpack.c.l.b16 %v516
        %v882 = vunpack.c.h.b16 %v516
        %v883 = vunpack.c.l.b16 %v517
        %v884 = vunpack.c.h.b16 %v517
        %v885 = vunpack.c.l.b16 %v518
        %v886 = vunpack.c.h.b16 %v518
        %v887 = vunpack.c.l.b16 %v519
        %v888 = vunpack.c.h.b16 %v519
        %v889 = vunpack.c.l.b16 %v520
        %v890 = vunpack.c.h.b16 %v520
        %v891 = vunpack.c.l.b16 %v521
        %v892 = vunpack.c.h.b16 %v521
        %v893 = vunpack.c.l.b16 %v522
        %v894 = vunpack.c.h.b16 %v522
        %v895 = vunpack.c.l.b16 %v523
        %v896 = vunpack.c.h.b16 %v523
        %v897 = vunpack.c.l.b16 %v524
        %v898 = vunpack.c.h.b16 %v524
        %v899 = vunpack.c.l.b16 %v525
        %v900 = vunpack.c.h.b16 %v525
        %v901 = vunpack.c.l.b16 %v526
        %v902 = vunpack.c.h.b16 %v526
        %v903 = vunpack.c.l.b16 %v527
        %v904 = vunpack.c.h.b16 %v527
        %v905 = vunpack.c.l.b16 %v528
        %v906 = vunpack.c.h.b16 %v528
        %v907 = vunpack.c.l.b16 %v529
        %v908 = vunpack.c.h.b16 %v529
        %v909 = vunpack.c.l.b16 %v530
        %v910 = vunpack.c.h.b16 %v530
        %v911 = vunpack.c.l.b16 %v531
        %v912 = vunpack.c.h.b16 %v531
        %v913 = vunpack.c.l.b16 %v532
        %v914 = vunpack.c.h.b16 %v532
        %v915 = vunpack.c.l.b16 %v533
        %v916 = vunpack.c.h.b16 %v533
        %v917 = vunpack.c.l.b16 %v534
        %v918 = vunpack.c.h.b16 %v534
        %v919 = vpack.c.b16 %v671, %v663
        %v920 = vpack.c.b16 %v672, %v664
        %v921 = vpack.c.b16 %v673, %v665
        %v922 = vpack.c.b16 %v674, %v666
        %v923 = vpack.c.b16 %v675, %v667
        %v924 = vpack.c.b16 %v676, %v668
        %v925 = vpack.c.b16 %v677, %v669
        %v926 = vpack.c.b16 %v678, %v670
        %v927 = vpack.c.b16 %v687, %v679
        %v928 = vpack.c.b16 %v688, %v680
        %v929 = vpack.c.b16 %v689, %v681
        %v930 = vpack.c.b16 %v690, %v682
        %v931 = vpack.c.b16 %v691, %v683
        %v932 = vpack.c.b16 %v692, %v684
        %v933 = vpack.c.b16 %v693, %v685
        %v934 = vpack.c.b16 %v694, %v686
        %v935 = vpack.c.b16 %v703, %v695
        %v936 = vpack.c.b16 %v704, %v696
        %v937 = vpack.c.b16 %v705, %v697
        %v938 = vpack.c.b16 %v706, %v698
        %v939 = vpack.c.b16 %v707, %v699
        %v940 = vpack.c.b16 %v708, %v700
        %v941 = vpack.c.b16 %v709, %v701
        %v942 = vpack.c.b16 %v710, %v702
        %v943 = vpack.c.b16 %v719, %v711
        %v944 = vpack.c.b16 %v720, %v712
        %v945 = vpack.c.b16 %v721, %v713
        %v946 = vpack.c.b16 %v722, %v714
        %v947 = vpack.c.b16 %v723, %v715
        %v948 = vpack.c.b16 %v724, %v716
        %v949 = vpack.c.b16 %v725, %v717
        %v950 = vpack.c.b16 %v726, %v718
        %v951 = vpack.c.b16 %v735, %v727
        %v952 = vpack.c.b16 %v736, %v728
        %v953 = vpack.c.b16 %v737, %v729
        %v954 = vpack.c.b16 %v738, %v730
        %v955 = vpack.c.b16 %v739, %v731
        %v956 = vpack.c.b16 %v740, %v732
        %v957 = vpack.c.b16 %v741, %v733
        %v958 = vpack.c.b16 %v742, %v734
        %v959 = vpack.c.b16 %v751, %v743
        %v960 = vpack.c.b16 %v752, %v744
        %v961 = vpack.c.b16 %v753, %v745
        %v962 = vpack.c.b16 %v754, %v746
        %v963 = vpack.c.b16 %v755, %v747
        %v964 = vpack.c.b16 %v756, %v748
        %v965 = vpack.c.b16 %v757, %v749
        %v966 = vpack.c.b16 %v758, %v750
        %v967 = vpack.c.b16 %v767, %v759
        %v968 = vpack.c.b16 %v768, %v760
        %v969 = vpack.c.b16 %v769, %v761
        %v970 = vpack.c.b16 %v770, %v762
        %v971 = vpack.c.b16 %v771, %v763
        %v972 = vpack.c.b16 %v772, %v764
        %v973 = vpack.c.b16 %v773, %v765
        %v974 = vpack.c.b16 %v774, %v766
        %v975 = vpack.c.b16 %v783, %v775
        %v976 = vpack.c.b16 %v784, %v776
        %v977 = vpack.c.b16 %v785, %v777
        %v978 = vpack.c.b16 %v786, %v778
        %v979 = vpack.c.b16 %v787, %v779
        %v980 = vpack.c.b16 %v788, %v780
        %v981 = vpack.c.b16 %v789, %v781
        %v982 = vpack.c.b16 %v790, %v782
        %v983 = vpack.c.b16 %v799, %v791
        %v984 = vpack.c.b16 %v800, %v792
        %v985 = vpack.c.b16 %v801, %v793
        %v986 = vpack.c.b16 %v802, %v794
        %v987 = vpack.c.b16 %v803, %v795
        %v988 = vpack.c.b16 %v804, %v796
        %v989 = vpack.c.b16 %v805, %v797
        %v990 = vpack.c.b16 %v806, %v798
        %v991 = vpack.c.b16 %v815, %v807
        %v992 = vpack.c.b16 %v816, %v808
        %v993 = vpack.c.b16 %v817, %v809
        %v994 = vpack.c.b16 %v818, %v810
        %v995 = vpack.c.b16 %v819, %v811
        %v996 = vpack.c.b16 %v820, %v812
        %v997 = vpack.c.b16 %v821, %v813
        %v998 = vpack.c.b16 %v822, %v814
        %v999 = vpack.c.b16 %v831, %v823
        %v1000 = vpack.c.b16 %v832, %v824
        %v1001 = vpack.c.b16 %v833, %v825
        %v1002 = vpack.c.b16 %v834, %v826
        %v1003 = vpack.c.b16 %v835, %v827
        %v1004 = vpack.c.b16 %v836, %v828
        %v1005 = vpack.c.b16 %v837, %v829
        %v1006 = vpack.c.b16 %v838, %v830
        %v1007 = vpack.c.b16 %v847, %v839
        %v1008 = vpack.c.b16 %v848, %v840
        %v1009 = vpack.c.b16 %v849, %v841
        %v1010 = vpack.c.b16 %v850, %v842
        %v1011 = vpack.c.b16 %v851, %v843
        %v1012 = vpack.c.b16 %v852, %v844
        %v1013 = vpack.c.b16 %v853, %v845
        %v1014 = vpack.c.b16 %v854, %v846
        %v1015 = vpack.c.b16 %v863, %v855
        %v1016 = vpack.c.b16 %v864, %v856
        %v1017 = vpack.c.b16 %v865, %v857
        %v1018 = vpack.c.b16 %v866, %v858
        %v1019 = vpack.c.b16 %v867, %v859
        %v1020 = vpack.c.b16 %v868, %v860
        %v1021 = vpack.c.b16 %v869, %v861
        %v1022 = vpack.c.b16 %v870, %v862
        %v1023 = vpack.c.b16 %v879, %v871
        %v1024 = vpack.c.b16 %v880, %v872
        %v1025 = vpack.c.b16 %v881, %v873
        %v1026 = vpack.c.b16 %v882, %v874
        %v1027 = vpack.c.b16 %v883, %v875
        %v1028 = vpack.c.b16 %v884, %v876
        %v1029 = vpack.c.b16 %v885, %v877
        %v1030 = vpack.c.b16 %v886, %v878
        %v1031 = vpack.c.b16 %v895, %v887
        %v1032 = vpack.c.b16 %v896, %v888
        %v1033 = vpack.c.b16 %v897, %v889
        %v1034 = vpack.c.b16 %v898, %v890
        %v1035 = vpack.c.b16 %v899, %v891
        %v1036 = vpack.c.b16 %v900, %v892
        %v1037 = vpack.c.b16 %v901, %v893
        %v1038 = vpack.c.b16 %v902, %v894
        %v1039 = vpack.c.b16 %v911, %v903
        %v1040 = vpack.c.b16 %v912, %v904
        %v1041 = vpack.c.b16 %v913, %v905
        %v1042 = vpack.c.b16 %v914, %v906
        %v1043 = vpack.c.b16 %v915, %v907
        %v1044 = vpack.c.b16 %v916, %v908
        %v1045 = vpack.c.b16 %v917, %v909
        %v1046 = vpack.c.b16 %v918, %v910
        %1175 = vmatprep.subr.bf16.mxu0 %v920
        %1176 = vmatpush1.bf16.msra.mxu0 %v919
        %1177 = vmatprep.subr.bf16.mxu0 %v928
        %1178 = vmatpush1.bf16.msra.mxu0 %v927
        %1179 = vmatprep.subr.bf16.mxu0 %v936
        %1180 = vmatpush1.bf16.msra.mxu0 %v935
        %1181 = vmatprep.subr.bf16.mxu0 %v944
        %1182 = vmatpush1.bf16.msra.mxu0 %v943
        %1183 = vmatprep.subr.bf16.mxu0 %v952
        %1184 = vmatpush1.bf16.msra.mxu0 %v951
        %1185 = vmatprep.subr.bf16.mxu0 %v960
        %1186 = vmatpush1.bf16.msra.mxu0 %v959
        %1187 = vmatprep.subr.bf16.mxu0 %v968
        %1188 = vmatpush1.bf16.msra.mxu0 %v967
        %1189 = vmatprep.subr.bf16.mxu0 %v976
        %1190 = vmatpush1.bf16.msra.mxu0 %v975
        %1191 = vmatprep.subr.bf16.mxu0 %v984
        %1192 = vmatpush1.bf16.msra.mxu0 %v983
        %1193 = vmatprep.subr.bf16.mxu0 %v992
        %1194 = vmatpush1.bf16.msra.mxu0 %v991
        %1195 = vmatprep.subr.bf16.mxu0 %v1000
        %1196 = vmatpush1.bf16.msra.mxu0 %v999
        %1197 = vmatprep.subr.bf16.mxu0 %v1008
        %1198 = vmatpush1.bf16.msra.mxu0 %v1007
        %1199 = vmatprep.subr.bf16.mxu0 %v1016
        %1200 = vmatpush1.bf16.msra.mxu0 %v1015
        %1201 = vmatprep.subr.bf16.mxu0 %v1024
        %1202 = vmatpush1.bf16.msra.mxu0 %v1023
        %1203 = vmatprep.subr.bf16.mxu0 %v1032
        %1204 = vmatpush1.bf16.msra.mxu0 %v1031
        %1205 = vmatprep.subr.bf16.mxu0 %v1040
        %1206 = vmatpush1.bf16.msra.mxu0 %v1039
        %1207 = vmatprep.mubr.bf16.mxu0 %v406
        %1208 = vmatmul.mubr.bf16.gmra.mrb[0].mxu0 %v405
        %v1209 = vpop.f32.mrb[0].mxu0
        %v1210 = vadd.f32 0.0, %v1209
        %v1211 = vpop.f32.mrb[0].mxu0
        %v1212 = vadd.f32 0.0, %v1211
        %v1213 = vpop.f32.mrb[0].mxu0
        %v1214 = vpop.f32.mrb[0].mxu0
        %1215 = vdwg.mxu0
        %1216 = vmatprep.subr.bf16.mxu0 %v922
        %1217 = vmatpush1.bf16.msra.mxu0 %v921
        %1218 = vmatprep.subr.bf16.mxu0 %v930
        %1219 = vmatpush1.bf16.msra.mxu0 %v929
        %1220 = vmatprep.subr.bf16.mxu0 %v938
        %1221 = vmatpush1.bf16.msra.mxu0 %v937
        %1222 = vmatprep.subr.bf16.mxu0 %v946
        %1223 = vmatpush1.bf16.msra.mxu0 %v945
        %1224 = vmatprep.subr.bf16.mxu0 %v954
        %1225 = vmatpush1.bf16.msra.mxu0 %v953
        %1226 = vmatprep.subr.bf16.mxu0 %v962
        %1227 = vmatpush1.bf16.msra.mxu0 %v961
        %1228 = vmatprep.subr.bf16.mxu0 %v970
        %1229 = vmatpush1.bf16.msra.mxu0 %v969
        %1230 = vmatprep.subr.bf16.mxu0 %v978
        %1231 = vmatpush1.bf16.msra.mxu0 %v977
        %1232 = vmatprep.subr.bf16.mxu0 %v986
        %1233 = vmatpush1.bf16.msra.mxu0 %v985
        %1234 = vmatprep.subr.bf16.mxu0 %v994
        %1235 = vmatpush1.bf16.msra.mxu0 %v993
        %1236 = vmatprep.subr.bf16.mxu0 %v1002
        %1237 = vmatpush1.bf16.msra.mxu0 %v1001
        %1238 = vmatprep.subr.bf16.mxu0 %v1010
        %1239 = vmatpush1.bf16.msra.mxu0 %v1009
        %1240 = vmatprep.subr.bf16.mxu0 %v1018
        %1241 = vmatpush1.bf16.msra.mxu0 %v1017
        %1242 = vmatprep.subr.bf16.mxu0 %v1026
        %1243 = vmatpush1.bf16.msra.mxu0 %v1025
        %1244 = vmatprep.subr.bf16.mxu0 %v1034
        %1245 = vmatpush1.bf16.msra.mxu0 %v1033
        %1246 = vmatprep.subr.bf16.mxu0 %v1042
        %1247 = vmatpush1.bf16.msra.mxu0 %v1041
        %1248 = vmatprep.mubr.bf16.mxu0 %v406
        %1249 = vmatmul.mubr.bf16.gmra.mrb[0].mxu0 %v405
        %v1250 = vpop.f32.mrb[0].mxu0
        %v1251 = vadd.f32 0.0, %v1250
        %v1252 = vpop.f32.mrb[0].mxu0
        %v1253 = vadd.f32 0.0, %v1252
        %v1254 = vpop.f32.mrb[0].mxu0
        %v1255 = vpop.f32.mrb[0].mxu0
        %1256 = vdwg.mxu0
        %1257 = vmatprep.subr.bf16.mxu0 %v924
        %1258 = vmatpush1.bf16.msra.mxu0 %v923
        %1259 = vmatprep.subr.bf16.mxu0 %v932
        %1260 = vmatpush1.bf16.msra.mxu0 %v931
        %1261 = vmatprep.subr.bf16.mxu0 %v940
        %1262 = vmatpush1.bf16.msra.mxu0 %v939
        %1263 = vmatprep.subr.bf16.mxu0 %v948
        %1264 = vmatpush1.bf16.msra.mxu0 %v947
        %1265 = vmatprep.subr.bf16.mxu0 %v956
        %1266 = vmatpush1.bf16.msra.mxu0 %v955
        %1267 = vmatprep.subr.bf16.mxu0 %v964
        %1268 = vmatpush1.bf16.msra.mxu0 %v963
        %1269 = vmatprep.subr.bf16.mxu0 %v972
        %1270 = vmatpush1.bf16.msra.mxu0 %v971
        %1271 = vmatprep.subr.bf16.mxu0 %v980
        %1272 = vmatpush1.bf16.msra.mxu0 %v979
        %1273 = vmatprep.subr.bf16.mxu0 %v988
        %1274 = vmatpush1.bf16.msra.mxu0 %v987
        %1275 = vmatprep.subr.bf16.mxu0 %v996
        %1276 = vmatpush1.bf16.msra.mxu0 %v995
        %1277 = vmatprep.subr.bf16.mxu0 %v1004
        %1278 = vmatpush1.bf16.msra.mxu0 %v1003
        %1279 = vmatprep.subr.bf16.mxu0 %v1012
        %1280 = vmatpush1.bf16.msra.mxu0 %v1011
        %1281 = vmatprep.subr.bf16.mxu0 %v1020
        %1282 = vmatpush1.bf16.msra.mxu0 %v1019
        %1283 = vmatprep.subr.bf16.mxu0 %v1028
        %1284 = vmatpush1.bf16.msra.mxu0 %v1027
        %1285 = vmatprep.subr.bf16.mxu0 %v1036
        %1286 = vmatpush1.bf16.msra.mxu0 %v1035
        %1287 = vmatprep.subr.bf16.mxu0 %v1044
        %1288 = vmatpush1.bf16.msra.mxu0 %v1043
        %1289 = vmatprep.mubr.bf16.mxu0 %v406
        %1290 = vmatmul.mubr.bf16.gmra.mrb[0].mxu0 %v405
        %v1291 = vpop.f32.mrb[0].mxu0
        %v1292 = vadd.f32 0.0, %v1291
        %v1293 = vpop.f32.mrb[0].mxu0
        %v1294 = vadd.f32 0.0, %v1293
        %v1295 = vpop.f32.mrb[0].mxu0
        %v1296 = vpop.f32.mrb[0].mxu0
        %1297 = vdwg.mxu0
        %1298 = vmatprep.subr.bf16.mxu0 %v926
        %1299 = vmatpush1.bf16.msra.mxu0 %v925
        %1300 = vmatprep.subr.bf16.mxu0 %v934
        %1301 = vmatpush1.bf16.msra.mxu0 %v933
        %1302 = vmatprep.subr.bf16.mxu0 %v942
        %1303 = vmatpush1.bf16.msra.mxu0 %v941
        %1304 = vmatprep.subr.bf16.mxu0 %v950
        %1305 = vmatpush1.bf16.msra.mxu0 %v949
        %1306 = vmatprep.subr.bf16.mxu0 %v958
        %1307 = vmatpush1.bf16.msra.mxu0 %v957
        %1308 = vmatprep.subr.bf16.mxu0 %v966
        %1309 = vmatpush1.bf16.msra.mxu0 %v965
        %1310 = vmatprep.subr.bf16.mxu0 %v974
        %1311 = vmatpush1.bf16.msra.mxu0 %v973
        %1312 = vmatprep.subr.bf16.mxu0 %v982
        %1313 = vmatpush1.bf16.msra.mxu0 %v981
        %1314 = vmatprep.subr.bf16.mxu0 %v990
        %1315 = vmatpush1.bf16.msra.mxu0 %v989
        %1316 = vmatprep.subr.bf16.mxu0 %v998
        %1317 = vmatpush1.bf16.msra.mxu0 %v997
        %1318 = vmatprep.subr.bf16.mxu0 %v1006
        %1319 = vmatpush1.bf16.msra.mxu0 %v1005
        %1320 = vmatprep.subr.bf16.mxu0 %v1014
        %1321 = vmatpush1.bf16.msra.mxu0 %v1013
        %1322 = vmatprep.subr.bf16.mxu0 %v1022
        %1323 = vmatpush1.bf16.msra.mxu0 %v1021
        %1324 = vmatprep.subr.bf16.mxu0 %v1030
        %1325 = vmatpush1.bf16.msra.mxu0 %v1029
        %1326 = vmatprep.subr.bf16.mxu0 %v1038
        %1327 = vmatpush1.bf16.msra.mxu0 %v1037
        %1328 = vmatprep.subr.bf16.mxu0 %v1046
        %1329 = vmatpush1.bf16.msra.mxu0 %v1045
        %1330 = vmatprep.mubr.bf16.mxu0 %v406
        %1331 = vmatmul.mubr.bf16.gmra.mrb[0].mxu0 %v405
        %v1332 = vpop.f32.mrb[0].mxu0
        %v1333 = vadd.f32 0.0, %v1332
        %v1334 = vpop.f32.mrb[0].mxu0
        %v1335 = vadd.f32 0.0, %v1334
        %v1336 = vpop.f32.mrb[0].mxu0
        %v1337 = vpop.f32.mrb[0].mxu0
        %1338 = vdwg.mxu0
        %v1339 = vmax.f32 %v1210, 0.0
        %v1340 = vmax.f32 %v1212, 0.0
        %v1341 = vmax.f32 %v1251, 0.0
        %v1342 = vmax.f32 %v1253, 0.0
        %v1343 = vmax.f32 %v1292, 0.0
        %v1344 = vmax.f32 %v1294, 0.0
        %v1345 = vmax.f32 %v1333, 0.0
        %v1346 = vmax.f32 %v1335, 0.0
        %v1347 = vpack.c.bf16 %v1339, %v1339
        %v1348 = vpack.c.bf16 %v1340, %v1340
        %v1349 = vpack.c.bf16 %v1341, %v1341
        %v1350 = vpack.c.bf16 %v1342, %v1342
        %v1351 = vpack.c.bf16 %v1343, %v1343
        %v1352 = vpack.c.bf16 %v1344, %v1344
        %v1353 = vpack.c.bf16 %v1345, %v1345
        %v1354 = vpack.c.bf16 %v1346, %v1346
        %v1355 = vld [vmem:[#allocation4] sm:$0xff]
        %v1356 = vld [vmem:[#allocation4 + $0x8] sm:$0xff]
        %v1357 = vld [vmem:[#allocation4 + $0x10] sm:$0xff]
        %v1358 = vld [vmem:[#allocation4 + $0x18] sm:$0xff]
        %v1359 = vld [vmem:[#allocation4 + $0x20] sm:$0xff]
        %v1360 = vld [vmem:[#allocation4 + $0x28] sm:$0xff]
        %v1361 = vld [vmem:[#allocation4 + $0x30] sm:$0xff]
        %v1362 = vld [vmem:[#allocation4 + $0x38] sm:$0xff]
        %v1363 = vld [vmem:[#allocation4 + $0x40] sm:$0xff]
        %v1364 = vld [vmem:[#allocation4 + $0x48] sm:$0xff]
        %v1365 = vld [vmem:[#allocation4 + $0x50] sm:$0xff]
        %v1366 = vld [vmem:[#allocation4 + $0x58] sm:$0xff]
        %v1367 = vld [vmem:[#allocation4 + $0x60] sm:$0xff]
        %v1368 = vld [vmem:[#allocation4 + $0x68] sm:$0xff]
        %v1369 = vld [vmem:[#allocation4 + $0x70] sm:$0xff]
        %v1370 = vld [vmem:[#allocation4 + $0x78] sm:$0xff]
        %v1371 = vld [vmem:[#allocation4 + $0x80] sm:$0xff]
        %v1372 = vld [vmem:[#allocation4 + $0x88] sm:$0xff]
        %v1373 = vld [vmem:[#allocation4 + $0x90] sm:$0xff]
        %v1374 = vld [vmem:[#allocation4 + $0x98] sm:$0xff]
        %v1375 = vld [vmem:[#allocation4 + $0xa0] sm:$0xff]
        %v1376 = vld [vmem:[#allocation4 + $0xa8] sm:$0xff]
        %v1377 = vld [vmem:[#allocation4 + $0xb0] sm:$0xff]
        %v1378 = vld [vmem:[#allocation4 + $0xb8] sm:$0xff]
        %v1379 = vld [vmem:[#allocation4 + $0xc0] sm:$0xff]
        %v1380 = vld [vmem:[#allocation4 + $0xc8] sm:$0xff]
        %v1381 = vld [vmem:[#allocation4 + $0xd0] sm:$0xff]
        %v1382 = vld [vmem:[#allocation4 + $0xd8] sm:$0xff]
        %v1383 = vld [vmem:[#allocation4 + $0xe0] sm:$0xff]
        %v1384 = vld [vmem:[#allocation4 + $0xe8] sm:$0xff]
        %v1385 = vld [vmem:[#allocation4 + $0xf0] sm:$0xff]
        %v1386 = vld [vmem:[#allocation4 + $0xf8] sm:$0xff]
        %v1387 = vld [vmem:[#allocation4 + $0x100] sm:$0xff]
        %v1388 = vld [vmem:[#allocation4 + $0x108] sm:$0xff]
        %v1389 = vld [vmem:[#allocation4 + $0x110] sm:$0xff]
        %v1390 = vld [vmem:[#allocation4 + $0x118] sm:$0xff]
        %v1391 = vld [vmem:[#allocation4 + $0x120] sm:$0xff]
        %v1392 = vld [vmem:[#allocation4 + $0x128] sm:$0xff]
        %v1393 = vld [vmem:[#allocation4 + $0x130] sm:$0xff]
        %v1394 = vld [vmem:[#allocation4 + $0x138] sm:$0xff]
        %v1395 = vld [vmem:[#allocation4 + $0x140] sm:$0xff]
        %v1396 = vld [vmem:[#allocation4 + $0x148] sm:$0xff]
        %v1397 = vld [vmem:[#allocation4 + $0x150] sm:$0xff]
        %v1398 = vld [vmem:[#allocation4 + $0x158] sm:$0xff]
        %v1399 = vld [vmem:[#allocation4 + $0x160] sm:$0xff]
        %v1400 = vld [vmem:[#allocation4 + $0x168] sm:$0xff]
        %v1401 = vld [vmem:[#allocation4 + $0x170] sm:$0xff]
        %v1402 = vld [vmem:[#allocation4 + $0x178] sm:$0xff]
        %v1403 = vld [vmem:[#allocation4 + $0x180] sm:$0xff]
        %v1404 = vld [vmem:[#allocation4 + $0x188] sm:$0xff]
        %v1405 = vld [vmem:[#allocation4 + $0x190] sm:$0xff]
        %v1406 = vld [vmem:[#allocation4 + $0x198] sm:$0xff]
        %v1407 = vld [vmem:[#allocation4 + $0x1a0] sm:$0xff]
        %v1408 = vld [vmem:[#allocation4 + $0x1a8] sm:$0xff]
        %v1409 = vld [vmem:[#allocation4 + $0x1b0] sm:$0xff]
        %v1410 = vld [vmem:[#allocation4 + $0x1b8] sm:$0xff]
        %v1411 = vld [vmem:[#allocation4 + $0x1c0] sm:$0xff]
        %v1412 = vld [vmem:[#allocation4 + $0x1c8] sm:$0xff]
        %v1413 = vld [vmem:[#allocation4 + $0x1d0] sm:$0xff]
        %v1414 = vld [vmem:[#allocation4 + $0x1d8] sm:$0xff]
        %v1415 = vld [vmem:[#allocation4 + $0x1e0] sm:$0xff]
        %v1416 = vld [vmem:[#allocation4 + $0x1e8] sm:$0xff]
        %v1417 = vld [vmem:[#allocation4 + $0x1f0] sm:$0xff]
        %v1418 = vld [vmem:[#allocation4 + $0x1f8] sm:$0xff]
        %v1419 = vld [vmem:[#allocation4 + $0x200] sm:$0xff]
        %v1420 = vld [vmem:[#allocation4 + $0x208] sm:$0xff]
        %v1421 = vld [vmem:[#allocation4 + $0x210] sm:$0xff]
        %v1422 = vld [vmem:[#allocation4 + $0x218] sm:$0xff]
        %v1423 = vld [vmem:[#allocation4 + $0x220] sm:$0xff]
        %v1424 = vld [vmem:[#allocation4 + $0x228] sm:$0xff]
        %v1425 = vld [vmem:[#allocation4 + $0x230] sm:$0xff]
        %v1426 = vld [vmem:[#allocation4 + $0x238] sm:$0xff]
        %v1427 = vld [vmem:[#allocation4 + $0x240] sm:$0xff]
        %v1428 = vld [vmem:[#allocation4 + $0x248] sm:$0xff]
        %v1429 = vld [vmem:[#allocation4 + $0x250] sm:$0xff]
        %v1430 = vld [vmem:[#allocation4 + $0x258] sm:$0xff]
        %v1431 = vld [vmem:[#allocation4 + $0x260] sm:$0xff]
        %v1432 = vld [vmem:[#allocation4 + $0x268] sm:$0xff]
        %v1433 = vld [vmem:[#allocation4 + $0x270] sm:$0xff]
        %v1434 = vld [vmem:[#allocation4 + $0x278] sm:$0xff]
        %v1435 = vld [vmem:[#allocation4 + $0x280] sm:$0xff]
        %v1436 = vld [vmem:[#allocation4 + $0x288] sm:$0xff]
        %v1437 = vld [vmem:[#allocation4 + $0x290] sm:$0xff]
        %v1438 = vld [vmem:[#allocation4 + $0x298] sm:$0xff]
        %v1439 = vld [vmem:[#allocation4 + $0x2a0] sm:$0xff]
        %v1440 = vld [vmem:[#allocation4 + $0x2a8] sm:$0xff]
        %v1441 = vld [vmem:[#allocation4 + $0x2b0] sm:$0xff]
        %v1442 = vld [vmem:[#allocation4 + $0x2b8] sm:$0xff]
        %v1443 = vld [vmem:[#allocation4 + $0x2c0] sm:$0xff]
        %v1444 = vld [vmem:[#allocation4 + $0x2c8] sm:$0xff]
        %v1445 = vld [vmem:[#allocation4 + $0x2d0] sm:$0xff]
        %v1446 = vld [vmem:[#allocation4 + $0x2d8] sm:$0xff]
        %v1447 = vld [vmem:[#allocation4 + $0x2e0] sm:$0xff]
        %v1448 = vld [vmem:[#allocation4 + $0x2e8] sm:$0xff]
        %v1449 = vld [vmem:[#allocation4 + $0x2f0] sm:$0xff]
        %v1450 = vld [vmem:[#allocation4 + $0x2f8] sm:$0xff]
        %v1451 = vld [vmem:[#allocation4 + $0x300] sm:$0xff]
        %v1452 = vld [vmem:[#allocation4 + $0x308] sm:$0xff]
        %v1453 = vld [vmem:[#allocation4 + $0x310] sm:$0xff]
        %v1454 = vld [vmem:[#allocation4 + $0x318] sm:$0xff]
        %v1455 = vld [vmem:[#allocation4 + $0x320] sm:$0xff]
        %v1456 = vld [vmem:[#allocation4 + $0x328] sm:$0xff]
        %v1457 = vld [vmem:[#allocation4 + $0x330] sm:$0xff]
        %v1458 = vld [vmem:[#allocation4 + $0x338] sm:$0xff]
        %v1459 = vld [vmem:[#allocation4 + $0x340] sm:$0xff]
        %v1460 = vld [vmem:[#allocation4 + $0x348] sm:$0xff]
        %v1461 = vld [vmem:[#allocation4 + $0x350] sm:$0xff]
        %v1462 = vld [vmem:[#allocation4 + $0x358] sm:$0xff]
        %v1463 = vld [vmem:[#allocation4 + $0x360] sm:$0xff]
        %v1464 = vld [vmem:[#allocation4 + $0x368] sm:$0xff]
        %v1465 = vld [vmem:[#allocation4 + $0x370] sm:$0xff]
        %v1466 = vld [vmem:[#allocation4 + $0x378] sm:$0xff]
        %v1467 = vld [vmem:[#allocation4 + $0x380] sm:$0xff]
        %v1468 = vld [vmem:[#allocation4 + $0x388] sm:$0xff]
        %v1469 = vld [vmem:[#allocation4 + $0x390] sm:$0xff]
        %v1470 = vld [vmem:[#allocation4 + $0x398] sm:$0xff]
        %v1471 = vld [vmem:[#allocation4 + $0x3a0] sm:$0xff]
        %v1472 = vld [vmem:[#allocation4 + $0x3a8] sm:$0xff]
        %v1473 = vld [vmem:[#allocation4 + $0x3b0] sm:$0xff]
        %v1474 = vld [vmem:[#allocation4 + $0x3b8] sm:$0xff]
        %v1475 = vld [vmem:[#allocation4 + $0x3c0] sm:$0xff]
        %v1476 = vld [vmem:[#allocation4 + $0x3c8] sm:$0xff]
        %v1477 = vld [vmem:[#allocation4 + $0x3d0] sm:$0xff]
        %v1478 = vld [vmem:[#allocation4 + $0x3d8] sm:$0xff]
        %v1479 = vld [vmem:[#allocation4 + $0x3e0] sm:$0xff]
        %v1480 = vld [vmem:[#allocation4 + $0x3e8] sm:$0xff]
        %v1481 = vld [vmem:[#allocation4 + $0x3f0] sm:$0xff]
        %v1482 = vld [vmem:[#allocation4 + $0x3f8] sm:$0xff]
        %v1483 = vld [vmem:[#allocation4 + $0x400] sm:$0xff]
        %v1484 = vld [vmem:[#allocation4 + $0x408] sm:$0xff]
        %v1485 = vld [vmem:[#allocation4 + $0x410] sm:$0xff]
        %v1486 = vld [vmem:[#allocation4 + $0x418] sm:$0xff]
        %v1487 = vld [vmem:[#allocation4 + $0x420] sm:$0xff]
        %v1488 = vld [vmem:[#allocation4 + $0x428] sm:$0xff]
        %v1489 = vld [vmem:[#allocation4 + $0x430] sm:$0xff]
        %v1490 = vld [vmem:[#allocation4 + $0x438] sm:$0xff]
        %v1491 = vld [vmem:[#allocation4 + $0x440] sm:$0xff]
        %v1492 = vld [vmem:[#allocation4 + $0x448] sm:$0xff]
        %v1493 = vld [vmem:[#allocation4 + $0x450] sm:$0xff]
        %v1494 = vld [vmem:[#allocation4 + $0x458] sm:$0xff]
        %v1495 = vld [vmem:[#allocation4 + $0x460] sm:$0xff]
        %v1496 = vld [vmem:[#allocation4 + $0x468] sm:$0xff]
        %v1497 = vld [vmem:[#allocation4 + $0x470] sm:$0xff]
        %v1498 = vld [vmem:[#allocation4 + $0x478] sm:$0xff]
        %v1499 = vld [vmem:[#allocation4 + $0x480] sm:$0xff]
        %v1500 = vld [vmem:[#allocation4 + $0x488] sm:$0xff]
        %v1501 = vld [vmem:[#allocation4 + $0x490] sm:$0xff]
        %v1502 = vld [vmem:[#allocation4 + $0x498] sm:$0xff]
        %v1503 = vld [vmem:[#allocation4 + $0x4a0] sm:$0xff]
        %v1504 = vld [vmem:[#allocation4 + $0x4a8] sm:$0xff]
        %v1505 = vld [vmem:[#allocation4 + $0x4b0] sm:$0xff]
        %v1506 = vld [vmem:[#allocation4 + $0x4b8] sm:$0xff]
        %v1507 = vld [vmem:[#allocation4 + $0x4c0] sm:$0xff]
        %v1508 = vld [vmem:[#allocation4 + $0x4c8] sm:$0xff]
        %v1509 = vld [vmem:[#allocation4 + $0x4d0] sm:$0xff]
        %v1510 = vld [vmem:[#allocation4 + $0x4d8] sm:$0xff]
        %v1511 = vld [vmem:[#allocation4 + $0x4e0] sm:$0xff]
        %v1512 = vld [vmem:[#allocation4 + $0x4e8] sm:$0xff]
        %v1513 = vld [vmem:[#allocation4 + $0x4f0] sm:$0xff]
        %v1514 = vld [vmem:[#allocation4 + $0x4f8] sm:$0xff]
        %v1515 = vld [vmem:[#allocation4 + $0x500] sm:$0xff]
        %v1516 = vld [vmem:[#allocation4 + $0x508] sm:$0xff]
        %v1517 = vld [vmem:[#allocation4 + $0x510] sm:$0xff]
        %v1518 = vld [vmem:[#allocation4 + $0x518] sm:$0xff]
        %v1519 = vld [vmem:[#allocation4 + $0x520] sm:$0xff]
        %v1520 = vld [vmem:[#allocation4 + $0x528] sm:$0xff]
        %v1521 = vld [vmem:[#allocation4 + $0x530] sm:$0xff]
        %v1522 = vld [vmem:[#allocation4 + $0x538] sm:$0xff]
        %v1523 = vld [vmem:[#allocation4 + $0x540] sm:$0xff]
        %v1524 = vld [vmem:[#allocation4 + $0x548] sm:$0xff]
        %v1525 = vld [vmem:[#allocation4 + $0x550] sm:$0xff]
        %v1526 = vld [vmem:[#allocation4 + $0x558] sm:$0xff]
        %v1527 = vld [vmem:[#allocation4 + $0x560] sm:$0xff]
        %v1528 = vld [vmem:[#allocation4 + $0x568] sm:$0xff]
        %v1529 = vld [vmem:[#allocation4 + $0x570] sm:$0xff]
        %v1530 = vld [vmem:[#allocation4 + $0x578] sm:$0xff]
        %v1531 = vld [vmem:[#allocation4 + $0x580] sm:$0xff]
        %v1532 = vld [vmem:[#allocation4 + $0x588] sm:$0xff]
        %v1533 = vld [vmem:[#allocation4 + $0x590] sm:$0xff]
        %v1534 = vld [vmem:[#allocation4 + $0x598] sm:$0xff]
        %v1535 = vld [vmem:[#allocation4 + $0x5a0] sm:$0xff]
        %v1536 = vld [vmem:[#allocation4 + $0x5a8] sm:$0xff]
        %v1537 = vld [vmem:[#allocation4 + $0x5b0] sm:$0xff]
        %v1538 = vld [vmem:[#allocation4 + $0x5b8] sm:$0xff]
        %v1539 = vld [vmem:[#allocation4 + $0x5c0] sm:$0xff]
        %v1540 = vld [vmem:[#allocation4 + $0x5c8] sm:$0xff]
        %v1541 = vld [vmem:[#allocation4 + $0x5d0] sm:$0xff]
        %v1542 = vld [vmem:[#allocation4 + $0x5d8] sm:$0xff]
        %v1543 = vld [vmem:[#allocation4 + $0x5e0] sm:$0xff]
        %v1544 = vld [vmem:[#allocation4 + $0x5e8] sm:$0xff]
        %v1545 = vld [vmem:[#allocation4 + $0x5f0] sm:$0xff]
        %v1546 = vld [vmem:[#allocation4 + $0x5f8] sm:$0xff]
        %v1547 = vld [vmem:[#allocation4 + $0x600] sm:$0xff]
        %v1548 = vld [vmem:[#allocation4 + $0x608] sm:$0xff]
        %v1549 = vld [vmem:[#allocation4 + $0x610] sm:$0xff]
        %v1550 = vld [vmem:[#allocation4 + $0x618] sm:$0xff]
        %v1551 = vld [vmem:[#allocation4 + $0x620] sm:$0xff]
        %v1552 = vld [vmem:[#allocation4 + $0x628] sm:$0xff]
        %v1553 = vld [vmem:[#allocation4 + $0x630] sm:$0xff]
        %v1554 = vld [vmem:[#allocation4 + $0x638] sm:$0xff]
        %v1555 = vld [vmem:[#allocation4 + $0x640] sm:$0xff]
        %v1556 = vld [vmem:[#allocation4 + $0x648] sm:$0xff]
        %v1557 = vld [vmem:[#allocation4 + $0x650] sm:$0xff]
        %v1558 = vld [vmem:[#allocation4 + $0x658] sm:$0xff]
        %v1559 = vld [vmem:[#allocation4 + $0x660] sm:$0xff]
        %v1560 = vld [vmem:[#allocation4 + $0x668] sm:$0xff]
        %v1561 = vld [vmem:[#allocation4 + $0x670] sm:$0xff]
        %v1562 = vld [vmem:[#allocation4 + $0x678] sm:$0xff]
        %v1563 = vld [vmem:[#allocation4 + $0x680] sm:$0xff]
        %v1564 = vld [vmem:[#allocation4 + $0x688] sm:$0xff]
        %v1565 = vld [vmem:[#allocation4 + $0x690] sm:$0xff]
        %v1566 = vld [vmem:[#allocation4 + $0x698] sm:$0xff]
        %v1567 = vld [vmem:[#allocation4 + $0x6a0] sm:$0xff]
        %v1568 = vld [vmem:[#allocation4 + $0x6a8] sm:$0xff]
        %v1569 = vld [vmem:[#allocation4 + $0x6b0] sm:$0xff]
        %v1570 = vld [vmem:[#allocation4 + $0x6b8] sm:$0xff]
        %v1571 = vld [vmem:[#allocation4 + $0x6c0] sm:$0xff]
        %v1572 = vld [vmem:[#allocation4 + $0x6c8] sm:$0xff]
        %v1573 = vld [vmem:[#allocation4 + $0x6d0] sm:$0xff]
        %v1574 = vld [vmem:[#allocation4 + $0x6d8] sm:$0xff]
        %v1575 = vld [vmem:[#allocation4 + $0x6e0] sm:$0xff]
        %v1576 = vld [vmem:[#allocation4 + $0x6e8] sm:$0xff]
        %v1577 = vld [vmem:[#allocation4 + $0x6f0] sm:$0xff]
        %v1578 = vld [vmem:[#allocation4 + $0x6f8] sm:$0xff]
        %v1579 = vld [vmem:[#allocation4 + $0x700] sm:$0xff]
        %v1580 = vld [vmem:[#allocation4 + $0x708] sm:$0xff]
        %v1581 = vld [vmem:[#allocation4 + $0x710] sm:$0xff]
        %v1582 = vld [vmem:[#allocation4 + $0x718] sm:$0xff]
        %v1583 = vld [vmem:[#allocation4 + $0x720] sm:$0xff]
        %v1584 = vld [vmem:[#allocation4 + $0x728] sm:$0xff]
        %v1585 = vld [vmem:[#allocation4 + $0x730] sm:$0xff]
        %v1586 = vld [vmem:[#allocation4 + $0x738] sm:$0xff]
        %v1587 = vld [vmem:[#allocation4 + $0x740] sm:$0xff]
        %v1588 = vld [vmem:[#allocation4 + $0x748] sm:$0xff]
        %v1589 = vld [vmem:[#allocation4 + $0x750] sm:$0xff]
        %v1590 = vld [vmem:[#allocation4 + $0x758] sm:$0xff]
        %v1591 = vld [vmem:[#allocation4 + $0x760] sm:$0xff]
        %v1592 = vld [vmem:[#allocation4 + $0x768] sm:$0xff]
        %v1593 = vld [vmem:[#allocation4 + $0x770] sm:$0xff]
        %v1594 = vld [vmem:[#allocation4 + $0x778] sm:$0xff]
        %v1595 = vld [vmem:[#allocation4 + $0x780] sm:$0xff]
        %v1596 = vld [vmem:[#allocation4 + $0x788] sm:$0xff]
        %v1597 = vld [vmem:[#allocation4 + $0x790] sm:$0xff]
        %v1598 = vld [vmem:[#allocation4 + $0x798] sm:$0xff]
        %v1599 = vld [vmem:[#allocation4 + $0x7a0] sm:$0xff]
        %v1600 = vld [vmem:[#allocation4 + $0x7a8] sm:$0xff]
        %v1601 = vld [vmem:[#allocation4 + $0x7b0] sm:$0xff]
        %v1602 = vld [vmem:[#allocation4 + $0x7b8] sm:$0xff]
        %v1603 = vld [vmem:[#allocation4 + $0x7c0] sm:$0xff]
        %v1604 = vld [vmem:[#allocation4 + $0x7c8] sm:$0xff]
        %v1605 = vld [vmem:[#allocation4 + $0x7d0] sm:$0xff]
        %v1606 = vld [vmem:[#allocation4 + $0x7d8] sm:$0xff]
        %v1607 = vld [vmem:[#allocation4 + $0x7e0] sm:$0xff]
        %v1608 = vld [vmem:[#allocation4 + $0x7e8] sm:$0xff]
        %v1609 = vld [vmem:[#allocation4 + $0x7f0] sm:$0xff]
        %v1610 = vld [vmem:[#allocation4 + $0x7f8] sm:$0xff]
        %v1611 = vld [vmem:[%s6] sm:$0xf]
        %v1613 = vlaneseq
        %v1614 = vshrl.u32 %v1613, 7
        %v1615 = vsub.s32 0, %v1614
        %v1616 = vrot.slane %v1611, %v1615
        %v1617 = vlaneseq
        %v1618 = vshrl.u32 %v1617, 7
        %v1619 = vsub.s32 1, %v1618
        %v1620 = vrot.slane %v1611, %v1619
        %v1621 = vlaneseq
        %v1622 = vshrl.u32 %v1621, 7
        %v1623 = vsub.s32 2, %v1622
        %v1624 = vrot.slane %v1611, %v1623
        %v1625 = vlaneseq
        %v1626 = vshrl.u32 %v1625, 7
        %v1627 = vsub.s32 3, %v1626
        %v1628 = vrot.slane %v1611, %v1627
        %v1889 = vunpack.c.l.b16 %v1355
        %v1890 = vunpack.c.h.b16 %v1355
        %v1891 = vunpack.c.l.b16 %v1356
        %v1892 = vunpack.c.h.b16 %v1356
        %v1893 = vunpack.c.l.b16 %v1357
        %v1894 = vunpack.c.h.b16 %v1357
        %v1895 = vunpack.c.l.b16 %v1358
        %v1896 = vunpack.c.h.b16 %v1358
        %v1897 = vunpack.c.l.b16 %v1359
        %v1898 = vunpack.c.h.b16 %v1359
        %v1899 = vunpack.c.l.b16 %v1360
        %v1900 = vunpack.c.h.b16 %v1360
        %v1901 = vunpack.c.l.b16 %v1361
        %v1902 = vunpack.c.h.b16 %v1361
        %v1903 = vunpack.c.l.b16 %v1362
        %v1904 = vunpack.c.h.b16 %v1362
        %v1905 = vunpack.c.l.b16 %v1363
        %v1906 = vunpack.c.h.b16 %v1363
        %v1907 = vunpack.c.l.b16 %v1364
        %v1908 = vunpack.c.h.b16 %v1364
        %v1909 = vunpack.c.l.b16 %v1365
        %v1910 = vunpack.c.h.b16 %v1365
        %v1911 = vunpack.c.l.b16 %v1366
        %v1912 = vunpack.c.h.b16 %v1366
        %v1913 = vunpack.c.l.b16 %v1367
        %v1914 = vunpack.c.h.b16 %v1367
        %v1915 = vunpack.c.l.b16 %v1368
        %v1916 = vunpack.c.h.b16 %v1368
        %v1917 = vunpack.c.l.b16 %v1369
        %v1918 = vunpack.c.h.b16 %v1369
        %v1919 = vunpack.c.l.b16 %v1370
        %v1920 = vunpack.c.h.b16 %v1370
        %v1921 = vunpack.c.l.b16 %v1371
        %v1922 = vunpack.c.h.b16 %v1371
        %v1923 = vunpack.c.l.b16 %v1372
        %v1924 = vunpack.c.h.b16 %v1372
        %v1925 = vunpack.c.l.b16 %v1373
        %v1926 = vunpack.c.h.b16 %v1373
        %v1927 = vunpack.c.l.b16 %v1374
        %v1928 = vunpack.c.h.b16 %v1374
        %v1929 = vunpack.c.l.b16 %v1375
        %v1930 = vunpack.c.h.b16 %v1375
        %v1931 = vunpack.c.l.b16 %v1376
        %v1932 = vunpack.c.h.b16 %v1376
        %v1933 = vunpack.c.l.b16 %v1377
        %v1934 = vunpack.c.h.b16 %v1377
        %v1935 = vunpack.c.l.b16 %v1378
        %v1936 = vunpack.c.h.b16 %v1378
        %v1937 = vunpack.c.l.b16 %v1379
        %v1938 = vunpack.c.h.b16 %v1379
        %v1939 = vunpack.c.l.b16 %v1380
        %v1940 = vunpack.c.h.b16 %v1380
        %v1941 = vunpack.c.l.b16 %v1381
        %v1942 = vunpack.c.h.b16 %v1381
        %v1943 = vunpack.c.l.b16 %v1382
        %v1944 = vunpack.c.h.b16 %v1382
        %v1945 = vunpack.c.l.b16 %v1383
        %v1946 = vunpack.c.h.b16 %v1383
        %v1947 = vunpack.c.l.b16 %v1384
        %v1948 = vunpack.c.h.b16 %v1384
        %v1949 = vunpack.c.l.b16 %v1385
        %v1950 = vunpack.c.h.b16 %v1385
        %v1951 = vunpack.c.l.b16 %v1386
        %v1952 = vunpack.c.h.b16 %v1386
        %v1953 = vunpack.c.l.b16 %v1387
        %v1954 = vunpack.c.h.b16 %v1387
        %v1955 = vunpack.c.l.b16 %v1388
        %v1956 = vunpack.c.h.b16 %v1388
        %v1957 = vunpack.c.l.b16 %v1389
        %v1958 = vunpack.c.h.b16 %v1389
        %v1959 = vunpack.c.l.b16 %v1390
        %v1960 = vunpack.c.h.b16 %v1390
        %v1961 = vunpack.c.l.b16 %v1391
        %v1962 = vunpack.c.h.b16 %v1391
        %v1963 = vunpack.c.l.b16 %v1392
        %v1964 = vunpack.c.h.b16 %v1392
        %v1965 = vunpack.c.l.b16 %v1393
        %v1966 = vunpack.c.h.b16 %v1393
        %v1967 = vunpack.c.l.b16 %v1394
        %v1968 = vunpack.c.h.b16 %v1394
        %v1969 = vunpack.c.l.b16 %v1395
        %v1970 = vunpack.c.h.b16 %v1395
        %v1971 = vunpack.c.l.b16 %v1396
        %v1972 = vunpack.c.h.b16 %v1396
        %v1973 = vunpack.c.l.b16 %v1397
        %v1974 = vunpack.c.h.b16 %v1397
        %v1975 = vunpack.c.l.b16 %v1398
        %v1976 = vunpack.c.h.b16 %v1398
        %v1977 = vunpack.c.l.b16 %v1399
        %v1978 = vunpack.c.h.b16 %v1399
        %v1979 = vunpack.c.l.b16 %v1400
        %v1980 = vunpack.c.h.b16 %v1400
        %v1981 = vunpack.c.l.b16 %v1401
        %v1982 = vunpack.c.h.b16 %v1401
        %v1983 = vunpack.c.l.b16 %v1402
        %v1984 = vunpack.c.h.b16 %v1402
        %v1985 = vunpack.c.l.b16 %v1403
        %v1986 = vunpack.c.h.b16 %v1403
        %v1987 = vunpack.c.l.b16 %v1404
        %v1988 = vunpack.c.h.b16 %v1404
        %v1989 = vunpack.c.l.b16 %v1405
        %v1990 = vunpack.c.h.b16 %v1405
        %v1991 = vunpack.c.l.b16 %v1406
        %v1992 = vunpack.c.h.b16 %v1406
        %v1993 = vunpack.c.l.b16 %v1407
        %v1994 = vunpack.c.h.b16 %v1407
        %v1995 = vunpack.c.l.b16 %v1408
        %v1996 = vunpack.c.h.b16 %v1408
        %v1997 = vunpack.c.l.b16 %v1409
        %v1998 = vunpack.c.h.b16 %v1409
        %v1999 = vunpack.c.l.b16 %v1410
        %v2000 = vunpack.c.h.b16 %v1410
        %v2001 = vunpack.c.l.b16 %v1411
        %v2002 = vunpack.c.h.b16 %v1411
        %v2003 = vunpack.c.l.b16 %v1412
        %v2004 = vunpack.c.h.b16 %v1412
        %v2005 = vunpack.c.l.b16 %v1413
        %v2006 = vunpack.c.h.b16 %v1413
        %v2007 = vunpack.c.l.b16 %v1414
        %v2008 = vunpack.c.h.b16 %v1414
        %v2009 = vunpack.c.l.b16 %v1415
        %v2010 = vunpack.c.h.b16 %v1415
        %v2011 = vunpack.c.l.b16 %v1416
        %v2012 = vunpack.c.h.b16 %v1416
        %v2013 = vunpack.c.l.b16 %v1417
        %v2014 = vunpack.c.h.b16 %v1417
        %v2015 = vunpack.c.l.b16 %v1418
        %v2016 = vunpack.c.h.b16 %v1418
        %v2017 = vunpack.c.l.b16 %v1419
        %v2018 = vunpack.c.h.b16 %v1419
        %v2019 = vunpack.c.l.b16 %v1420
        %v2020 = vunpack.c.h.b16 %v1420
        %v2021 = vunpack.c.l.b16 %v1421
        %v2022 = vunpack.c.h.b16 %v1421
        %v2023 = vunpack.c.l.b16 %v1422
        %v2024 = vunpack.c.h.b16 %v1422
        %v2025 = vunpack.c.l.b16 %v1423
        %v2026 = vunpack.c.h.b16 %v1423
        %v2027 = vunpack.c.l.b16 %v1424
        %v2028 = vunpack.c.h.b16 %v1424
        %v2029 = vunpack.c.l.b16 %v1425
        %v2030 = vunpack.c.h.b16 %v1425
        %v2031 = vunpack.c.l.b16 %v1426
        %v2032 = vunpack.c.h.b16 %v1426
        %v2033 = vunpack.c.l.b16 %v1427
        %v2034 = vunpack.c.h.b16 %v1427
        %v2035 = vunpack.c.l.b16 %v1428
        %v2036 = vunpack.c.h.b16 %v1428
        %v2037 = vunpack.c.l.b16 %v1429
        %v2038 = vunpack.c.h.b16 %v1429
        %v2039 = vunpack.c.l.b16 %v1430
        %v2040 = vunpack.c.h.b16 %v1430
        %v2041 = vunpack.c.l.b16 %v1431
        %v2042 = vunpack.c.h.b16 %v1431
        %v2043 = vunpack.c.l.b16 %v1432
        %v2044 = vunpack.c.h.b16 %v1432
        %v2045 = vunpack.c.l.b16 %v1433
        %v2046 = vunpack.c.h.b16 %v1433
        %v2047 = vunpack.c.l.b16 %v1434
        %v2048 = vunpack.c.h.b16 %v1434
        %v2049 = vunpack.c.l.b16 %v1435
        %v2050 = vunpack.c.h.b16 %v1435
        %v2051 = vunpack.c.l.b16 %v1436
        %v2052 = vunpack.c.h.b16 %v1436
        %v2053 = vunpack.c.l.b16 %v1437
        %v2054 = vunpack.c.h.b16 %v1437
        %v2055 = vunpack.c.l.b16 %v1438
        %v2056 = vunpack.c.h.b16 %v1438
        %v2057 = vunpack.c.l.b16 %v1439
        %v2058 = vunpack.c.h.b16 %v1439
        %v2059 = vunpack.c.l.b16 %v1440
        %v2060 = vunpack.c.h.b16 %v1440
        %v2061 = vunpack.c.l.b16 %v1441
        %v2062 = vunpack.c.h.b16 %v1441
        %v2063 = vunpack.c.l.b16 %v1442
        %v2064 = vunpack.c.h.b16 %v1442
        %v2065 = vunpack.c.l.b16 %v1443
        %v2066 = vunpack.c.h.b16 %v1443
        %v2067 = vunpack.c.l.b16 %v1444
        %v2068 = vunpack.c.h.b16 %v1444
        %v2069 = vunpack.c.l.b16 %v1445
        %v2070 = vunpack.c.h.b16 %v1445
        %v2071 = vunpack.c.l.b16 %v1446
        %v2072 = vunpack.c.h.b16 %v1446
        %v2073 = vunpack.c.l.b16 %v1447
        %v2074 = vunpack.c.h.b16 %v1447
        %v2075 = vunpack.c.l.b16 %v1448
        %v2076 = vunpack.c.h.b16 %v1448
        %v2077 = vunpack.c.l.b16 %v1449
        %v2078 = vunpack.c.h.b16 %v1449
        %v2079 = vunpack.c.l.b16 %v1450
        %v2080 = vunpack.c.h.b16 %v1450
        %v2081 = vunpack.c.l.b16 %v1451
        %v2082 = vunpack.c.h.b16 %v1451
        %v2083 = vunpack.c.l.b16 %v1452
        %v2084 = vunpack.c.h.b16 %v1452
        %v2085 = vunpack.c.l.b16 %v1453
        %v2086 = vunpack.c.h.b16 %v1453
        %v2087 = vunpack.c.l.b16 %v1454
        %v2088 = vunpack.c.h.b16 %v1454
        %v2089 = vunpack.c.l.b16 %v1455
        %v2090 = vunpack.c.h.b16 %v1455
        %v2091 = vunpack.c.l.b16 %v1456
        %v2092 = vunpack.c.h.b16 %v1456
        %v2093 = vunpack.c.l.b16 %v1457
        %v2094 = vunpack.c.h.b16 %v1457
        %v2095 = vunpack.c.l.b16 %v1458
        %v2096 = vunpack.c.h.b16 %v1458
        %v2097 = vunpack.c.l.b16 %v1459
        %v2098 = vunpack.c.h.b16 %v1459
        %v2099 = vunpack.c.l.b16 %v1460
        %v2100 = vunpack.c.h.b16 %v1460
        %v2101 = vunpack.c.l.b16 %v1461
        %v2102 = vunpack.c.h.b16 %v1461
        %v2103 = vunpack.c.l.b16 %v1462
        %v2104 = vunpack.c.h.b16 %v1462
        %v2105 = vunpack.c.l.b16 %v1463
        %v2106 = vunpack.c.h.b16 %v1463
        %v2107 = vunpack.c.l.b16 %v1464
        %v2108 = vunpack.c.h.b16 %v1464
        %v2109 = vunpack.c.l.b16 %v1465
        %v2110 = vunpack.c.h.b16 %v1465
        %v2111 = vunpack.c.l.b16 %v1466
        %v2112 = vunpack.c.h.b16 %v1466
        %v2113 = vunpack.c.l.b16 %v1467
        %v2114 = vunpack.c.h.b16 %v1467
        %v2115 = vunpack.c.l.b16 %v1468
        %v2116 = vunpack.c.h.b16 %v1468
        %v2117 = vunpack.c.l.b16 %v1469
        %v2118 = vunpack.c.h.b16 %v1469
        %v2119 = vunpack.c.l.b16 %v1470
        %v2120 = vunpack.c.h.b16 %v1470
        %v2121 = vunpack.c.l.b16 %v1471
        %v2122 = vunpack.c.h.b16 %v1471
        %v2123 = vunpack.c.l.b16 %v1472
        %v2124 = vunpack.c.h.b16 %v1472
        %v2125 = vunpack.c.l.b16 %v1473
        %v2126 = vunpack.c.h.b16 %v1473
        %v2127 = vunpack.c.l.b16 %v1474
        %v2128 = vunpack.c.h.b16 %v1474
        %v2129 = vunpack.c.l.b16 %v1475
        %v2130 = vunpack.c.h.b16 %v1475
        %v2131 = vunpack.c.l.b16 %v1476
        %v2132 = vunpack.c.h.b16 %v1476
        %v2133 = vunpack.c.l.b16 %v1477
        %v2134 = vunpack.c.h.b16 %v1477
        %v2135 = vunpack.c.l.b16 %v1478
        %v2136 = vunpack.c.h.b16 %v1478
        %v2137 = vunpack.c.l.b16 %v1479
        %v2138 = vunpack.c.h.b16 %v1479
        %v2139 = vunpack.c.l.b16 %v1480
        %v2140 = vunpack.c.h.b16 %v1480
        %v2141 = vunpack.c.l.b16 %v1481
        %v2142 = vunpack.c.h.b16 %v1481
        %v2143 = vunpack.c.l.b16 %v1482
        %v2144 = vunpack.c.h.b16 %v1482
        %v2145 = vunpack.c.l.b16 %v1483
        %v2146 = vunpack.c.h.b16 %v1483
        %v2147 = vunpack.c.l.b16 %v1484
        %v2148 = vunpack.c.h.b16 %v1484
        %v2149 = vunpack.c.l.b16 %v1485
        %v2150 = vunpack.c.h.b16 %v1485
        %v2151 = vunpack.c.l.b16 %v1486
        %v2152 = vunpack.c.h.b16 %v1486
        %v2153 = vunpack.c.l.b16 %v1487
        %v2154 = vunpack.c.h.b16 %v1487
        %v2155 = vunpack.c.l.b16 %v1488
        %v2156 = vunpack.c.h.b16 %v1488
        %v2157 = vunpack.c.l.b16 %v1489
        %v2158 = vunpack.c.h.b16 %v1489
        %v2159 = vunpack.c.l.b16 %v1490
        %v2160 = vunpack.c.h.b16 %v1490
        %v2161 = vunpack.c.l.b16 %v1491
        %v2162 = vunpack.c.h.b16 %v1491
        %v2163 = vunpack.c.l.b16 %v1492
        %v2164 = vunpack.c.h.b16 %v1492
        %v2165 = vunpack.c.l.b16 %v1493
        %v2166 = vunpack.c.h.b16 %v1493
        %v2167 = vunpack.c.l.b16 %v1494
        %v2168 = vunpack.c.h.b16 %v1494
        %v2169 = vunpack.c.l.b16 %v1495
        %v2170 = vunpack.c.h.b16 %v1495
        %v2171 = vunpack.c.l.b16 %v1496
        %v2172 = vunpack.c.h.b16 %v1496
        %v2173 = vunpack.c.l.b16 %v1497
        %v2174 = vunpack.c.h.b16 %v1497
        %v2175 = vunpack.c.l.b16 %v1498
        %v2176 = vunpack.c.h.b16 %v1498
        %v2177 = vunpack.c.l.b16 %v1499
        %v2178 = vunpack.c.h.b16 %v1499
        %v2179 = vunpack.c.l.b16 %v1500
        %v2180 = vunpack.c.h.b16 %v1500
        %v2181 = vunpack.c.l.b16 %v1501
        %v2182 = vunpack.c.h.b16 %v1501
        %v2183 = vunpack.c.l.b16 %v1502
        %v2184 = vunpack.c.h.b16 %v1502
        %v2185 = vunpack.c.l.b16 %v1503
        %v2186 = vunpack.c.h.b16 %v1503
        %v2187 = vunpack.c.l.b16 %v1504
        %v2188 = vunpack.c.h.b16 %v1504
        %v2189 = vunpack.c.l.b16 %v1505
        %v2190 = vunpack.c.h.b16 %v1505
        %v2191 = vunpack.c.l.b16 %v1506
        %v2192 = vunpack.c.h.b16 %v1506
        %v2193 = vunpack.c.l.b16 %v1507
        %v2194 = vunpack.c.h.b16 %v1507
        %v2195 = vunpack.c.l.b16 %v1508
        %v2196 = vunpack.c.h.b16 %v1508
        %v2197 = vunpack.c.l.b16 %v1509
        %v2198 = vunpack.c.h.b16 %v1509
        %v2199 = vunpack.c.l.b16 %v1510
        %v2200 = vunpack.c.h.b16 %v1510
        %v2201 = vunpack.c.l.b16 %v1511
        %v2202 = vunpack.c.h.b16 %v1511
        %v2203 = vunpack.c.l.b16 %v1512
        %v2204 = vunpack.c.h.b16 %v1512
        %v2205 = vunpack.c.l.b16 %v1513
        %v2206 = vunpack.c.h.b16 %v1513
        %v2207 = vunpack.c.l.b16 %v1514
        %v2208 = vunpack.c.h.b16 %v1514
        %v2209 = vunpack.c.l.b16 %v1515
        %v2210 = vunpack.c.h.b16 %v1515
        %v2211 = vunpack.c.l.b16 %v1516
        %v2212 = vunpack.c.h.b16 %v1516
        %v2213 = vunpack.c.l.b16 %v1517
        %v2214 = vunpack.c.h.b16 %v1517
        %v2215 = vunpack.c.l.b16 %v1518
        %v2216 = vunpack.c.h.b16 %v1518
        %v2217 = vunpack.c.l.b16 %v1519
        %v2218 = vunpack.c.h.b16 %v1519
        %v2219 = vunpack.c.l.b16 %v1520
        %v2220 = vunpack.c.h.b16 %v1520
        %v2221 = vunpack.c.l.b16 %v1521
        %v2222 = vunpack.c.h.b16 %v1521
        %v2223 = vunpack.c.l.b16 %v1522
        %v2224 = vunpack.c.h.b16 %v1522
        %v2225 = vunpack.c.l.b16 %v1523
        %v2226 = vunpack.c.h.b16 %v1523
        %v2227 = vunpack.c.l.b16 %v1524
        %v2228 = vunpack.c.h.b16 %v1524
        %v2229 = vunpack.c.l.b16 %v1525
        %v2230 = vunpack.c.h.b16 %v1525
        %v2231 = vunpack.c.l.b16 %v1526
        %v2232 = vunpack.c.h.b16 %v1526
        %v2233 = vunpack.c.l.b16 %v1527
        %v2234 = vunpack.c.h.b16 %v1527
        %v2235 = vunpack.c.l.b16 %v1528
        %v2236 = vunpack.c.h.b16 %v1528
        %v2237 = vunpack.c.l.b16 %v1529
        %v2238 = vunpack.c.h.b16 %v1529
        %v2239 = vunpack.c.l.b16 %v1530
        %v2240 = vunpack.c.h.b16 %v1530
        %v2241 = vunpack.c.l.b16 %v1531
        %v2242 = vunpack.c.h.b16 %v1531
        %v2243 = vunpack.c.l.b16 %v1532
        %v2244 = vunpack.c.h.b16 %v1532
        %v2245 = vunpack.c.l.b16 %v1533
        %v2246 = vunpack.c.h.b16 %v1533
        %v2247 = vunpack.c.l.b16 %v1534
        %v2248 = vunpack.c.h.b16 %v1534
        %v2249 = vunpack.c.l.b16 %v1535
        %v2250 = vunpack.c.h.b16 %v1535
        %v2251 = vunpack.c.l.b16 %v1536
        %v2252 = vunpack.c.h.b16 %v1536
        %v2253 = vunpack.c.l.b16 %v1537
        %v2254 = vunpack.c.h.b16 %v1537
        %v2255 = vunpack.c.l.b16 %v1538
        %v2256 = vunpack.c.h.b16 %v1538
        %v2257 = vunpack.c.l.b16 %v1539
        %v2258 = vunpack.c.h.b16 %v1539
        %v2259 = vunpack.c.l.b16 %v1540
        %v2260 = vunpack.c.h.b16 %v1540
        %v2261 = vunpack.c.l.b16 %v1541
        %v2262 = vunpack.c.h.b16 %v1541
        %v2263 = vunpack.c.l.b16 %v1542
        %v2264 = vunpack.c.h.b16 %v1542
        %v2265 = vunpack.c.l.b16 %v1543
        %v2266 = vunpack.c.h.b16 %v1543
        %v2267 = vunpack.c.l.b16 %v1544
        %v2268 = vunpack.c.h.b16 %v1544
        %v2269 = vunpack.c.l.b16 %v1545
        %v2270 = vunpack.c.h.b16 %v1545
        %v2271 = vunpack.c.l.b16 %v1546
        %v2272 = vunpack.c.h.b16 %v1546
        %v2273 = vunpack.c.l.b16 %v1547
        %v2274 = vunpack.c.h.b16 %v1547
        %v2275 = vunpack.c.l.b16 %v1548
        %v2276 = vunpack.c.h.b16 %v1548
        %v2277 = vunpack.c.l.b16 %v1549
        %v2278 = vunpack.c.h.b16 %v1549
        %v2279 = vunpack.c.l.b16 %v1550
        %v2280 = vunpack.c.h.b16 %v1550
        %v2281 = vunpack.c.l.b16 %v1551
        %v2282 = vunpack.c.h.b16 %v1551
        %v2283 = vunpack.c.l.b16 %v1552
        %v2284 = vunpack.c.h.b16 %v1552
        %v2285 = vunpack.c.l.b16 %v1553
        %v2286 = vunpack.c.h.b16 %v1553
        %v2287 = vunpack.c.l.b16 %v1554
        %v2288 = vunpack.c.h.b16 %v1554
        %v2289 = vunpack.c.l.b16 %v1555
        %v2290 = vunpack.c.h.b16 %v1555
        %v2291 = vunpack.c.l.b16 %v1556
        %v2292 = vunpack.c.h.b16 %v1556
        %v2293 = vunpack.c.l.b16 %v1557
        %v2294 = vunpack.c.h.b16 %v1557
        %v2295 = vunpack.c.l.b16 %v1558
        %v2296 = vunpack.c.h.b16 %v1558
        %v2297 = vunpack.c.l.b16 %v1559
        %v2298 = vunpack.c.h.b16 %v1559
        %v2299 = vunpack.c.l.b16 %v1560
        %v2300 = vunpack.c.h.b16 %v1560
        %v2301 = vunpack.c.l.b16 %v1561
        %v2302 = vunpack.c.h.b16 %v1561
        %v2303 = vunpack.c.l.b16 %v1562
        %v2304 = vunpack.c.h.b16 %v1562
        %v2305 = vunpack.c.l.b16 %v1563
        %v2306 = vunpack.c.h.b16 %v1563
        %v2307 = vunpack.c.l.b16 %v1564
        %v2308 = vunpack.c.h.b16 %v1564
        %v2309 = vunpack.c.l.b16 %v1565
        %v2310 = vunpack.c.h.b16 %v1565
        %v2311 = vunpack.c.l.b16 %v1566
        %v2312 = vunpack.c.h.b16 %v1566
        %v2313 = vunpack.c.l.b16 %v1567
        %v2314 = vunpack.c.h.b16 %v1567
        %v2315 = vunpack.c.l.b16 %v1568
        %v2316 = vunpack.c.h.b16 %v1568
        %v2317 = vunpack.c.l.b16 %v1569
        %v2318 = vunpack.c.h.b16 %v1569
        %v2319 = vunpack.c.l.b16 %v1570
        %v2320 = vunpack.c.h.b16 %v1570
        %v2321 = vunpack.c.l.b16 %v1571
        %v2322 = vunpack.c.h.b16 %v1571
        %v2323 = vunpack.c.l.b16 %v1572
        %v2324 = vunpack.c.h.b16 %v1572
        %v2325 = vunpack.c.l.b16 %v1573
        %v2326 = vunpack.c.h.b16 %v1573
        %v2327 = vunpack.c.l.b16 %v1574
        %v2328 = vunpack.c.h.b16 %v1574
        %v2329 = vunpack.c.l.b16 %v1575
        %v2330 = vunpack.c.h.b16 %v1575
        %v2331 = vunpack.c.l.b16 %v1576
        %v2332 = vunpack.c.h.b16 %v1576
        %v2333 = vunpack.c.l.b16 %v1577
        %v2334 = vunpack.c.h.b16 %v1577
        %v2335 = vunpack.c.l.b16 %v1578
        %v2336 = vunpack.c.h.b16 %v1578
        %v2337 = vunpack.c.l.b16 %v1579
        %v2338 = vunpack.c.h.b16 %v1579
        %v2339 = vunpack.c.l.b16 %v1580
        %v2340 = vunpack.c.h.b16 %v1580
        %v2341 = vunpack.c.l.b16 %v1581
        %v2342 = vunpack.c.h.b16 %v1581
        %v2343 = vunpack.c.l.b16 %v1582
        %v2344 = vunpack.c.h.b16 %v1582
        %v2345 = vunpack.c.l.b16 %v1583
        %v2346 = vunpack.c.h.b16 %v1583
        %v2347 = vunpack.c.l.b16 %v1584
        %v2348 = vunpack.c.h.b16 %v1584
        %v2349 = vunpack.c.l.b16 %v1585
        %v2350 = vunpack.c.h.b16 %v1585
        %v2351 = vunpack.c.l.b16 %v1586
        %v2352 = vunpack.c.h.b16 %v1586
        %v2353 = vunpack.c.l.b16 %v1587
        %v2354 = vunpack.c.h.b16 %v1587
        %v2355 = vunpack.c.l.b16 %v1588
        %v2356 = vunpack.c.h.b16 %v1588
        %v2357 = vunpack.c.l.b16 %v1589
        %v2358 = vunpack.c.h.b16 %v1589
        %v2359 = vunpack.c.l.b16 %v1590
        %v2360 = vunpack.c.h.b16 %v1590
        %v2361 = vunpack.c.l.b16 %v1591
        %v2362 = vunpack.c.h.b16 %v1591
        %v2363 = vunpack.c.l.b16 %v1592
        %v2364 = vunpack.c.h.b16 %v1592
        %v2365 = vunpack.c.l.b16 %v1593
        %v2366 = vunpack.c.h.b16 %v1593
        %v2367 = vunpack.c.l.b16 %v1594
        %v2368 = vunpack.c.h.b16 %v1594
        %v2369 = vunpack.c.l.b16 %v1595
        %v2370 = vunpack.c.h.b16 %v1595
        %v2371 = vunpack.c.l.b16 %v1596
        %v2372 = vunpack.c.h.b16 %v1596
        %v2373 = vunpack.c.l.b16 %v1597
        %v2374 = vunpack.c.h.b16 %v1597
        %v2375 = vunpack.c.l.b16 %v1598
        %v2376 = vunpack.c.h.b16 %v1598
        %v2377 = vunpack.c.l.b16 %v1599
        %v2378 = vunpack.c.h.b16 %v1599
        %v2379 = vunpack.c.l.b16 %v1600
        %v2380 = vunpack.c.h.b16 %v1600
        %v2381 = vunpack.c.l.b16 %v1601
        %v2382 = vunpack.c.h.b16 %v1601
        %v2383 = vunpack.c.l.b16 %v1602
        %v2384 = vunpack.c.h.b16 %v1602
        %v2385 = vunpack.c.l.b16 %v1603
        %v2386 = vunpack.c.h.b16 %v1603
        %v2387 = vunpack.c.l.b16 %v1604
        %v2388 = vunpack.c.h.b16 %v1604
        %v2389 = vunpack.c.l.b16 %v1605
        %v2390 = vunpack.c.h.b16 %v1605
        %v2391 = vunpack.c.l.b16 %v1606
        %v2392 = vunpack.c.h.b16 %v1606
        %v2393 = vunpack.c.l.b16 %v1607
        %v2394 = vunpack.c.h.b16 %v1607
        %v2395 = vunpack.c.l.b16 %v1608
        %v2396 = vunpack.c.h.b16 %v1608
        %v2397 = vunpack.c.l.b16 %v1609
        %v2398 = vunpack.c.h.b16 %v1609
        %v2399 = vunpack.c.l.b16 %v1610
        %v2400 = vunpack.c.h.b16 %v1610
        %v2401 = vpack.c.b16 %v1893, %v1889
        %v2402 = vpack.c.b16 %v1894, %v1890
        %v2403 = vpack.c.b16 %v1895, %v1891
        %v2404 = vpack.c.b16 %v1896, %v1892
        %v2405 = vpack.c.b16 %v1901, %v1897
        %v2406 = vpack.c.b16 %v1902, %v1898
        %v2407 = vpack.c.b16 %v1903, %v1899
        %v2408 = vpack.c.b16 %v1904, %v1900
        %v2409 = vpack.c.b16 %v1909, %v1905
        %v2410 = vpack.c.b16 %v1910, %v1906
        %v2411 = vpack.c.b16 %v1911, %v1907
        %v2412 = vpack.c.b16 %v1912, %v1908
        %v2413 = vpack.c.b16 %v1917, %v1913
        %v2414 = vpack.c.b16 %v1918, %v1914
        %v2415 = vpack.c.b16 %v1919, %v1915
        %v2416 = vpack.c.b16 %v1920, %v1916
        %v2417 = vpack.c.b16 %v1925, %v1921
        %v2418 = vpack.c.b16 %v1926, %v1922
        %v2419 = vpack.c.b16 %v1927, %v1923
        %v2420 = vpack.c.b16 %v1928, %v1924
        %v2421 = vpack.c.b16 %v1933, %v1929
        %v2422 = vpack.c.b16 %v1934, %v1930
        %v2423 = vpack.c.b16 %v1935, %v1931
        %v2424 = vpack.c.b16 %v1936, %v1932
        %v2425 = vpack.c.b16 %v1941, %v1937
        %v2426 = vpack.c.b16 %v1942, %v1938
        %v2427 = vpack.c.b16 %v1943, %v1939
        %v2428 = vpack.c.b16 %v1944, %v1940
        %v2429 = vpack.c.b16 %v1949, %v1945
        %v2430 = vpack.c.b16 %v1950, %v1946
        %v2431 = vpack.c.b16 %v1951, %v1947
        %v2432 = vpack.c.b16 %v1952, %v1948
        %v2433 = vpack.c.b16 %v1957, %v1953
        %v2434 = vpack.c.b16 %v1958, %v1954
        %v2435 = vpack.c.b16 %v1959, %v1955
        %v2436 = vpack.c.b16 %v1960, %v1956
        %v2437 = vpack.c.b16 %v1965, %v1961
        %v2438 = vpack.c.b16 %v1966, %v1962
        %v2439 = vpack.c.b16 %v1967, %v1963
        %v2440 = vpack.c.b16 %v1968, %v1964
        %v2441 = vpack.c.b16 %v1973, %v1969
        %v2442 = vpack.c.b16 %v1974, %v1970
        %v2443 = vpack.c.b16 %v1975, %v1971
        %v2444 = vpack.c.b16 %v1976, %v1972
        %v2445 = vpack.c.b16 %v1981, %v1977
        %v2446 = vpack.c.b16 %v1982, %v1978
        %v2447 = vpack.c.b16 %v1983, %v1979
        %v2448 = vpack.c.b16 %v1984, %v1980
        %v2449 = vpack.c.b16 %v1989, %v1985
        %v2450 = vpack.c.b16 %v1990, %v1986
        %v2451 = vpack.c.b16 %v1991, %v1987
        %v2452 = vpack.c.b16 %v1992, %v1988
        %v2453 = vpack.c.b16 %v1997, %v1993
        %v2454 = vpack.c.b16 %v1998, %v1994
        %v2455 = vpack.c.b16 %v1999, %v1995
        %v2456 = vpack.c.b16 %v2000, %v1996
        %v2457 = vpack.c.b16 %v2005, %v2001
        %v2458 = vpack.c.b16 %v2006, %v2002
        %v2459 = vpack.c.b16 %v2007, %v2003
        %v2460 = vpack.c.b16 %v2008, %v2004
        %v2461 = vpack.c.b16 %v2013, %v2009
        %v2462 = vpack.c.b16 %v2014, %v2010
        %v2463 = vpack.c.b16 %v2015, %v2011
        %v2464 = vpack.c.b16 %v2016, %v2012
        %v2465 = vpack.c.b16 %v2021, %v2017
        %v2466 = vpack.c.b16 %v2022, %v2018
        %v2467 = vpack.c.b16 %v2023, %v2019
        %v2468 = vpack.c.b16 %v2024, %v2020
        %v2469 = vpack.c.b16 %v2029, %v2025
        %v2470 = vpack.c.b16 %v2030, %v2026
        %v2471 = vpack.c.b16 %v2031, %v2027
        %v2472 = vpack.c.b16 %v2032, %v2028
        %v2473 = vpack.c.b16 %v2037, %v2033
        %v2474 = vpack.c.b16 %v2038, %v2034
        %v2475 = vpack.c.b16 %v2039, %v2035
        %v2476 = vpack.c.b16 %v2040, %v2036
        %v2477 = vpack.c.b16 %v2045, %v2041
        %v2478 = vpack.c.b16 %v2046, %v2042
        %v2479 = vpack.c.b16 %v2047, %v2043
        %v2480 = vpack.c.b16 %v2048, %v2044
        %v2481 = vpack.c.b16 %v2053, %v2049
        %v2482 = vpack.c.b16 %v2054, %v2050
        %v2483 = vpack.c.b16 %v2055, %v2051
        %v2484 = vpack.c.b16 %v2056, %v2052
        %v2485 = vpack.c.b16 %v2061, %v2057
        %v2486 = vpack.c.b16 %v2062, %v2058
        %v2487 = vpack.c.b16 %v2063, %v2059
        %v2488 = vpack.c.b16 %v2064, %v2060
        %v2489 = vpack.c.b16 %v2069, %v2065
        %v2490 = vpack.c.b16 %v2070, %v2066
        %v2491 = vpack.c.b16 %v2071, %v2067
        %v2492 = vpack.c.b16 %v2072, %v2068
        %v2493 = vpack.c.b16 %v2077, %v2073
        %v2494 = vpack.c.b16 %v2078, %v2074
        %v2495 = vpack.c.b16 %v2079, %v2075
        %v2496 = vpack.c.b16 %v2080, %v2076
        %v2497 = vpack.c.b16 %v2085, %v2081
        %v2498 = vpack.c.b16 %v2086, %v2082
        %v2499 = vpack.c.b16 %v2087, %v2083
        %v2500 = vpack.c.b16 %v2088, %v2084
        %v2501 = vpack.c.b16 %v2093, %v2089
        %v2502 = vpack.c.b16 %v2094, %v2090
        %v2503 = vpack.c.b16 %v2095, %v2091
        %v2504 = vpack.c.b16 %v2096, %v2092
        %v2505 = vpack.c.b16 %v2101, %v2097
        %v2506 = vpack.c.b16 %v2102, %v2098
        %v2507 = vpack.c.b16 %v2103, %v2099
        %v2508 = vpack.c.b16 %v2104, %v2100
        %v2509 = vpack.c.b16 %v2109, %v2105
        %v2510 = vpack.c.b16 %v2110, %v2106
        %v2511 = vpack.c.b16 %v2111, %v2107
        %v2512 = vpack.c.b16 %v2112, %v2108
        %v2513 = vpack.c.b16 %v2117, %v2113
        %v2514 = vpack.c.b16 %v2118, %v2114
        %v2515 = vpack.c.b16 %v2119, %v2115
        %v2516 = vpack.c.b16 %v2120, %v2116
        %v2517 = vpack.c.b16 %v2125, %v2121
        %v2518 = vpack.c.b16 %v2126, %v2122
        %v2519 = vpack.c.b16 %v2127, %v2123
        %v2520 = vpack.c.b16 %v2128, %v2124
        %v2521 = vpack.c.b16 %v2133, %v2129
        %v2522 = vpack.c.b16 %v2134, %v2130
        %v2523 = vpack.c.b16 %v2135, %v2131
        %v2524 = vpack.c.b16 %v2136, %v2132
        %v2525 = vpack.c.b16 %v2141, %v2137
        %v2526 = vpack.c.b16 %v2142, %v2138
        %v2527 = vpack.c.b16 %v2143, %v2139
        %v2528 = vpack.c.b16 %v2144, %v2140
        %v2529 = vpack.c.b16 %v2149, %v2145
        %v2530 = vpack.c.b16 %v2150, %v2146
        %v2531 = vpack.c.b16 %v2151, %v2147
        %v2532 = vpack.c.b16 %v2152, %v2148
        %v2533 = vpack.c.b16 %v2157, %v2153
        %v2534 = vpack.c.b16 %v2158, %v2154
        %v2535 = vpack.c.b16 %v2159, %v2155
        %v2536 = vpack.c.b16 %v2160, %v2156
        %v2537 = vpack.c.b16 %v2165, %v2161
        %v2538 = vpack.c.b16 %v2166, %v2162
        %v2539 = vpack.c.b16 %v2167, %v2163
        %v2540 = vpack.c.b16 %v2168, %v2164
        %v2541 = vpack.c.b16 %v2173, %v2169
        %v2542 = vpack.c.b16 %v2174, %v2170
        %v2543 = vpack.c.b16 %v2175, %v2171
        %v2544 = vpack.c.b16 %v2176, %v2172
        %v2545 = vpack.c.b16 %v2181, %v2177
        %v2546 = vpack.c.b16 %v2182, %v2178
        %v2547 = vpack.c.b16 %v2183, %v2179
        %v2548 = vpack.c.b16 %v2184, %v2180
        %v2549 = vpack.c.b16 %v2189, %v2185
        %v2550 = vpack.c.b16 %v2190, %v2186
        %v2551 = vpack.c.b16 %v2191, %v2187
        %v2552 = vpack.c.b16 %v2192, %v2188
        %v2553 = vpack.c.b16 %v2197, %v2193
        %v2554 = vpack.c.b16 %v2198, %v2194
        %v2555 = vpack.c.b16 %v2199, %v2195
        %v2556 = vpack.c.b16 %v2200, %v2196
        %v2557 = vpack.c.b16 %v2205, %v2201
        %v2558 = vpack.c.b16 %v2206, %v2202
        %v2559 = vpack.c.b16 %v2207, %v2203
        %v2560 = vpack.c.b16 %v2208, %v2204
        %v2561 = vpack.c.b16 %v2213, %v2209
        %v2562 = vpack.c.b16 %v2214, %v2210
        %v2563 = vpack.c.b16 %v2215, %v2211
        %v2564 = vpack.c.b16 %v2216, %v2212
        %v2565 = vpack.c.b16 %v2221, %v2217
        %v2566 = vpack.c.b16 %v2222, %v2218
        %v2567 = vpack.c.b16 %v2223, %v2219
        %v2568 = vpack.c.b16 %v2224, %v2220
        %v2569 = vpack.c.b16 %v2229, %v2225
        %v2570 = vpack.c.b16 %v2230, %v2226
        %v2571 = vpack.c.b16 %v2231, %v2227
        %v2572 = vpack.c.b16 %v2232, %v2228
        %v2573 = vpack.c.b16 %v2237, %v2233
        %v2574 = vpack.c.b16 %v2238, %v2234
        %v2575 = vpack.c.b16 %v2239, %v2235
        %v2576 = vpack.c.b16 %v2240, %v2236
        %v2577 = vpack.c.b16 %v2245, %v2241
        %v2578 = vpack.c.b16 %v2246, %v2242
        %v2579 = vpack.c.b16 %v2247, %v2243
        %v2580 = vpack.c.b16 %v2248, %v2244
        %v2581 = vpack.c.b16 %v2253, %v2249
        %v2582 = vpack.c.b16 %v2254, %v2250
        %v2583 = vpack.c.b16 %v2255, %v2251
        %v2584 = vpack.c.b16 %v2256, %v2252
        %v2585 = vpack.c.b16 %v2261, %v2257
        %v2586 = vpack.c.b16 %v2262, %v2258
        %v2587 = vpack.c.b16 %v2263, %v2259
        %v2588 = vpack.c.b16 %v2264, %v2260
        %v2589 = vpack.c.b16 %v2269, %v2265
        %v2590 = vpack.c.b16 %v2270, %v2266
        %v2591 = vpack.c.b16 %v2271, %v2267
        %v2592 = vpack.c.b16 %v2272, %v2268
        %v2593 = vpack.c.b16 %v2277, %v2273
        %v2594 = vpack.c.b16 %v2278, %v2274
        %v2595 = vpack.c.b16 %v2279, %v2275
        %v2596 = vpack.c.b16 %v2280, %v2276
        %v2597 = vpack.c.b16 %v2285, %v2281
        %v2598 = vpack.c.b16 %v2286, %v2282
        %v2599 = vpack.c.b16 %v2287, %v2283
        %v2600 = vpack.c.b16 %v2288, %v2284
        %v2601 = vpack.c.b16 %v2293, %v2289
        %v2602 = vpack.c.b16 %v2294, %v2290
        %v2603 = vpack.c.b16 %v2295, %v2291
        %v2604 = vpack.c.b16 %v2296, %v2292
        %v2605 = vpack.c.b16 %v2301, %v2297
        %v2606 = vpack.c.b16 %v2302, %v2298
        %v2607 = vpack.c.b16 %v2303, %v2299
        %v2608 = vpack.c.b16 %v2304, %v2300
        %v2609 = vpack.c.b16 %v2309, %v2305
        %v2610 = vpack.c.b16 %v2310, %v2306
        %v2611 = vpack.c.b16 %v2311, %v2307
        %v2612 = vpack.c.b16 %v2312, %v2308
        %v2613 = vpack.c.b16 %v2317, %v2313
        %v2614 = vpack.c.b16 %v2318, %v2314
        %v2615 = vpack.c.b16 %v2319, %v2315
        %v2616 = vpack.c.b16 %v2320, %v2316
        %v2617 = vpack.c.b16 %v2325, %v2321
        %v2618 = vpack.c.b16 %v2326, %v2322
        %v2619 = vpack.c.b16 %v2327, %v2323
        %v2620 = vpack.c.b16 %v2328, %v2324
        %v2621 = vpack.c.b16 %v2333, %v2329
        %v2622 = vpack.c.b16 %v2334, %v2330
        %v2623 = vpack.c.b16 %v2335, %v2331
        %v2624 = vpack.c.b16 %v2336, %v2332
        %v2625 = vpack.c.b16 %v2341, %v2337
        %v2626 = vpack.c.b16 %v2342, %v2338
        %v2627 = vpack.c.b16 %v2343, %v2339
        %v2628 = vpack.c.b16 %v2344, %v2340
        %v2629 = vpack.c.b16 %v2349, %v2345
        %v2630 = vpack.c.b16 %v2350, %v2346
        %v2631 = vpack.c.b16 %v2351, %v2347
        %v2632 = vpack.c.b16 %v2352, %v2348
        %v2633 = vpack.c.b16 %v2357, %v2353
        %v2634 = vpack.c.b16 %v2358, %v2354
        %v2635 = vpack.c.b16 %v2359, %v2355
        %v2636 = vpack.c.b16 %v2360, %v2356
        %v2637 = vpack.c.b16 %v2365, %v2361
        %v2638 = vpack.c.b16 %v2366, %v2362
        %v2639 = vpack.c.b16 %v2367, %v2363
        %v2640 = vpack.c.b16 %v2368, %v2364
        %v2641 = vpack.c.b16 %v2373, %v2369
        %v2642 = vpack.c.b16 %v2374, %v2370
        %v2643 = vpack.c.b16 %v2375, %v2371
        %v2644 = vpack.c.b16 %v2376, %v2372
        %v2645 = vpack.c.b16 %v2381, %v2377
        %v2646 = vpack.c.b16 %v2382, %v2378
        %v2647 = vpack.c.b16 %v2383, %v2379
        %v2648 = vpack.c.b16 %v2384, %v2380
        %v2649 = vpack.c.b16 %v2389, %v2385
        %v2650 = vpack.c.b16 %v2390, %v2386
        %v2651 = vpack.c.b16 %v2391, %v2387
        %v2652 = vpack.c.b16 %v2392, %v2388
        %v2653 = vpack.c.b16 %v2397, %v2393
        %v2654 = vpack.c.b16 %v2398, %v2394
        %v2655 = vpack.c.b16 %v2399, %v2395
        %v2656 = vpack.c.b16 %v2400, %v2396
        %2913 = vmatprep.subr.bf16.mxu0 %v2402
        %2914 = vmatpush1.bf16.msra.mxu0 %v2401
        %2915 = vmatprep.subr.bf16.mxu0 %v2406
        %2916 = vmatpush1.bf16.msra.mxu0 %v2405
        %2917 = vmatprep.subr.bf16.mxu0 %v2410
        %2918 = vmatpush1.bf16.msra.mxu0 %v2409
        %2919 = vmatprep.subr.bf16.mxu0 %v2414
        %2920 = vmatpush1.bf16.msra.mxu0 %v2413
        %2921 = vmatprep.subr.bf16.mxu0 %v2418
        %2922 = vmatpush1.bf16.msra.mxu0 %v2417
        %2923 = vmatprep.subr.bf16.mxu0 %v2422
        %2924 = vmatpush1.bf16.msra.mxu0 %v2421
        %2925 = vmatprep.subr.bf16.mxu0 %v2426
        %2926 = vmatpush1.bf16.msra.mxu0 %v2425
        %2927 = vmatprep.subr.bf16.mxu0 %v2430
        %2928 = vmatpush1.bf16.msra.mxu0 %v2429
        %2929 = vmatprep.subr.bf16.mxu0 %v2434
        %2930 = vmatpush1.bf16.msra.mxu0 %v2433
        %2931 = vmatprep.subr.bf16.mxu0 %v2438
        %2932 = vmatpush1.bf16.msra.mxu0 %v2437
        %2933 = vmatprep.subr.bf16.mxu0 %v2442
        %2934 = vmatpush1.bf16.msra.mxu0 %v2441
        %2935 = vmatprep.subr.bf16.mxu0 %v2446
        %2936 = vmatpush1.bf16.msra.mxu0 %v2445
        %2937 = vmatprep.subr.bf16.mxu0 %v2450
        %2938 = vmatpush1.bf16.msra.mxu0 %v2449
        %2939 = vmatprep.subr.bf16.mxu0 %v2454
        %2940 = vmatpush1.bf16.msra.mxu0 %v2453
        %2941 = vmatprep.subr.bf16.mxu0 %v2458
        %2942 = vmatpush1.bf16.msra.mxu0 %v2457
        %2943 = vmatprep.subr.bf16.mxu0 %v2462
        %2944 = vmatpush1.bf16.msra.mxu0 %v2461
        %2945 = vmatprep.mubr.bf16.mxu0 %v1348
        %2946 = vmatmul.mubr.bf16.gmra.mrb[0].mxu0 %v1347
        %v2947 = vpop.f32.mrb[0].mxu0
        %v2948 = vadd.f32 %v1616, %v2947
        %v2949 = vpop.f32.mrb[0].mxu0
        %v2950 = vadd.f32 %v1620, %v2949
        %v2951 = vpop.f32.mrb[0].mxu0
        %v2952 = vpop.f32.mrb[0].mxu0
        %2953 = vdwg.mxu0
        %2954 = vmatprep.subr.bf16.mxu0 %v2466
        %2955 = vmatpush1.bf16.msra.mxu0 %v2465
        %2956 = vmatprep.subr.bf16.mxu0 %v2470
        %2957 = vmatpush1.bf16.msra.mxu0 %v2469
        %2958 = vmatprep.subr.bf16.mxu0 %v2474
        %2959 = vmatpush1.bf16.msra.mxu0 %v2473
        %2960 = vmatprep.subr.bf16.mxu0 %v2478
        %2961 = vmatpush1.bf16.msra.mxu0 %v2477
        %2962 = vmatprep.subr.bf16.mxu0 %v2482
        %2963 = vmatpush1.bf16.msra.mxu0 %v2481
        %2964 = vmatprep.subr.bf16.mxu0 %v2486
        %2965 = vmatpush1.bf16.msra.mxu0 %v2485
        %2966 = vmatprep.subr.bf16.mxu0 %v2490
        %2967 = vmatpush1.bf16.msra.mxu0 %v2489
        %2968 = vmatprep.subr.bf16.mxu0 %v2494
        %2969 = vmatpush1.bf16.msra.mxu0 %v2493
        %2970 = vmatprep.subr.bf16.mxu0 %v2498
        %2971 = vmatpush1.bf16.msra.mxu0 %v2497
        %2972 = vmatprep.subr.bf16.mxu0 %v2502
        %2973 = vmatpush1.bf16.msra.mxu0 %v2501
        %2974 = vmatprep.subr.bf16.mxu0 %v2506
        %2975 = vmatpush1.bf16.msra.mxu0 %v2505
        %2976 = vmatprep.subr.bf16.mxu0 %v2510
        %2977 = vmatpush1.bf16.msra.mxu0 %v2509
        %2978 = vmatprep.subr.bf16.mxu0 %v2514
        %2979 = vmatpush1.bf16.msra.mxu0 %v2513
        %2980 = vmatprep.subr.bf16.mxu0 %v2518
        %2981 = vmatpush1.bf16.msra.mxu0 %v2517
        %2982 = vmatprep.subr.bf16.mxu0 %v2522
        %2983 = vmatpush1.bf16.msra.mxu0 %v2521
        %2984 = vmatprep.subr.bf16.mxu0 %v2526
        %2985 = vmatpush1.bf16.msra.mxu0 %v2525
        %2986 = vmatprep.mubr.bf16.mxu0 %v1350
        %2987 = vmatmul.mubr.bf16.gmra.mrb[0].mxu0 %v1349
        %v2988 = vpop.f32.mrb[0].mxu0
        %v2989 = vadd.f32 %v2948, %v2988
        %v2990 = vpop.f32.mrb[0].mxu0
        %v2991 = vadd.f32 %v2950, %v2990
        %v2992 = vpop.f32.mrb[0].mxu0
        %v2993 = vpop.f32.mrb[0].mxu0
        %2994 = vdwg.mxu0
        %2995 = vmatprep.subr.bf16.mxu0 %v2530
        %2996 = vmatpush1.bf16.msra.mxu0 %v2529
        %2997 = vmatprep.subr.bf16.mxu0 %v2534
        %2998 = vmatpush1.bf16.msra.mxu0 %v2533
        %2999 = vmatprep.subr.bf16.mxu0 %v2538
        %3000 = vmatpush1.bf16.msra.mxu0 %v2537
        %3001 = vmatprep.subr.bf16.mxu0 %v2542
        %3002 = vmatpush1.bf16.msra.mxu0 %v2541
        %3003 = vmatprep.subr.bf16.mxu0 %v2546
        %3004 = vmatpush1.bf16.msra.mxu0 %v2545
        %3005 = vmatprep.subr.bf16.mxu0 %v2550
        %3006 = vmatpush1.bf16.msra.mxu0 %v2549
        %3007 = vmatprep.subr.bf16.mxu0 %v2554
        %3008 = vmatpush1.bf16.msra.mxu0 %v2553
        %3009 = vmatprep.subr.bf16.mxu0 %v2558
        %3010 = vmatpush1.bf16.msra.mxu0 %v2557
        %3011 = vmatprep.subr.bf16.mxu0 %v2562
        %3012 = vmatpush1.bf16.msra.mxu0 %v2561
        %3013 = vmatprep.subr.bf16.mxu0 %v2566
        %3014 = vmatpush1.bf16.msra.mxu0 %v2565
        %3015 = vmatprep.subr.bf16.mxu0 %v2570
        %3016 = vmatpush1.bf16.msra.mxu0 %v2569
        %3017 = vmatprep.subr.bf16.mxu0 %v2574
        %3018 = vmatpush1.bf16.msra.mxu0 %v2573
        %3019 = vmatprep.subr.bf16.mxu0 %v2578
        %3020 = vmatpush1.bf16.msra.mxu0 %v2577
        %3021 = vmatprep.subr.bf16.mxu0 %v2582
        %3022 = vmatpush1.bf16.msra.mxu0 %v2581
        %3023 = vmatprep.subr.bf16.mxu0 %v2586
        %3024 = vmatpush1.bf16.msra.mxu0 %v2585
        %3025 = vmatprep.subr.bf16.mxu0 %v2590
        %3026 = vmatpush1.bf16.msra.mxu0 %v2589
        %3027 = vmatprep.mubr.bf16.mxu0 %v1352
        %3028 = vmatmul.mubr.bf16.gmra.mrb[0].mxu0 %v1351
        %v3029 = vpop.f32.mrb[0].mxu0
        %v3030 = vadd.f32 %v2989, %v3029
        %v3031 = vpop.f32.mrb[0].mxu0
        %v3032 = vadd.f32 %v2991, %v3031
        %v3033 = vpop.f32.mrb[0].mxu0
        %v3034 = vpop.f32.mrb[0].mxu0
        %3035 = vdwg.mxu0
        %3036 = vmatprep.subr.bf16.mxu0 %v2594
        %3037 = vmatpush1.bf16.msra.mxu0 %v2593
        %3038 = vmatprep.subr.bf16.mxu0 %v2598
        %3039 = vmatpush1.bf16.msra.mxu0 %v2597
        %3040 = vmatprep.subr.bf16.mxu0 %v2602
        %3041 = vmatpush1.bf16.msra.mxu0 %v2601
        %3042 = vmatprep.subr.bf16.mxu0 %v2606
        %3043 = vmatpush1.bf16.msra.mxu0 %v2605
        %3044 = vmatprep.subr.bf16.mxu0 %v2610
        %3045 = vmatpush1.bf16.msra.mxu0 %v2609
        %3046 = vmatprep.subr.bf16.mxu0 %v2614
        %3047 = vmatpush1.bf16.msra.mxu0 %v2613
        %3048 = vmatprep.subr.bf16.mxu0 %v2618
        %3049 = vmatpush1.bf16.msra.mxu0 %v2617
        %3050 = vmatprep.subr.bf16.mxu0 %v2622
        %3051 = vmatpush1.bf16.msra.mxu0 %v2621
        %3052 = vmatprep.subr.bf16.mxu0 %v2626
        %3053 = vmatpush1.bf16.msra.mxu0 %v2625
        %3054 = vmatprep.subr.bf16.mxu0 %v2630
        %3055 = vmatpush1.bf16.msra.mxu0 %v2629
        %3056 = vmatprep.subr.bf16.mxu0 %v2634
        %3057 = vmatpush1.bf16.msra.mxu0 %v2633
        %3058 = vmatprep.subr.bf16.mxu0 %v2638
        %3059 = vmatpush1.bf16.msra.mxu0 %v2637
        %3060 = vmatprep.subr.bf16.mxu0 %v2642
        %3061 = vmatpush1.bf16.msra.mxu0 %v2641
        %3062 = vmatprep.subr.bf16.mxu0 %v2646
        %3063 = vmatpush1.bf16.msra.mxu0 %v2645
        %3064 = vmatprep.subr.bf16.mxu0 %v2650
        %3065 = vmatpush1.bf16.msra.mxu0 %v2649
        %3066 = vmatprep.subr.bf16.mxu0 %v2654
        %3067 = vmatpush1.bf16.msra.mxu0 %v2653
        %3068 = vmatprep.mubr.bf16.mxu0 %v1354
        %3069 = vmatmul.mubr.bf16.gmra.mrb[0].mxu0 %v1353
        %v3070 = vpop.f32.mrb[0].mxu0
        %v3071 = vadd.f32 %v3030, %v3070
        %v3072 = vpop.f32.mrb[0].mxu0
        %v3073 = vadd.f32 %v3032, %v3072
        %v3074 = vpop.f32.mrb[0].mxu0
        %v3075 = vpop.f32.mrb[0].mxu0
        %3076 = vdwg.mxu0
        %3077 = vmatprep.subr.bf16.mxu0 %v2404
        %3078 = vmatpush1.bf16.msra.mxu0 %v2403
        %3079 = vmatprep.subr.bf16.mxu0 %v2408
        %3080 = vmatpush1.bf16.msra.mxu0 %v2407
        %3081 = vmatprep.subr.bf16.mxu0 %v2412
        %3082 = vmatpush1.bf16.msra.mxu0 %v2411
        %3083 = vmatprep.subr.bf16.mxu0 %v2416
        %3084 = vmatpush1.bf16.msra.mxu0 %v2415
        %3085 = vmatprep.subr.bf16.mxu0 %v2420
        %3086 = vmatpush1.bf16.msra.mxu0 %v2419
        %3087 = vmatprep.subr.bf16.mxu0 %v2424
        %3088 = vmatpush1.bf16.msra.mxu0 %v2423
        %3089 = vmatprep.subr.bf16.mxu0 %v2428
        %3090 = vmatpush1.bf16.msra.mxu0 %v2427
        %3091 = vmatprep.subr.bf16.mxu0 %v2432
        %3092 = vmatpush1.bf16.msra.mxu0 %v2431
        %3093 = vmatprep.subr.bf16.mxu0 %v2436
        %3094 = vmatpush1.bf16.msra.mxu0 %v2435
        %3095 = vmatprep.subr.bf16.mxu0 %v2440
        %3096 = vmatpush1.bf16.msra.mxu0 %v2439
        %3097 = vmatprep.subr.bf16.mxu0 %v2444
        %3098 = vmatpush1.bf16.msra.mxu0 %v2443
        %3099 = vmatprep.subr.bf16.mxu0 %v2448
        %3100 = vmatpush1.bf16.msra.mxu0 %v2447
        %3101 = vmatprep.subr.bf16.mxu0 %v2452
        %3102 = vmatpush1.bf16.msra.mxu0 %v2451
        %3103 = vmatprep.subr.bf16.mxu0 %v2456
        %3104 = vmatpush1.bf16.msra.mxu0 %v2455
        %3105 = vmatprep.subr.bf16.mxu0 %v2460
        %3106 = vmatpush1.bf16.msra.mxu0 %v2459
        %3107 = vmatprep.subr.bf16.mxu0 %v2464
        %3108 = vmatpush1.bf16.msra.mxu0 %v2463
        %3109 = vmatprep.mubr.bf16.mxu0 %v1348
        %3110 = vmatmul.mubr.bf16.gmra.mrb[0].mxu0 %v1347
        %v3111 = vpop.f32.mrb[0].mxu0
        %v3112 = vadd.f32 %v1624, %v3111
        %v3113 = vpop.f32.mrb[0].mxu0
        %v3114 = vadd.f32 %v1628, %v3113
        %v3115 = vpop.f32.mrb[0].mxu0
        %v3116 = vpop.f32.mrb[0].mxu0
        %3117 = vdwg.mxu0
        %3118 = vmatprep.subr.bf16.mxu0 %v2468
        %3119 = vmatpush1.bf16.msra.mxu0 %v2467
        %3120 = vmatprep.subr.bf16.mxu0 %v2472
        %3121 = vmatpush1.bf16.msra.mxu0 %v2471
        %3122 = vmatprep.subr.bf16.mxu0 %v2476
        %3123 = vmatpush1.bf16.msra.mxu0 %v2475
        %3124 = vmatprep.subr.bf16.mxu0 %v2480
        %3125 = vmatpush1.bf16.msra.mxu0 %v2479
        %3126 = vmatprep.subr.bf16.mxu0 %v2484
        %3127 = vmatpush1.bf16.msra.mxu0 %v2483
        %3128 = vmatprep.subr.bf16.mxu0 %v2488
        %3129 = vmatpush1.bf16.msra.mxu0 %v2487
        %3130 = vmatprep.subr.bf16.mxu0 %v2492
        %3131 = vmatpush1.bf16.msra.mxu0 %v2491
        %3132 = vmatprep.subr.bf16.mxu0 %v2496
        %3133 = vmatpush1.bf16.msra.mxu0 %v2495
        %3134 = vmatprep.subr.bf16.mxu0 %v2500
        %3135 = vmatpush1.bf16.msra.mxu0 %v2499
        %3136 = vmatprep.subr.bf16.mxu0 %v2504
        %3137 = vmatpush1.bf16.msra.mxu0 %v2503
        %3138 = vmatprep.subr.bf16.mxu0 %v2508
        %3139 = vmatpush1.bf16.msra.mxu0 %v2507
        %3140 = vmatprep.subr.bf16.mxu0 %v2512
        %3141 = vmatpush1.bf16.msra.mxu0 %v2511
        %3142 = vmatprep.subr.bf16.mxu0 %v2516
        %3143 = vmatpush1.bf16.msra.mxu0 %v2515
        %3144 = vmatprep.subr.bf16.mxu0 %v2520
        %3145 = vmatpush1.bf16.msra.mxu0 %v2519
        %3146 = vmatprep.subr.bf16.mxu0 %v2524
        %3147 = vmatpush1.bf16.msra.mxu0 %v2523
        %3148 = vmatprep.subr.bf16.mxu0 %v2528
        %3149 = vmatpush1.bf16.msra.mxu0 %v2527
        %3150 = vmatprep.mubr.bf16.mxu0 %v1350
        %3151 = vmatmul.mubr.bf16.gmra.mrb[0].mxu0 %v1349
        %v3152 = vpop.f32.mrb[0].mxu0
        %v3153 = vadd.f32 %v3112, %v3152
        %v3154 = vpop.f32.mrb[0].mxu0
        %v3155 = vadd.f32 %v3114, %v3154
        %v3156 = vpop.f32.mrb[0].mxu0
        %v3157 = vpop.f32.mrb[0].mxu0
        %3158 = vdwg.mxu0
        %3159 = vmatprep.subr.bf16.mxu0 %v2532
        %3160 = vmatpush1.bf16.msra.mxu0 %v2531
        %3161 = vmatprep.subr.bf16.mxu0 %v2536
        %3162 = vmatpush1.bf16.msra.mxu0 %v2535
        %3163 = vmatprep.subr.bf16.mxu0 %v2540
        %3164 = vmatpush1.bf16.msra.mxu0 %v2539
        %3165 = vmatprep.subr.bf16.mxu0 %v2544
        %3166 = vmatpush1.bf16.msra.mxu0 %v2543
        %3167 = vmatprep.subr.bf16.mxu0 %v2548
        %3168 = vmatpush1.bf16.msra.mxu0 %v2547
        %3169 = vmatprep.subr.bf16.mxu0 %v2552
        %3170 = vmatpush1.bf16.msra.mxu0 %v2551
        %3171 = vmatprep.subr.bf16.mxu0 %v2556
        %3172 = vmatpush1.bf16.msra.mxu0 %v2555
        %3173 = vmatprep.subr.bf16.mxu0 %v2560
        %3174 = vmatpush1.bf16.msra.mxu0 %v2559
        %3175 = vmatprep.subr.bf16.mxu0 %v2564
        %3176 = vmatpush1.bf16.msra.mxu0 %v2563
        %3177 = vmatprep.subr.bf16.mxu0 %v2568
        %3178 = vmatpush1.bf16.msra.mxu0 %v2567
        %3179 = vmatprep.subr.bf16.mxu0 %v2572
        %3180 = vmatpush1.bf16.msra.mxu0 %v2571
        %3181 = vmatprep.subr.bf16.mxu0 %v2576
        %3182 = vmatpush1.bf16.msra.mxu0 %v2575
        %3183 = vmatprep.subr.bf16.mxu0 %v2580
        %3184 = vmatpush1.bf16.msra.mxu0 %v2579
        %3185 = vmatprep.subr.bf16.mxu0 %v2584
        %3186 = vmatpush1.bf16.msra.mxu0 %v2583
        %3187 = vmatprep.subr.bf16.mxu0 %v2588
        %3188 = vmatpush1.bf16.msra.mxu0 %v2587
        %3189 = vmatprep.subr.bf16.mxu0 %v2592
        %3190 = vmatpush1.bf16.msra.mxu0 %v2591
        %3191 = vmatprep.mubr.bf16.mxu0 %v1352
        %3192 = vmatmul.mubr.bf16.gmra.mrb[0].mxu0 %v1351
        %v3193 = vpop.f32.mrb[0].mxu0
        %v3194 = vadd.f32 %v3153, %v3193
        %v3195 = vpop.f32.mrb[0].mxu0
        %v3196 = vadd.f32 %v3155, %v3195
        %v3197 = vpop.f32.mrb[0].mxu0
        %v3198 = vpop.f32.mrb[0].mxu0
        %3199 = vdwg.mxu0
        %3200 = vmatprep.subr.bf16.mxu0 %v2596
        %3201 = vmatpush1.bf16.msra.mxu0 %v2595
        %3202 = vmatprep.subr.bf16.mxu0 %v2600
        %3203 = vmatpush1.bf16.msra.mxu0 %v2599
        %3204 = vmatprep.subr.bf16.mxu0 %v2604
        %3205 = vmatpush1.bf16.msra.mxu0 %v2603
        %3206 = vmatprep.subr.bf16.mxu0 %v2608
        %3207 = vmatpush1.bf16.msra.mxu0 %v2607
        %3208 = vmatprep.subr.bf16.mxu0 %v2612
        %3209 = vmatpush1.bf16.msra.mxu0 %v2611
        %3210 = vmatprep.subr.bf16.mxu0 %v2616
        %3211 = vmatpush1.bf16.msra.mxu0 %v2615
        %3212 = vmatprep.subr.bf16.mxu0 %v2620
        %3213 = vmatpush1.bf16.msra.mxu0 %v2619
        %3214 = vmatprep.subr.bf16.mxu0 %v2624
        %3215 = vmatpush1.bf16.msra.mxu0 %v2623
        %3216 = vmatprep.subr.bf16.mxu0 %v2628
        %3217 = vmatpush1.bf16.msra.mxu0 %v2627
        %3218 = vmatprep.subr.bf16.mxu0 %v2632
        %3219 = vmatpush1.bf16.msra.mxu0 %v2631
        %3220 = vmatprep.subr.bf16.mxu0 %v2636
        %3221 = vmatpush1.bf16.msra.mxu0 %v2635
        %3222 = vmatprep.subr.bf16.mxu0 %v2640
        %3223 = vmatpush1.bf16.msra.mxu0 %v2639
        %3224 = vmatprep.subr.bf16.mxu0 %v2644
        %3225 = vmatpush1.bf16.msra.mxu0 %v2643
        %3226 = vmatprep.subr.bf16.mxu0 %v2648
        %3227 = vmatpush1.bf16.msra.mxu0 %v2647
        %3228 = vmatprep.subr.bf16.mxu0 %v2652
        %3229 = vmatpush1.bf16.msra.mxu0 %v2651
        %3230 = vmatprep.subr.bf16.mxu0 %v2656
        %3231 = vmatpush1.bf16.msra.mxu0 %v2655
        %3232 = vmatprep.mubr.bf16.mxu0 %v1354
        %3233 = vmatmul.mubr.bf16.gmra.mrb[0].mxu0 %v1353
        %v3234 = vpop.f32.mrb[0].mxu0
        %v3235 = vadd.f32 %v3194, %v3234
        %v3236 = vpop.f32.mrb[0].mxu0
        %v3237 = vadd.f32 %v3196, %v3236
        %v3238 = vpop.f32.mrb[0].mxu0
        %v3239 = vpop.f32.mrb[0].mxu0
        %3240 = vdwg.mxu0
        %v3241 = vmax.f32 %v3071, 0.0
        %v3242 = vmax.f32 %v3073, 0.0
        %v3243 = vmax.f32 %v3235, 0.0
        %v3244 = vmax.f32 %v3237, 0.0
        %v3245 = vpack.c.bf16 %v3241, %v3241
        %v3246 = vpack.c.bf16 %v3242, %v3242
        %v3247 = vpack.c.bf16 %v3243, %v3243
        %v3248 = vpack.c.bf16 %v3244, %v3244
        %v3249 = vld [vmem:[#allocation6] sm:$0xff]
        %v3250 = vld [vmem:[#allocation6 + $0x8] sm:$0xff]
        %v3251 = vld [vmem:[#allocation6 + $0x10] sm:$0xff]
        %v3252 = vld [vmem:[#allocation6 + $0x18] sm:$0xff]
        %v3253 = vld [vmem:[#allocation6 + $0x20] sm:$0xff]
        %v3254 = vld [vmem:[#allocation6 + $0x28] sm:$0xff]
        %v3255 = vld [vmem:[#allocation6 + $0x30] sm:$0xff]
        %v3256 = vld [vmem:[#allocation6 + $0x38] sm:$0xff]
        %v3257 = vld [vmem:[#allocation6 + $0x40] sm:$0xff]
        %v3258 = vld [vmem:[#allocation6 + $0x48] sm:$0xff]
        %v3259 = vld [vmem:[#allocation6 + $0x50] sm:$0xff]
        %v3260 = vld [vmem:[#allocation6 + $0x58] sm:$0xff]
        %v3261 = vld [vmem:[#allocation6 + $0x60] sm:$0xff]
        %v3262 = vld [vmem:[#allocation6 + $0x68] sm:$0xff]
        %v3263 = vld [vmem:[#allocation6 + $0x70] sm:$0xff]
        %v3264 = vld [vmem:[#allocation6 + $0x78] sm:$0xff]
        %v3265 = vld [vmem:[#allocation6 + $0x80] sm:$0xff]
        %v3266 = vld [vmem:[#allocation6 + $0x88] sm:$0xff]
        %v3267 = vld [vmem:[#allocation6 + $0x90] sm:$0xff]
        %v3268 = vld [vmem:[#allocation6 + $0x98] sm:$0xff]
        %v3269 = vld [vmem:[#allocation6 + $0xa0] sm:$0xff]
        %v3270 = vld [vmem:[#allocation6 + $0xa8] sm:$0xff]
        %v3271 = vld [vmem:[#allocation6 + $0xb0] sm:$0xff]
        %v3272 = vld [vmem:[#allocation6 + $0xb8] sm:$0xff]
        %v3273 = vld [vmem:[#allocation6 + $0xc0] sm:$0xff]
        %v3274 = vld [vmem:[#allocation6 + $0xc8] sm:$0xff]
        %v3275 = vld [vmem:[#allocation6 + $0xd0] sm:$0xff]
        %v3276 = vld [vmem:[#allocation6 + $0xd8] sm:$0xff]
        %v3277 = vld [vmem:[#allocation6 + $0xe0] sm:$0xff]
        %v3278 = vld [vmem:[#allocation6 + $0xe8] sm:$0xff]
        %v3279 = vld [vmem:[#allocation6 + $0xf0] sm:$0xff]
        %v3280 = vld [vmem:[#allocation6 + $0xf8] sm:$0xff]
        %v3281 = vld [vmem:[#allocation6 + $0x100] sm:$0xff]
        %v3282 = vld [vmem:[#allocation6 + $0x108] sm:$0xff]
        %v3283 = vld [vmem:[#allocation6 + $0x110] sm:$0xff]
        %v3284 = vld [vmem:[#allocation6 + $0x118] sm:$0xff]
        %v3285 = vld [vmem:[#allocation6 + $0x120] sm:$0xff]
        %v3286 = vld [vmem:[#allocation6 + $0x128] sm:$0xff]
        %v3287 = vld [vmem:[#allocation6 + $0x130] sm:$0xff]
        %v3288 = vld [vmem:[#allocation6 + $0x138] sm:$0xff]
        %v3289 = vld [vmem:[#allocation6 + $0x140] sm:$0xff]
        %v3290 = vld [vmem:[#allocation6 + $0x148] sm:$0xff]
        %v3291 = vld [vmem:[#allocation6 + $0x150] sm:$0xff]
        %v3292 = vld [vmem:[#allocation6 + $0x158] sm:$0xff]
        %v3293 = vld [vmem:[#allocation6 + $0x160] sm:$0xff]
        %v3294 = vld [vmem:[#allocation6 + $0x168] sm:$0xff]
        %v3295 = vld [vmem:[#allocation6 + $0x170] sm:$0xff]
        %v3296 = vld [vmem:[#allocation6 + $0x178] sm:$0xff]
        %v3297 = vld [vmem:[#allocation6 + $0x180] sm:$0xff]
        %v3298 = vld [vmem:[#allocation6 + $0x188] sm:$0xff]
        %v3299 = vld [vmem:[#allocation6 + $0x190] sm:$0xff]
        %v3300 = vld [vmem:[#allocation6 + $0x198] sm:$0xff]
        %v3301 = vld [vmem:[#allocation6 + $0x1a0] sm:$0xff]
        %v3302 = vld [vmem:[#allocation6 + $0x1a8] sm:$0xff]
        %v3303 = vld [vmem:[#allocation6 + $0x1b0] sm:$0xff]
        %v3304 = vld [vmem:[#allocation6 + $0x1b8] sm:$0xff]
        %v3305 = vld [vmem:[#allocation6 + $0x1c0] sm:$0xff]
        %v3306 = vld [vmem:[#allocation6 + $0x1c8] sm:$0xff]
        %v3307 = vld [vmem:[#allocation6 + $0x1d0] sm:$0xff]
        %v3308 = vld [vmem:[#allocation6 + $0x1d8] sm:$0xff]
        %v3309 = vld [vmem:[#allocation6 + $0x1e0] sm:$0xff]
        %v3310 = vld [vmem:[#allocation6 + $0x1e8] sm:$0xff]
        %v3311 = vld [vmem:[#allocation6 + $0x1f0] sm:$0xff]
        %v3312 = vld [vmem:[#allocation6 + $0x1f8] sm:$0xff]
        %v3313 = vld [vmem:[%s7] sm:$0x3]
        %v3315 = vlaneseq
        %v3316 = vshrl.u32 %v3315, 7
        %v3317 = vsub.s32 0, %v3316
        %v3318 = vrot.slane %v3313, %v3317
        %v3319 = vlaneseq
        %v3320 = vshrl.u32 %v3319, 7
        %v3321 = vsub.s32 1, %v3320
        %v3322 = vrot.slane %v3313, %v3321
        %v3389 = vunpack.c.l.b16 %v3249
        %v3390 = vunpack.c.h.b16 %v3249
        %v3391 = vunpack.c.l.b16 %v3250
        %v3392 = vunpack.c.h.b16 %v3250
        %v3393 = vunpack.c.l.b16 %v3251
        %v3394 = vunpack.c.h.b16 %v3251
        %v3395 = vunpack.c.l.b16 %v3252
        %v3396 = vunpack.c.h.b16 %v3252
        %v3397 = vunpack.c.l.b16 %v3253
        %v3398 = vunpack.c.h.b16 %v3253
        %v3399 = vunpack.c.l.b16 %v3254
        %v3400 = vunpack.c.h.b16 %v3254
        %v3401 = vunpack.c.l.b16 %v3255
        %v3402 = vunpack.c.h.b16 %v3255
        %v3403 = vunpack.c.l.b16 %v3256
        %v3404 = vunpack.c.h.b16 %v3256
        %v3405 = vunpack.c.l.b16 %v3257
        %v3406 = vunpack.c.h.b16 %v3257
        %v3407 = vunpack.c.l.b16 %v3258
        %v3408 = vunpack.c.h.b16 %v3258
        %v3409 = vunpack.c.l.b16 %v3259
        %v3410 = vunpack.c.h.b16 %v3259
        %v3411 = vunpack.c.l.b16 %v3260
        %v3412 = vunpack.c.h.b16 %v3260
        %v3413 = vunpack.c.l.b16 %v3261
        %v3414 = vunpack.c.h.b16 %v3261
        %v3415 = vunpack.c.l.b16 %v3262
        %v3416 = vunpack.c.h.b16 %v3262
        %v3417 = vunpack.c.l.b16 %v3263
        %v3418 = vunpack.c.h.b16 %v3263
        %v3419 = vunpack.c.l.b16 %v3264
        %v3420 = vunpack.c.h.b16 %v3264
        %v3421 = vunpack.c.l.b16 %v3265
        %v3422 = vunpack.c.h.b16 %v3265
        %v3423 = vunpack.c.l.b16 %v3266
        %v3424 = vunpack.c.h.b16 %v3266
        %v3425 = vunpack.c.l.b16 %v3267
        %v3426 = vunpack.c.h.b16 %v3267
        %v3427 = vunpack.c.l.b16 %v3268
        %v3428 = vunpack.c.h.b16 %v3268
        %v3429 = vunpack.c.l.b16 %v3269
        %v3430 = vunpack.c.h.b16 %v3269
        %v3431 = vunpack.c.l.b16 %v3270
        %v3432 = vunpack.c.h.b16 %v3270
        %v3433 = vunpack.c.l.b16 %v3271
        %v3434 = vunpack.c.h.b16 %v3271
        %v3435 = vunpack.c.l.b16 %v3272
        %v3436 = vunpack.c.h.b16 %v3272
        %v3437 = vunpack.c.l.b16 %v3273
        %v3438 = vunpack.c.h.b16 %v3273
        %v3439 = vunpack.c.l.b16 %v3274
        %v3440 = vunpack.c.h.b16 %v3274
        %v3441 = vunpack.c.l.b16 %v3275
        %v3442 = vunpack.c.h.b16 %v3275
        %v3443 = vunpack.c.l.b16 %v3276
        %v3444 = vunpack.c.h.b16 %v3276
        %v3445 = vunpack.c.l.b16 %v3277
        %v3446 = vunpack.c.h.b16 %v3277
        %v3447 = vunpack.c.l.b16 %v3278
        %v3448 = vunpack.c.h.b16 %v3278
        %v3449 = vunpack.c.l.b16 %v3279
        %v3450 = vunpack.c.h.b16 %v3279
        %v3451 = vunpack.c.l.b16 %v3280
        %v3452 = vunpack.c.h.b16 %v3280
        %v3453 = vunpack.c.l.b16 %v3281
        %v3454 = vunpack.c.h.b16 %v3281
        %v3455 = vunpack.c.l.b16 %v3282
        %v3456 = vunpack.c.h.b16 %v3282
        %v3457 = vunpack.c.l.b16 %v3283
        %v3458 = vunpack.c.h.b16 %v3283
        %v3459 = vunpack.c.l.b16 %v3284
        %v3460 = vunpack.c.h.b16 %v3284
        %v3461 = vunpack.c.l.b16 %v3285
        %v3462 = vunpack.c.h.b16 %v3285
        %v3463 = vunpack.c.l.b16 %v3286
        %v3464 = vunpack.c.h.b16 %v3286
        %v3465 = vunpack.c.l.b16 %v3287
        %v3466 = vunpack.c.h.b16 %v3287
        %v3467 = vunpack.c.l.b16 %v3288
        %v3468 = vunpack.c.h.b16 %v3288
        %v3469 = vunpack.c.l.b16 %v3289
        %v3470 = vunpack.c.h.b16 %v3289
        %v3471 = vunpack.c.l.b16 %v3290
        %v3472 = vunpack.c.h.b16 %v3290
        %v3473 = vunpack.c.l.b16 %v3291
        %v3474 = vunpack.c.h.b16 %v3291
        %v3475 = vunpack.c.l.b16 %v3292
        %v3476 = vunpack.c.h.b16 %v3292
        %v3477 = vunpack.c.l.b16 %v3293
        %v3478 = vunpack.c.h.b16 %v3293
        %v3479 = vunpack.c.l.b16 %v3294
        %v3480 = vunpack.c.h.b16 %v3294
        %v3481 = vunpack.c.l.b16 %v3295
        %v3482 = vunpack.c.h.b16 %v3295
        %v3483 = vunpack.c.l.b16 %v3296
        %v3484 = vunpack.c.h.b16 %v3296
        %v3485 = vunpack.c.l.b16 %v3297
        %v3486 = vunpack.c.h.b16 %v3297
        %v3487 = vunpack.c.l.b16 %v3298
        %v3488 = vunpack.c.h.b16 %v3298
        %v3489 = vunpack.c.l.b16 %v3299
        %v3490 = vunpack.c.h.b16 %v3299
        %v3491 = vunpack.c.l.b16 %v3300
        %v3492 = vunpack.c.h.b16 %v3300
        %v3493 = vunpack.c.l.b16 %v3301
        %v3494 = vunpack.c.h.b16 %v3301
        %v3495 = vunpack.c.l.b16 %v3302
        %v3496 = vunpack.c.h.b16 %v3302
        %v3497 = vunpack.c.l.b16 %v3303
        %v3498 = vunpack.c.h.b16 %v3303
        %v3499 = vunpack.c.l.b16 %v3304
        %v3500 = vunpack.c.h.b16 %v3304
        %v3501 = vunpack.c.l.b16 %v3305
        %v3502 = vunpack.c.h.b16 %v3305
        %v3503 = vunpack.c.l.b16 %v3306
        %v3504 = vunpack.c.h.b16 %v3306
        %v3505 = vunpack.c.l.b16 %v3307
        %v3506 = vunpack.c.h.b16 %v3307
        %v3507 = vunpack.c.l.b16 %v3308
        %v3508 = vunpack.c.h.b16 %v3308
        %v3509 = vunpack.c.l.b16 %v3309
        %v3510 = vunpack.c.h.b16 %v3309
        %v3511 = vunpack.c.l.b16 %v3310
        %v3512 = vunpack.c.h.b16 %v3310
        %v3513 = vunpack.c.l.b16 %v3311
        %v3514 = vunpack.c.h.b16 %v3311
        %v3515 = vunpack.c.l.b16 %v3312
        %v3516 = vunpack.c.h.b16 %v3312
        %v3517 = vpack.c.b16 %v3391, %v3389
        %v3518 = vpack.c.b16 %v3392, %v3390
        %v3519 = vpack.c.b16 %v3395, %v3393
        %v3520 = vpack.c.b16 %v3396, %v3394
        %v3521 = vpack.c.b16 %v3399, %v3397
        %v3522 = vpack.c.b16 %v3400, %v3398
        %v3523 = vpack.c.b16 %v3403, %v3401
        %v3524 = vpack.c.b16 %v3404, %v3402
        %v3525 = vpack.c.b16 %v3407, %v3405
        %v3526 = vpack.c.b16 %v3408, %v3406
        %v3527 = vpack.c.b16 %v3411, %v3409
        %v3528 = vpack.c.b16 %v3412, %v3410
        %v3529 = vpack.c.b16 %v3415, %v3413
        %v3530 = vpack.c.b16 %v3416, %v3414
        %v3531 = vpack.c.b16 %v3419, %v3417
        %v3532 = vpack.c.b16 %v3420, %v3418
        %v3533 = vpack.c.b16 %v3423, %v3421
        %v3534 = vpack.c.b16 %v3424, %v3422
        %v3535 = vpack.c.b16 %v3427, %v3425
        %v3536 = vpack.c.b16 %v3428, %v3426
        %v3537 = vpack.c.b16 %v3431, %v3429
        %v3538 = vpack.c.b16 %v3432, %v3430
        %v3539 = vpack.c.b16 %v3435, %v3433
        %v3540 = vpack.c.b16 %v3436, %v3434
        %v3541 = vpack.c.b16 %v3439, %v3437
        %v3542 = vpack.c.b16 %v3440, %v3438
        %v3543 = vpack.c.b16 %v3443, %v3441
        %v3544 = vpack.c.b16 %v3444, %v3442
        %v3545 = vpack.c.b16 %v3447, %v3445
        %v3546 = vpack.c.b16 %v3448, %v3446
        %v3547 = vpack.c.b16 %v3451, %v3449
        %v3548 = vpack.c.b16 %v3452, %v3450
        %v3549 = vpack.c.b16 %v3455, %v3453
        %v3550 = vpack.c.b16 %v3456, %v3454
        %v3551 = vpack.c.b16 %v3459, %v3457
        %v3552 = vpack.c.b16 %v3460, %v3458
        %v3553 = vpack.c.b16 %v3463, %v3461
        %v3554 = vpack.c.b16 %v3464, %v3462
        %v3555 = vpack.c.b16 %v3467, %v3465
        %v3556 = vpack.c.b16 %v3468, %v3466
        %v3557 = vpack.c.b16 %v3471, %v3469
        %v3558 = vpack.c.b16 %v3472, %v3470
        %v3559 = vpack.c.b16 %v3475, %v3473
        %v3560 = vpack.c.b16 %v3476, %v3474
        %v3561 = vpack.c.b16 %v3479, %v3477
        %v3562 = vpack.c.b16 %v3480, %v3478
        %v3563 = vpack.c.b16 %v3483, %v3481
        %v3564 = vpack.c.b16 %v3484, %v3482
        %v3565 = vpack.c.b16 %v3487, %v3485
        %v3566 = vpack.c.b16 %v3488, %v3486
        %v3567 = vpack.c.b16 %v3491, %v3489
        %v3568 = vpack.c.b16 %v3492, %v3490
        %v3569 = vpack.c.b16 %v3495, %v3493
        %v3570 = vpack.c.b16 %v3496, %v3494
        %v3571 = vpack.c.b16 %v3499, %v3497
        %v3572 = vpack.c.b16 %v3500, %v3498
        %v3573 = vpack.c.b16 %v3503, %v3501
        %v3574 = vpack.c.b16 %v3504, %v3502
        %v3575 = vpack.c.b16 %v3507, %v3505
        %v3576 = vpack.c.b16 %v3508, %v3506
        %v3577 = vpack.c.b16 %v3511, %v3509
        %v3578 = vpack.c.b16 %v3512, %v3510
        %v3579 = vpack.c.b16 %v3515, %v3513
        %v3580 = vpack.c.b16 %v3516, %v3514
        %3645 = vmatprep.subr.bf16.mxu0 %v3518
        %3646 = vmatpush1.bf16.msra.mxu0 %v3517
        %3647 = vmatprep.subr.bf16.mxu0 %v3520
        %3648 = vmatpush1.bf16.msra.mxu0 %v3519
        %3649 = vmatprep.subr.bf16.mxu0 %v3522
        %3650 = vmatpush1.bf16.msra.mxu0 %v3521
        %3651 = vmatprep.subr.bf16.mxu0 %v3524
        %3652 = vmatpush1.bf16.msra.mxu0 %v3523
        %3653 = vmatprep.subr.bf16.mxu0 %v3526
        %3654 = vmatpush1.bf16.msra.mxu0 %v3525
        %3655 = vmatprep.subr.bf16.mxu0 %v3528
        %3656 = vmatpush1.bf16.msra.mxu0 %v3527
        %3657 = vmatprep.subr.bf16.mxu0 %v3530
        %3658 = vmatpush1.bf16.msra.mxu0 %v3529
        %3659 = vmatprep.subr.bf16.mxu0 %v3532
        %3660 = vmatpush1.bf16.msra.mxu0 %v3531
        %3661 = vmatprep.subr.bf16.mxu0 %v3534
        %3662 = vmatpush1.bf16.msra.mxu0 %v3533
        %3663 = vmatprep.subr.bf16.mxu0 %v3536
        %3664 = vmatpush1.bf16.msra.mxu0 %v3535
        %3665 = vmatprep.subr.bf16.mxu0 %v3538
        %3666 = vmatpush1.bf16.msra.mxu0 %v3537
        %3667 = vmatprep.subr.bf16.mxu0 %v3540
        %3668 = vmatpush1.bf16.msra.mxu0 %v3539
        %3669 = vmatprep.subr.bf16.mxu0 %v3542
        %3670 = vmatpush1.bf16.msra.mxu0 %v3541
        %3671 = vmatprep.subr.bf16.mxu0 %v3544
        %3672 = vmatpush1.bf16.msra.mxu0 %v3543
        %3673 = vmatprep.subr.bf16.mxu0 %v3546
        %3674 = vmatpush1.bf16.msra.mxu0 %v3545
        %3675 = vmatprep.subr.bf16.mxu0 %v3548
        %3676 = vmatpush1.bf16.msra.mxu0 %v3547
        %3677 = vmatprep.mubr.bf16.mxu0 %v3246
        %3678 = vmatmul.mubr.bf16.gmra.mrb[0].mxu0 %v3245
        %v3679 = vpop.f32.mrb[0].mxu0
        %v3680 = vadd.f32 %v3318, %v3679
        %v3681 = vpop.f32.mrb[0].mxu0
        %v3682 = vadd.f32 %v3322, %v3681
        %v3683 = vpop.f32.mrb[0].mxu0
        %v3684 = vpop.f32.mrb[0].mxu0
        %3685 = vdwg.mxu0
        %3686 = vmatprep.subr.bf16.mxu0 %v3550
        %3687 = vmatpush1.bf16.msra.mxu0 %v3549
        %3688 = vmatprep.subr.bf16.mxu0 %v3552
        %3689 = vmatpush1.bf16.msra.mxu0 %v3551
        %3690 = vmatprep.subr.bf16.mxu0 %v3554
        %3691 = vmatpush1.bf16.msra.mxu0 %v3553
        %3692 = vmatprep.subr.bf16.mxu0 %v3556
        %3693 = vmatpush1.bf16.msra.mxu0 %v3555
        %3694 = vmatprep.subr.bf16.mxu0 %v3558
        %3695 = vmatpush1.bf16.msra.mxu0 %v3557
        %3696 = vmatprep.subr.bf16.mxu0 %v3560
        %3697 = vmatpush1.bf16.msra.mxu0 %v3559
        %3698 = vmatprep.subr.bf16.mxu0 %v3562
        %3699 = vmatpush1.bf16.msra.mxu0 %v3561
        %3700 = vmatprep.subr.bf16.mxu0 %v3564
        %3701 = vmatpush1.bf16.msra.mxu0 %v3563
        %3702 = vmatprep.subr.bf16.mxu0 %v3566
        %3703 = vmatpush1.bf16.msra.mxu0 %v3565
        %3704 = vmatprep.subr.bf16.mxu0 %v3568
        %3705 = vmatpush1.bf16.msra.mxu0 %v3567
        %3706 = vmatprep.subr.bf16.mxu0 %v3570
        %3707 = vmatpush1.bf16.msra.mxu0 %v3569
        %3708 = vmatprep.subr.bf16.mxu0 %v3572
        %3709 = vmatpush1.bf16.msra.mxu0 %v3571
        %3710 = vmatprep.subr.bf16.mxu0 %v3574
        %3711 = vmatpush1.bf16.msra.mxu0 %v3573
        %3712 = vmatprep.subr.bf16.mxu0 %v3576
        %3713 = vmatpush1.bf16.msra.mxu0 %v3575
        %3714 = vmatprep.subr.bf16.mxu0 %v3578
        %3715 = vmatpush1.bf16.msra.mxu0 %v3577
        %3716 = vmatprep.subr.bf16.mxu0 %v3580
        %3717 = vmatpush1.bf16.msra.mxu0 %v3579
        %3718 = vmatprep.mubr.bf16.mxu0 %v3248
        %3719 = vmatmul.mubr.bf16.gmra.mrb[0].mxu0 %v3247
        %v3720 = vpop.f32.mrb[0].mxu0
        %v3721 = vadd.f32 %v3680, %v3720
        %v3722 = vpop.f32.mrb[0].mxu0
        %v3723 = vadd.f32 %v3682, %v3722
        %v3724 = vpop.f32.mrb[0].mxu0
        %v3725 = vpop.f32.mrb[0].mxu0
        %3726 = vdwg.mxu0
        %v3727 = vmax.f32 %v3721, 0.0
        %v3728 = vmax.f32 %v3723, 0.0
        %v3729 = vpack.c.bf16 %v3727, %v3727
        %v3730 = vpack.c.bf16 %v3728, %v3728
        %v3731 = vld [vmem:[%s4] sm:$0xf]
        %v3732 = vld [vmem:[%s4 + $0x4] sm:$0xf]
        %v3733 = vld [vmem:[%s4 + $0x8] sm:$0xf]
        %v3734 = vld [vmem:[%s4 + $0xc] sm:$0xf]
        %v3735 = vld [vmem:[%s4 + $0x10] sm:$0xf]
        %v3736 = vld [vmem:[%s4 + $0x14] sm:$0xf]
        %v3737 = vld [vmem:[%s4 + $0x18] sm:$0xf]
        %v3738 = vld [vmem:[%s4 + $0x1c] sm:$0xf]
        %v3739 = vld [vmem:[%s4 + $0x20] sm:$0xf]
        %v3740 = vld [vmem:[%s4 + $0x24] sm:$0xf]
        %v3741 = vld [vmem:[%s4 + $0x28] sm:$0xf]
        %v3742 = vld [vmem:[%s4 + $0x2c] sm:$0xf]
        %v3743 = vld [vmem:[%s4 + $0x30] sm:$0xf]
        %v3744 = vld [vmem:[%s4 + $0x34] sm:$0xf]
        %v3745 = vld [vmem:[%s4 + $0x38] sm:$0xf]
        %v3746 = vld [vmem:[%s4 + $0x3c] sm:$0xf]
        %v3747 = vld [vmem:[%s4 + $0x40] sm:$0xf]
        %v3748 = vld [vmem:[%s4 + $0x44] sm:$0xf]
        %v3749 = vld [vmem:[%s4 + $0x48] sm:$0xf]
        %v3750 = vld [vmem:[%s4 + $0x4c] sm:$0xf]
        %v3751 = vld [vmem:[%s4 + $0x50] sm:$0xf]
        %v3752 = vld [vmem:[%s4 + $0x54] sm:$0xf]
        %v3753 = vld [vmem:[%s4 + $0x58] sm:$0xf]
        %v3754 = vld [vmem:[%s4 + $0x5c] sm:$0xf]
        %v3755 = vld [vmem:[%s4 + $0x60] sm:$0xf]
        %v3756 = vld [vmem:[%s4 + $0x64] sm:$0xf]
        %v3757 = vld [vmem:[%s4 + $0x68] sm:$0xf]
        %v3758 = vld [vmem:[%s4 + $0x6c] sm:$0xf]
        %v3759 = vld [vmem:[%s4 + $0x70] sm:$0xf]
        %v3760 = vld [vmem:[%s4 + $0x74] sm:$0xf]
        %v3761 = vld [vmem:[%s4 + $0x78] sm:$0xf]
        %v3762 = vld [vmem:[%s4 + $0x7c] sm:$0xf]
        %v3763 = vld [vmem:[%s8] sm:$0x1]
        %v3765 = vlaneseq
        %v3766 = vshrl.u32 %v3765, 7
        %v3767 = vsub.s32 0, %v3766
        %v3768 = vrot.slane %v3763, %v3767
        %v3802 = vunpack.c.l.b16 %v3731
        %v3803 = vunpack.c.l.b16 %v3732
        %v3804 = vunpack.c.l.b16 %v3733
        %v3805 = vunpack.c.l.b16 %v3734
        %v3806 = vunpack.c.l.b16 %v3735
        %v3807 = vunpack.c.l.b16 %v3736
        %v3808 = vunpack.c.l.b16 %v3737
        %v3809 = vunpack.c.l.b16 %v3738
        %v3810 = vunpack.c.l.b16 %v3739
        %v3811 = vunpack.c.l.b16 %v3740
        %v3812 = vunpack.c.l.b16 %v3741
        %v3813 = vunpack.c.l.b16 %v3742
        %v3814 = vunpack.c.l.b16 %v3743
        %v3815 = vunpack.c.l.b16 %v3744
        %v3816 = vunpack.c.l.b16 %v3745
        %v3817 = vunpack.c.l.b16 %v3746
        %v3818 = vunpack.c.l.b16 %v3747
        %v3819 = vunpack.c.l.b16 %v3748
        %v3820 = vunpack.c.l.b16 %v3749
        %v3821 = vunpack.c.l.b16 %v3750
        %v3822 = vunpack.c.l.b16 %v3751
        %v3823 = vunpack.c.l.b16 %v3752
        %v3824 = vunpack.c.l.b16 %v3753
        %v3825 = vunpack.c.l.b16 %v3754
        %v3826 = vunpack.c.l.b16 %v3755
        %v3827 = vunpack.c.l.b16 %v3756
        %v3828 = vunpack.c.l.b16 %v3757
        %v3829 = vunpack.c.l.b16 %v3758
        %v3830 = vunpack.c.l.b16 %v3759
        %v3831 = vunpack.c.l.b16 %v3760
        %v3832 = vunpack.c.l.b16 %v3761
        %v3833 = vunpack.c.l.b16 %v3762
        %v3834 = vpack.c.b16 %v3803, %v3802
        %v3835 = vpack.c.b16 %v3805, %v3804
        %v3836 = vpack.c.b16 %v3807, %v3806
        %v3837 = vpack.c.b16 %v3809, %v3808
        %v3838 = vpack.c.b16 %v3811, %v3810
        %v3839 = vpack.c.b16 %v3813, %v3812
        %v3840 = vpack.c.b16 %v3815, %v3814
        %v3841 = vpack.c.b16 %v3817, %v3816
        %v3842 = vpack.c.b16 %v3819, %v3818
        %v3843 = vpack.c.b16 %v3821, %v3820
        %v3844 = vpack.c.b16 %v3823, %v3822
        %v3845 = vpack.c.b16 %v3825, %v3824
        %v3846 = vpack.c.b16 %v3827, %v3826
        %v3847 = vpack.c.b16 %v3829, %v3828
        %v3848 = vpack.c.b16 %v3831, %v3830
        %v3849 = vpack.c.b16 %v3833, %v3832
        %3866 = vmatprep.subr.bf16.mxu0 0
        %3867 = vmatpush1.bf16.msra.mxu0 %v3834
        %3868 = vmatprep.subr.bf16.mxu0 0
        %3869 = vmatpush1.bf16.msra.mxu0 %v3835
        %3870 = vmatprep.subr.bf16.mxu0 0
        %3871 = vmatpush1.bf16.msra.mxu0 %v3836
        %3872 = vmatprep.subr.bf16.mxu0 0
        %3873 = vmatpush1.bf16.msra.mxu0 %v3837
        %3874 = vmatprep.subr.bf16.mxu0 0
        %3875 = vmatpush1.bf16.msra.mxu0 %v3838
        %3876 = vmatprep.subr.bf16.mxu0 0
        %3877 = vmatpush1.bf16.msra.mxu0 %v3839
        %3878 = vmatprep.subr.bf16.mxu0 0
        %3879 = vmatpush1.bf16.msra.mxu0 %v3840
        %3880 = vmatprep.subr.bf16.mxu0 0
        %3881 = vmatpush1.bf16.msra.mxu0 %v3841
        %3882 = vmatprep.subr.bf16.mxu0 0
        %3883 = vmatpush1.bf16.msra.mxu0 %v3842
        %3884 = vmatprep.subr.bf16.mxu0 0
        %3885 = vmatpush1.bf16.msra.mxu0 %v3843
        %3886 = vmatprep.subr.bf16.mxu0 0
        %3887 = vmatpush1.bf16.msra.mxu0 %v3844
        %3888 = vmatprep.subr.bf16.mxu0 0
        %3889 = vmatpush1.bf16.msra.mxu0 %v3845
        %3890 = vmatprep.subr.bf16.mxu0 0
        %3891 = vmatpush1.bf16.msra.mxu0 %v3846
        %3892 = vmatprep.subr.bf16.mxu0 0
        %3893 = vmatpush1.bf16.msra.mxu0 %v3847
        %3894 = vmatprep.subr.bf16.mxu0 0
        %3895 = vmatpush1.bf16.msra.mxu0 %v3848
        %3896 = vmatprep.subr.bf16.mxu0 0
        %3897 = vmatpush1.bf16.msra.mxu0 %v3849
        %3898 = vmatprep.mubr.bf16.mxu0 %v3730
        %3899 = vmatmul.mubr.bf16.gmra.mrb[0].mxu0 %v3729
        %v3900 = vpop.f32.mrb[0].mxu0
        %v3901 = vadd.f32 %v3768, %v3900
        %v3902 = vpop.f32.mrb[0].mxu0
        %v3903 = vpop.f32.mrb[0].mxu0
        %v3904 = vpop.f32.mrb[0].mxu0
        %3905 = vdwg.mxu0
        %v3906 = vmax.f32 %v3901, 0.0
        %v3907 = vpack.c.bf16 %v3906, %v3906
        %v3908 = vld [vmem:[%s5] sm:$0xf]
        %v3909 = vld [vmem:[%s5 + $0x4] sm:$0xf]
        %v3910 = vld [vmem:[%s5 + $0x8] sm:$0xf]
        %v3911 = vld [vmem:[%s5 + $0xc] sm:$0xf]
        %v3912 = vld [vmem:[%s5 + $0x10] sm:$0xf]
        %v3913 = vld [vmem:[%s5 + $0x14] sm:$0xf]
        %v3914 = vld [vmem:[%s5 + $0x18] sm:$0xf]
        %v3915 = vld [vmem:[%s5 + $0x1c] sm:$0xf]
        %v3916 = vld [vmem:[%s5 + $0x20] sm:$0xf]
        %v3917 = vld [vmem:[%s5 + $0x24] sm:$0xf]
        %v3918 = vld [vmem:[%s5 + $0x28] sm:$0xf]
        %v3919 = vld [vmem:[%s5 + $0x2c] sm:$0xf]
        %v3920 = vld [vmem:[%s5 + $0x30] sm:$0xf]
        %v3921 = vld [vmem:[%s5 + $0x34] sm:$0xf]
        %v3922 = vld [vmem:[%s5 + $0x38] sm:$0xf]
        %v3923 = vld [vmem:[%s5 + $0x3c] sm:$0xf]
        %v3924 = vld [vmem:[%s9] sm:$0x1]
        %v3926 = vlaneseq
        %v3927 = vshrl.u32 %v3926, 7
        %v3928 = vsub.s32 0, %v3927
        %v3929 = vrot.slane %v3924, %v3928
        %v3947 = vunpack.c.l.b16 %v3908
        %v3948 = vunpack.c.l.b16 %v3909
        %v3949 = vunpack.c.l.b16 %v3910
        %v3950 = vunpack.c.l.b16 %v3911
        %v3951 = vunpack.c.l.b16 %v3912
        %v3952 = vunpack.c.l.b16 %v3913
        %v3953 = vunpack.c.l.b16 %v3914
        %v3954 = vunpack.c.l.b16 %v3915
        %v3955 = vunpack.c.l.b16 %v3916
        %v3956 = vunpack.c.l.b16 %v3917
        %v3957 = vunpack.c.l.b16 %v3918
        %v3958 = vunpack.c.l.b16 %v3919
        %v3959 = vunpack.c.l.b16 %v3920
        %v3960 = vunpack.c.l.b16 %v3921
        %v3961 = vunpack.c.l.b16 %v3922
        %v3962 = vunpack.c.l.b16 %v3923
        %v3963 = vpack.c.b16 %v3948, %v3947
        %v3964 = vpack.c.b16 %v3950, %v3949
        %v3965 = vpack.c.b16 %v3952, %v3951
        %v3966 = vpack.c.b16 %v3954, %v3953
        %v3967 = vpack.c.b16 %v3956, %v3955
        %v3968 = vpack.c.b16 %v3958, %v3957
        %v3969 = vpack.c.b16 %v3960, %v3959
        %v3970 = vpack.c.b16 %v3962, %v3961
        %3979 = vmatprep.subr.bf16.mxu0 0
        %3980 = vmatpush1.bf16.msra.mxu0 %v3963
        %3981 = vmatprep.subr.bf16.mxu0 0
        %3982 = vmatpush1.bf16.msra.mxu0 %v3964
        %3983 = vmatprep.subr.bf16.mxu0 0
        %3984 = vmatpush1.bf16.msra.mxu0 %v3965
        %3985 = vmatprep.subr.bf16.mxu0 0
        %3986 = vmatpush1.bf16.msra.mxu0 %v3966
        %3987 = vmatprep.subr.bf16.mxu0 0
        %3988 = vmatpush1.bf16.msra.mxu0 %v3967
        %3989 = vmatprep.subr.bf16.mxu0 0
        %3990 = vmatpush1.bf16.msra.mxu0 %v3968
        %3991 = vmatprep.subr.bf16.mxu0 0
        %3992 = vmatpush1.bf16.msra.mxu0 %v3969
        %3993 = vmatprep.subr.bf16.mxu0 0
        %3994 = vmatpush1.bf16.msra.mxu0 %v3970
        %3995 = vmatprep.subr.bf16.mxu0 0
        %3996 = vmatpush1.bf16.msra.mxu0 0
        %3997 = vmatprep.subr.bf16.mxu0 0
        %3998 = vmatpush1.bf16.msra.mxu0 0
        %3999 = vmatprep.subr.bf16.mxu0 0
        %4000 = vmatpush1.bf16.msra.mxu0 0
        %4001 = vmatprep.subr.bf16.mxu0 0
        %4002 = vmatpush1.bf16.msra.mxu0 0
        %4003 = vmatprep.subr.bf16.mxu0 0
        %4004 = vmatpush1.bf16.msra.mxu0 0
        %4005 = vmatprep.subr.bf16.mxu0 0
        %4006 = vmatpush1.bf16.msra.mxu0 0
        %4007 = vmatprep.subr.bf16.mxu0 0
        %4008 = vmatpush1.bf16.msra.mxu0 0
        %4009 = vmatprep.subr.bf16.mxu0 0
        %4010 = vmatpush1.bf16.msra.mxu0 0
        %4011 = vmatprep.mubr.bf16.mxu0 0
        %4012 = vmatmul.mubr.bf16.gmra.mrb[0].mxu0 %v3907
        %v4013 = vpop.f32.mrb[0].mxu0
        %v4014 = vadd.f32 %v3929, %v4013
        %v4015 = vpop.f32.mrb[0].mxu0
        %v4016 = vpop.f32.mrb[0].mxu0
        %v4017 = vpop.f32.mrb[0].mxu0
        %4018 = vdwg.mxu0
        %v4019 = vsub.f32 0.0, %v4014
        %v4020 = vmul.f32 %v4019, 1.442695
        %v4021 = vpow.pop %v4020
        %v4022 = vadd.f32 %v4021, 1.0
        %v4023 = vrcp.pop %v4022
        %vm4024 = vcmask 64512
        %4025 = vst.msk [vmem:[%s401] sm:$0xff] %vm4024, %v4023
        %p4026 = scmp.lt.s32.totalorder %s23, 1
        %s4027 = scalar_select %p4026, %s23, 1
        %s4028 = smul.addr %s4027, 8
        %s4029 = scalar_lea.vmem %s10, %s4028
        // Predicated region
        $region73: #{encoder_forward.1} parent=59 // pred_check
          %p4030 = pneg %p256
        $region74: #{encoder_forward.1} parent=59 // pred_check_branch
          %4032 = sbr.rel (%p4030) target = $region76
        $region75: #{encoder_forward.1} parent=59 // pred_region
          _
        $region76: #{encoder_forward.1} parent=59 // pred_fallthru
          _
      $region60: #{encoder_forward.1} parent=5 // pred_fallthru
        _
      %p4033 = scmp.le.s32.totalorder 2, %s18
      // Predicated region
      $region77: #{encoder_forward.1} parent=5 // pred_check
        %p4034 = pneg %p4033
      $region78: #{encoder_forward.1} parent=5 // pred_check_branch
        %4036 = sbr.rel (%p4034) target = $region80
      $region79: #{encoder_forward.1} parent=5 // pred_region
        %s4037 = ssub.s32 %s18, 2
        // Predicated region
        $region81: #{encoder_forward.1} parent=79 // pred_check
          %p4038 = pneg %p262
        $region82: #{encoder_forward.1} parent=79 // pred_check_branch
          %4040 = sbr.rel (%p4038) target = $region84
        $region83: #{encoder_forward.1} parent=79 // pred_region
          %p4041 = scmp.lt.s32.totalorder %s24, 1
          %s4042 = scalar_select %p4041, %s24, 1
          %s4043 = smul.addr %s4042, 8
          %s4044 = scalar_lea.vmem %s10, %s4043
        $region84: #{encoder_forward.1} parent=79 // pred_fallthru
          _
      $region80: #{encoder_forward.1} parent=5 // pred_fallthru
        _
    $region6: #{encoder_forward.1} parent=1 // loop_footer
      %s22 = sadd.s32 1, %s18
    $region7: #{encoder_forward.1} parent=1 // loop_footer_branch
      %17 = sbr.rel target = $region3
    $region8: #{encoder_forward.1} parent=1 // loop_exit
      _
    %4045 = vsyncpa [#allocation3], 1
    %s4046 = scalar_lea.sflag [#allocation3], 1
    %4047 = vsyncpa %s4046, 1
    %4048 = vsyncpa [#allocation5], 1

</llo_original>
